<compile_context>
chip_gen: v7x
topology: tpu7x:2x2x1
jax: 0.10.0
libtpu: 0.0.40
codegen_flags: <defaults>
</compile_context>

<pallas_src>
import functools

import jax
import jax.numpy as jnp
from jax.experimental import pallas as pl
from jax.experimental.pallas import tpu as pltpu


# ---------------------------------------------------------------------------
# Small helpers
# ---------------------------------------------------------------------------
def _round_up(x, m):
    return (x + m - 1) // m * m


def _cdiv(a, b):
    return -(-a // b)


def _vmem_capacity_bytes():
    try:
        return int(pltpu.get_tpu_info().vmem_capacity_bytes)
    except Exception:  # older jax or query unavailable -> conservative (v7x)
        return 64 * 1024 * 1024


def _vmem_limit_bytes():
    cap = _vmem_capacity_bytes()
    # 48 MiB on v7x (64 MiB physical), 96 MiB on v5e/v6e (128 MiB physical)
    return int(min(cap, 128 * 1024 * 1024) * 3 // 4)


def _pick_row_tile(ho, wo_p, vmem_bytes):
    """Output rows per grid step (bounds the f32 accumulator / out block)."""
    max_rows = 2048 if vmem_bytes >= (96 << 20) else 1024
    tro = max(1, min(ho, max_rows // wo_p))
    # keep bf16 output stores on (16,128)-friendly blocks where possible
    if (tro * wo_p) % 16 != 0 and tro > 1:
        tro -= tro % 2
    rb = _cdiv(ho, tro)
    return tro, rb


# ---------------------------------------------------------------------------
# Pallas kernel: in-kernel (dy,dx) tap loop -> MXU dots -> bias [+skip] [+ReLU]
# (BN scale & channel mask are pre-folded into the weights / bias.)
# ---------------------------------------------------------------------------
def _fused_conv_kernel(*refs, taps_a, tap_b, cin_a, cin_b, tro, wo_p, relu):
    if tap_b is not None:
        xa_ref, wa_ref, b_ref, xb_ref, wb_ref, out_ref = refs
    else:
        xa_ref, wa_ref, b_ref, out_ref = refs
        xb_ref = wb_ref = None

    r0 = pl.program_id(2) * tro  # first output row of this block
    acc = None
    # Main conv: one (tro*wo_p, cin_a) x (cin_a, tn) MXU dot per tap, f32 acc.
    for t, (row_off, row_sub, lane_off) in enumerate(taps_a):
        xs = xa_ref[0, pl.ds(r0 + row_off, tro), row_sub, :,
                    pl.ds(lane_off, cin_a)]
        xs = xs.reshape(tro * wo_p, cin_a)
        d = jnp.dot(xs, wa_ref[pl.ds(t * cin_a, cin_a), :],
                    preferred_element_type=jnp.float32)
        acc = d if acc is None else acc + d

    # Fused skip path (1x1 conv or identity) as one extra tap.
    if tap_b is not None:
        row_off, row_sub, lane_off = tap_b
        xs = xb_ref[0, pl.ds(r0 + row_off, tro), row_sub, :,
                    pl.ds(lane_off, cin_b)]
        acc = acc + jnp.dot(xs.reshape(tro * wo_p, cin_b), wb_ref[...],
                            preferred_element_type=jnp.float32)

    y = acc + b_ref[...]          # (rows, tn) + (1, tn), f32 epilogue
    if relu:
        y = jnp.maximum(y, 0.0)
    out_ref[...] = y.astype(out_ref.dtype)


def _fused_conv(xa, wa, ba, *, k_a, s_a, cin_a, tro, rb, wo_p, tn,
                xb=None, wb=None, tap_b=None, cin_b=0, relu=True,
                out_dtype=jnp.float32):
    """conv(xa; wa) [+ 1-tap conv(xb; wb)] + bias [+ ReLU].

    xa/xb are column-expanded, row-folded activations (see _expand_cols):
      shape (N, hpair, s, wo_p, k*cin) with
      xa[n, hq, hs, w, dx*cin + c] == x_padded[n, hq*s + hs, w*s + dx, c].
    Returns (N, rb*tro, wo_p, cout_p) in out_dtype.
    """
    n = xa.shape[0]
    cout_p = wa.shape[1]
    num_j = cout_p // tn
    grid = (n, num_j, rb)

    taps_a = [(dy // s_a, dy % s_a, dx * cin_a)
              for dy in range(k_a) for dx in range(k_a)]

    in_specs = [
        pl.BlockSpec((1,) + xa.shape[1:], lambda b, j, i: (b, 0, 0, 0, 0)),
        pl.BlockSpec((wa.shape[0], tn), lambda b, j, i: (0, j)),
        pl.BlockSpec((1, tn), lambda b, j, i: (0, j)),
    ]
    args = [xa, wa, ba]
    if tap_b is not None:
        in_specs += [
            pl.BlockSpec((1,) + xb.shape[1:], lambda b, j, i: (b, 0, 0, 0, 0)),
            pl.BlockSpec((wb.shape[0], tn), lambda b, j, i: (0, j)),
        ]
        args += [xb, wb]

    m = n * rb * tro * wo_p
    flops = 2 * m * cout_p * (len(taps_a) * cin_a
                              + (cin_b if tap_b is not None else 0))
    bytes_accessed = (xa.size * 2 + wa.size * 2 + ba.size * 4
                      + m * cout_p * jnp.dtype(out_dtype).itemsize)
    if tap_b is not None:
        bytes_accessed += xb.size * 2 + wb.size * 2

    kernel = functools.partial(
        _fused_conv_kernel, taps_a=taps_a, tap_b=tap_b, cin_a=cin_a,
        cin_b=cin_b, tro=tro, wo_p=wo_p, relu=relu)

    out = pl.pallas_call(
        kernel,
        out_shape=jax.ShapeDtypeStruct((m, cout_p), out_dtype),
        grid_spec=pltpu.PrefetchScalarGridSpec(
            num_scalar_prefetch=0,
            grid=grid,
            in_specs=in_specs,
            out_specs=pl.BlockSpec((tro * wo_p, tn),
                                   lambda b, j, i: (b * rb + i, j)),
        ),
        compiler_params=pltpu.CompilerParams(
            dimension_semantics=("parallel", "parallel", "arbitrary"),
            vmem_limit_bytes=_vmem_limit_bytes(),
        ),
        cost_estimate=pl.CostEstimate(
            flops=int(flops), transcendentals=0,
            bytes_accessed=int(bytes_accessed)),
    )(*args)
    return out.reshape(n, rb * tro, wo_p, cout_p)


# ---------------------------------------------------------------------------
# Plain-JAX glue: activation folding + BN/mask weight folding
# ---------------------------------------------------------------------------
def _expand_cols(x, s, pad, k, cp, hpair, wo_p):
    """Zero-pad, pre-gather the k column taps into lanes, fold the row stride.

    Returns bf16 array (N, hpair, s, wo_p, k*cp) with
      out[n, hq, hs, w, dx*cp + c] == x_padded[n, hq*s + hs, w*s + dx, c].
    """
    bsz, hh, ww, cc = x.shape
    hp = hpair * s
    wp = max(s * (wo_p - 1) + k, ww + 2 * pad)
    xp = jnp.pad(x.astype(jnp.bfloat16),
                 ((0, 0), (pad, hp - hh - pad), (pad, wp - ww - pad),
                  (0, cp - cc)))
    cols = [xp[:, :, dx:dx + s * (wo_p - 1) + 1:s, :] for dx in range(k)]
    xe = jnp.concatenate(cols, axis=-1)            # (N, hp, wo_p, k*cp)
    return xe.reshape(bsz, hpair, s, wo_p, k * cp)


def _fold_conv_bn_mask(p, cin_p, cout_p, eps=1e-5):
    """Fold eval-mode BN + channel mask into a tapped weight matrix and bias.

    Returns w_eff [(kh*kw*cin_p), cout_p] bf16 (rows ordered (dy, dx, cin) to
    match the kernel's tap loop) and b_eff [1, cout_p] f32 so that
    ((conv(x) * scale + shift) * mask) == taps(x) @ w_eff + b_eff.
    """
    w = p["weight"]                                   # (cout, cin, kh, kw)
    cout, cin, kh, kw = w.shape
    scale = p["gamma"] / jnp.sqrt(p["running_var"] + eps)
    bias = (p["beta"] - p["running_mean"] * scale) * p["mask"]
    w = jnp.transpose(w, (2, 3, 1, 0)) * (scale * p["mask"])[None, None, None, :]
    w = jnp.pad(w, ((0, 0), (0, 0), (0, cin_p - cin), (0, cout_p - cout)))
    w = w.reshape(kh * kw * cin_p, cout_p).astype(jnp.bfloat16)
    b = jnp.pad(bias, (0, cout_p - cout)).reshape(1, -1).astype(jnp.float32)
    return w, b


# ---------------------------------------------------------------------------
# MaskedResBlock forward
# ---------------------------------------------------------------------------
def masked_resblock_forward_nhwc(x, params, stride, c_in, c_out, kernel_size=3):
    bsz, hh, ww, cc = x.shape
    assert cc == c_in
    k, s = kernel_size, stride
    pad = (k - 1) // 2
    ho = (hh + 2 * pad - k) // s + 1
    wo = (ww + 2 * pad - k) // s + 1

    cin_p = _round_up(c_in, 128)
    cout_p = _round_up(c_out, 128)
    tn = 256 if cout_p % 256 == 0 else 128
    vmem = _vmem_capacity_bytes()

    wo_p = _round_up(wo, 8)
    tro1, rb1 = _pick_row_tile(ho, wo_p, vmem)
    tro2, rb2 = _pick_row_tile(ho, wo_p, vmem)
    ho_p1, ho_p2 = rb1 * tro1, rb2 * tro2

    # Input fold, shared by op_1 and the fused skip path of op_2 (same buffer).
    hpair_x = max(ho_p1 + (k - 1) // s,     # op_1 row taps
                  ho_p2 + pad // s,         # fused-skip row tap
                  _cdiv(hh + 2 * pad, s))   # zero-pad placement
    x_fold = _expand_cols(x, s, pad, k, cin_p, hpair_x, wo_p)

    # op_1: conv3x3(stride) + BN + mask + ReLU   (bf16 intermediate)
    w1, b1 = _fold_conv_bn_mask(params["op1"], cin_p, cout_p)
    out1 = _fused_conv(x_fold, w1, b1, k_a=k, s_a=s, cin_a=cin_p,
                       tro=tro1, rb=rb1, wo_p=wo_p, tn=tn,
                       relu=True, out_dtype=jnp.bfloat16)
    out1 = out1[:, :ho, :wo, :]             # drop padded rows/cols, keep padded C

    # op_2 input fold (stride 1).
    hpair_2 = max(ho_p2 + (k - 1), ho + 2 * pad)
    out1_fold = _expand_cols(out1, 1, pad, k, cout_p, hpair_2, wo_p)

    # op_2 + fused skip + block-level ReLU, all in one pallas_call.
    w2, b2 = _fold_conv_bn_mask(params["op2"], cout_p, cout_p)
    if not (s == 1 and c_in == c_out):
        # downsample='conv': 1x1 conv(stride) + BN + mask, fused as one tap.
        ws, bs = _fold_conv_bn_mask(params["skip"], cin_p, cout_p)
    else:
        # identity skip, fed through the same (bf16) tap path.
        ws = jnp.pad(jnp.eye(c_in, dtype=jnp.float32),
                     ((0, cin_p - c_in), (0, cout_p - c_out))).astype(jnp.bfloat16)
        bs = jnp.zeros((1, cout_p), jnp.float32)
    tap_b = (pad // s, pad % s, pad * cin_p)   # skip reads x_pad[r*s+pad, w*s+pad]

    out2 = _fused_conv(out1_fold, w2, b2 + bs, k_a=k, s_a=1, cin_a=cout_p,
                       tro=tro2, rb=rb2, wo_p=wo_p, tn=tn,
                       xb=x_fold, wb=ws, tap_b=tap_b, cin_b=cin_p,
                       relu=True, out_dtype=jnp.float32)
    return out2[:, :ho, :wo, :c_out]


def masked_resblock_forward(x_nchw, params, stride, c_in, c_out, kernel_size=3):
    # Thin NCHW wrapper for parity with the PyTorch module; use the NHWC entry
    # point in a real pipeline to avoid the two boundary transposes.
    x = jnp.transpose(x_nchw, (0, 2, 3, 1))
    y = masked_resblock_forward_nhwc(x, params, stride, c_in, c_out, kernel_size)
    return jnp.transpose(y, (0, 3, 1, 2)).astype(x_nchw.dtype)


# ---------------------------------------------------------------------------
# Deterministic parameter construction (synthetic, matches module shapes)
# ---------------------------------------------------------------------------
def make_params(key, c_in, c_out, kernel_size=3):
    ks = jax.random.split(key, 15)

    def conv_bn(keys, cin, cout, k):
        kw, kg, kb, km, kv = keys
        return {
            "weight": 0.1 * jax.random.normal(kw, (cout, cin, k, k), jnp.float32),
            "gamma": 1.0 + 0.1 * jax.random.normal(kg, (cout,), jnp.float32),
            "beta": 0.1 * jax.random.normal(kb, (cout,), jnp.float32),
            "running_mean": 0.05 * jax.random.normal(km, (cout,), jnp.float32),
            "running_var": 1.0 + 0.1 * jax.random.uniform(kv, (cout,), jnp.float32),
            "mask": jnp.ones((cout,), jnp.float32),  # register_buffer('mask', ones)
        }

    return {
        "op1": conv_bn(ks[0:5], c_in, c_out, kernel_size),
        "op2": conv_bn(ks[5:10], c_out, c_out, kernel_size),
        "skip": conv_bn(ks[10:15], c_in, c_out, 1),
    }


# ---------------------------------------------------------------------------
# Pure-JAX f32 reference (lax.conv) for correctness checking
# ---------------------------------------------------------------------------
def _ref_conv_bn(x_nhwc, p, stride, pad, relu, eps=1e-5):
    w_hwio = jnp.transpose(p["weight"], (2, 3, 1, 0))
    y = jax.lax.conv_general_dilated(
        x_nhwc, w_hwio, window_strides=(stride, stride),
        padding=[(pad, pad), (pad, pad)],
        dimension_numbers=("NHWC", "HWIO", "NHWC"))
    scale = p["gamma"] / jnp.sqrt(p["running_var"] + eps)
    bias = p["beta"] - p["running_mean"] * scale
    y = y * scale.reshape(1, 1, 1, -1) + bias.reshape(1, 1, 1, -1)
    y = y * p["mask"].reshape(1, 1, 1, -1)
    if relu:
        y = jnp.maximum(y, 0.0)
    return y


def _ref_block(x_nchw, params, stride, c_in, c_out):
    x = jnp.transpose(x_nchw, (0, 2, 3, 1))
    out1 = _ref_conv_bn(x, params["op1"], stride, 1, relu=True)
    if not (stride == 1 and c_in == c_out):
        skip = _ref_conv_bn(x, params["skip"], stride, 0, relu=False)
    else:
        skip = x
    out2 = _ref_conv_bn(out1, params["op2"], 1, 1, relu=False)
    y = jnp.maximum(out2 + skip, 0.0)
    return jnp.transpose(y, (0, 3, 1, 2))


if __name__ == "__main__":
    key = jax.random.PRNGKey(0)
    k_x, k_p = jax.random.split(key)

    # Small shapes consistent with the module: stride-2 block (exercises the
    # fused 1x1-conv skip path).
    N, C_IN, H, W = 2, 4, 16, 16
    C_OUT, STRIDE = 8, 2

    x = jax.random.normal(k_x, (N, C_IN, H, W), jnp.float32)
    params = make_params(k_p, C_IN, C_OUT, kernel_size=3)

    fwd = jax.jit(functools.partial(masked_resblock_forward,
                                    stride=STRIDE, c_in=C_IN, c_out=C_OUT))
    out = jax.block_until_ready(fwd(x, params))

    ref = jax.block_until_ready(_ref_block(x, params, STRIDE, C_IN, C_OUT))
    assert out.shape == (N, C_OUT, H // STRIDE, W // STRIDE), out.shape
    # bf16 MXU operands with f32 accumulation vs a pure-f32 reference:
    # typical max abs deviation is O(1e-2) at these magnitudes.
    max_err = float(jnp.max(jnp.abs(out - ref)))
    assert max_err < 1e-1, max_err

    print("KERNEL_OK")
</pallas_src>

<mosaic_0001>
module attributes {stable_mosaic.version = 11 : i64} {
  func.func @_fused_conv_kernel(%arg0: i32, %arg1: i32, %arg2: i32, %arg3: memref<1x9x2x8x384xbf16, #tpu.memory_space<vmem>>, %arg4: memref<1152x128xbf16, #tpu.memory_space<vmem>>, %arg5: memref<1x128xf32, #tpu.memory_space<vmem>>, %arg6: memref<64x128xbf16, #tpu.memory_space<vmem>>) attributes {dimension_semantics = [#tpu.dimension_semantics<parallel>, #tpu.dimension_semantics<parallel>, #tpu.dimension_semantics<arbitrary>], iteration_bounds = array<i64: 2, 1, 1>, scalar_prefetch = 0 : i64, scratch_operands = 0 : i64, tpu.core_type = #tpu.core_type<tc>, window_params = [{transform_indices = @transform_0, window_bounds = array<i64: 1, 9, 2, 8, 384>}, {transform_indices = @transform_1, window_bounds = array<i64: 1152, 128>}, {transform_indices = @transform_2, window_bounds = array<i64: 1, 128>}, {transform_indices = @transform_3, window_bounds = array<i64: 64, 128>}]} {
    %c8_i32 = arith.constant 8 : i32
    %0 = arith.muli %arg2, %c8_i32 : i32
    %c0_i32 = arith.constant 0 : i32
    %1 = arith.addi %0, %c0_i32 : i32
    %c0 = arith.constant 0 : index
    %2 = arith.index_cast %1 : i32 to index
    %c0_0 = arith.constant 0 : index
    %c0_1 = arith.constant 0 : index
    %c0_2 = arith.constant 0 : index
    %3 = vector.load %arg3[%c0, %2, %c0_0, %c0_1, %c0_2] : memref<1x9x2x8x384xbf16, #tpu.memory_space<vmem>>, vector<1x8x1x8x128xbf16>
    %4 = vector.shape_cast %3 : vector<1x8x1x8x128xbf16> to vector<8x8x128xbf16>
    %5 = vector.shape_cast %4 : vector<8x8x128xbf16> to vector<64x128xbf16>
    %c0_3 = arith.constant 0 : index
    %c0_4 = arith.constant 0 : index
    %6 = vector.load %arg4[%c0_3, %c0_4] : memref<1152x128xbf16, #tpu.memory_space<vmem>>, vector<128x128xbf16>
    %cst = arith.constant dense<0.000000e+00> : vector<64x128xf32>
    %7 = tpu.matmul %5, %6, %cst {dimension_numbers = #tpu.dot_dimension_numbers<[1], [0], [0], [1], [0, 0, 1, 1], [], []>} : vector<64x128xbf16>, vector<128x128xbf16>, vector<64x128xf32> -> vector<64x128xf32>
    %c0_i32_5 = arith.constant 0 : i32
    %8 = arith.addi %0, %c0_i32_5 : i32
    %c0_6 = arith.constant 0 : index
    %9 = arith.index_cast %8 : i32 to index
    %c0_7 = arith.constant 0 : index
    %c0_8 = arith.constant 0 : index
    %c128 = arith.constant 128 : index
    %10 = vector.load %arg3[%c0_6, %9, %c0_7, %c0_8, %c128] : memref<1x9x2x8x384xbf16, #tpu.memory_space<vmem>>, vector<1x8x1x8x128xbf16>
    %11 = vector.shape_cast %10 : vector<1x8x1x8x128xbf16> to vector<8x8x128xbf16>
    %12 = vector.shape_cast %11 : vector<8x8x128xbf16> to vector<64x128xbf16>
    %c128_9 = arith.constant 128 : index
    %c0_10 = arith.constant 0 : index
    %13 = vector.load %arg4[%c128_9, %c0_10] : memref<1152x128xbf16, #tpu.memory_space<vmem>>, vector<128x128xbf16>
    %cst_11 = arith.constant dense<0.000000e+00> : vector<64x128xf32>
    %14 = tpu.matmul %12, %13, %cst_11 {dimension_numbers = #tpu.dot_dimension_numbers<[1], [0], [0], [1], [0, 0, 1, 1], [], []>} : vector<64x128xbf16>, vector<128x128xbf16>, vector<64x128xf32> -> vector<64x128xf32>
    %15 = arith.addf %7, %14 : vector<64x128xf32>
    %c0_i32_12 = arith.constant 0 : i32
    %16 = arith.addi %0, %c0_i32_12 : i32
    %c0_13 = arith.constant 0 : index
    %17 = arith.index_cast %16 : i32 to index
    %c0_14 = arith.constant 0 : index
    %c0_15 = arith.constant 0 : index
    %c256 = arith.constant 256 : index
    %18 = vector.load %arg3[%c0_13, %17, %c0_14, %c0_15, %c256] : memref<1x9x2x8x384xbf16, #tpu.memory_space<vmem>>, vector<1x8x1x8x128xbf16>
    %19 = vector.shape_cast %18 : vector<1x8x1x8x128xbf16> to vector<8x8x128xbf16>
    %20 = vector.shape_cast %19 : vector<8x8x128xbf16> to vector<64x128xbf16>
    %c256_16 = arith.constant 256 : index
    %c0_17 = arith.constant 0 : index
    %21 = vector.load %arg4[%c256_16, %c0_17] : memref<1152x128xbf16, #tpu.memory_space<vmem>>, vector<128x128xbf16>
    %cst_18 = arith.constant dense<0.000000e+00> : vector<64x128xf32>
    %22 = tpu.matmul %20, %21, %cst_18 {dimension_numbers = #tpu.dot_dimension_numbers<[1], [0], [0], [1], [0, 0, 1, 1], [], []>} : vector<64x128xbf16>, vector<128x128xbf16>, vector<64x128xf32> -> vector<64x128xf32>
    %23 = arith.addf %15, %22 : vector<64x128xf32>
    %c0_i32_19 = arith.constant 0 : i32
    %24 = arith.addi %0, %c0_i32_19 : i32
    %c0_20 = arith.constant 0 : index
    %25 = arith.index_cast %24 : i32 to index
    %c1 = arith.constant 1 : index
    %c0_21 = arith.constant 0 : index
    %c0_22 = arith.constant 0 : index
    %26 = vector.load %arg3[%c0_20, %25, %c1, %c0_21, %c0_22] : memref<1x9x2x8x384xbf16, #tpu.memory_space<vmem>>, vector<1x8x1x8x128xbf16>
    %27 = vector.shape_cast %26 : vector<1x8x1x8x128xbf16> to vector<8x8x128xbf16>
    %28 = vector.shape_cast %27 : vector<8x8x128xbf16> to vector<64x128xbf16>
    %c384 = arith.constant 384 : index
    %c0_23 = arith.constant 0 : index
    %29 = vector.load %arg4[%c384, %c0_23] : memref<1152x128xbf16, #tpu.memory_space<vmem>>, vector<128x128xbf16>
    %cst_24 = arith.constant dense<0.000000e+00> : vector<64x128xf32>
    %30 = tpu.matmul %28, %29, %cst_24 {dimension_numbers = #tpu.dot_dimension_numbers<[1], [0], [0], [1], [0, 0, 1, 1], [], []>} : vector<64x128xbf16>, vector<128x128xbf16>, vector<64x128xf32> -> vector<64x128xf32>
    %31 = arith.addf %23, %30 : vector<64x128xf32>
    %c0_i32_25 = arith.constant 0 : i32
    %32 = arith.addi %0, %c0_i32_25 : i32
    %c0_26 = arith.constant 0 : index
    %33 = arith.index_cast %32 : i32 to index
    %c1_27 = arith.constant 1 : index
    %c0_28 = arith.constant 0 : index
    %c128_29 = arith.constant 128 : index
    %34 = vector.load %arg3[%c0_26, %33, %c1_27, %c0_28, %c128_29] : memref<1x9x2x8x384xbf16, #tpu.memory_space<vmem>>, vector<1x8x1x8x128xbf16>
    %35 = vector.shape_cast %34 : vector<1x8x1x8x128xbf16> to vector<8x8x128xbf16>
    %36 = vector.shape_cast %35 : vector<8x8x128xbf16> to vector<64x128xbf16>
    %c512 = arith.constant 512 : index
    %c0_30 = arith.constant 0 : index
    %37 = vector.load %arg4[%c512, %c0_30] : memref<1152x128xbf16, #tpu.memory_space<vmem>>, vector<128x128xbf16>
    %cst_31 = arith.constant dense<0.000000e+00> : vector<64x128xf32>
    %38 = tpu.matmul %36, %37, %cst_31 {dimension_numbers = #tpu.dot_dimension_numbers<[1], [0], [0], [1], [0, 0, 1, 1], [], []>} : vector<64x128xbf16>, vector<128x128xbf16>, vector<64x128xf32> -> vector<64x128xf32>
    %39 = arith.addf %31, %38 : vector<64x128xf32>
    %c0_i32_32 = arith.constant 0 : i32
    %40 = arith.addi %0, %c0_i32_32 : i32
    %c0_33 = arith.constant 0 : index
    %41 = arith.index_cast %40 : i32 to index
    %c1_34 = arith.constant 1 : index
    %c0_35 = arith.constant 0 : index
    %c256_36 = arith.constant 256 : index
    %42 = vector.load %arg3[%c0_33, %41, %c1_34, %c0_35, %c256_36] : memref<1x9x2x8x384xbf16, #tpu.memory_space<vmem>>, vector<1x8x1x8x128xbf16>
    %43 = vector.shape_cast %42 : vector<1x8x1x8x128xbf16> to vector<8x8x128xbf16>
    %44 = vector.shape_cast %43 : vector<8x8x128xbf16> to vector<64x128xbf16>
    %c640 = arith.constant 640 : index
    %c0_37 = arith.constant 0 : index
    %45 = vector.load %arg4[%c640, %c0_37] : memref<1152x128xbf16, #tpu.memory_space<vmem>>, vector<128x128xbf16>
    %cst_38 = arith.constant dense<0.000000e+00> : vector<64x128xf32>
    %46 = tpu.matmul %44, %45, %cst_38 {dimension_numbers = #tpu.dot_dimension_numbers<[1], [0], [0], [1], [0, 0, 1, 1], [], []>} : vector<64x128xbf16>, vector<128x128xbf16>, vector<64x128xf32> -> vector<64x128xf32>
    %47 = arith.addf %39, %46 : vector<64x128xf32>
    %c1_i32 = arith.constant 1 : i32
    %48 = arith.addi %0, %c1_i32 : i32
    %c0_39 = arith.constant 0 : index
    %49 = arith.index_cast %48 : i32 to index
    %c0_40 = arith.constant 0 : index
    %c0_41 = arith.constant 0 : index
    %c0_42 = arith.constant 0 : index
    %50 = vector.load %arg3[%c0_39, %49, %c0_40, %c0_41, %c0_42] : memref<1x9x2x8x384xbf16, #tpu.memory_space<vmem>>, vector<1x8x1x8x128xbf16>
    %51 = vector.shape_cast %50 : vector<1x8x1x8x128xbf16> to vector<8x8x128xbf16>
    %52 = vector.shape_cast %51 : vector<8x8x128xbf16> to vector<64x128xbf16>
    %c768 = arith.constant 768 : index
    %c0_43 = arith.constant 0 : index
    %53 = vector.load %arg4[%c768, %c0_43] : memref<1152x128xbf16, #tpu.memory_space<vmem>>, vector<128x128xbf16>
    %cst_44 = arith.constant dense<0.000000e+00> : vector<64x128xf32>
    %54 = tpu.matmul %52, %53, %cst_44 {dimension_numbers = #tpu.dot_dimension_numbers<[1], [0], [0], [1], [0, 0, 1, 1], [], []>} : vector<64x128xbf16>, vector<128x128xbf16>, vector<64x128xf32> -> vector<64x128xf32>
    %55 = arith.addf %47, %54 : vector<64x128xf32>
    %c1_i32_45 = arith.constant 1 : i32
    %56 = arith.addi %0, %c1_i32_45 : i32
    %c0_46 = arith.constant 0 : index
    %57 = arith.index_cast %56 : i32 to index
    %c0_47 = arith.constant 0 : index
    %c0_48 = arith.constant 0 : index
    %c128_49 = arith.constant 128 : index
    %58 = vector.load %arg3[%c0_46, %57, %c0_47, %c0_48, %c128_49] : memref<1x9x2x8x384xbf16, #tpu.memory_space<vmem>>, vector<1x8x1x8x128xbf16>
    %59 = vector.shape_cast %58 : vector<1x8x1x8x128xbf16> to vector<8x8x128xbf16>
    %60 = vector.shape_cast %59 : vector<8x8x128xbf16> to vector<64x128xbf16>
    %c896 = arith.constant 896 : index
    %c0_50 = arith.constant 0 : index
    %61 = vector.load %arg4[%c896, %c0_50] : memref<1152x128xbf16, #tpu.memory_space<vmem>>, vector<128x128xbf16>
    %cst_51 = arith.constant dense<0.000000e+00> : vector<64x128xf32>
    %62 = tpu.matmul %60, %61, %cst_51 {dimension_numbers = #tpu.dot_dimension_numbers<[1], [0], [0], [1], [0, 0, 1, 1], [], []>} : vector<64x128xbf16>, vector<128x128xbf16>, vector<64x128xf32> -> vector<64x128xf32>
    %63 = arith.addf %55, %62 : vector<64x128xf32>
    %c1_i32_52 = arith.constant 1 : i32
    %64 = arith.addi %0, %c1_i32_52 : i32
    %c0_53 = arith.constant 0 : index
    %65 = arith.index_cast %64 : i32 to index
    %c0_54 = arith.constant 0 : index
    %c0_55 = arith.constant 0 : index
    %c256_56 = arith.constant 256 : index
    %66 = vector.load %arg3[%c0_53, %65, %c0_54, %c0_55, %c256_56] : memref<1x9x2x8x384xbf16, #tpu.memory_space<vmem>>, vector<1x8x1x8x128xbf16>
    %67 = vector.shape_cast %66 : vector<1x8x1x8x128xbf16> to vector<8x8x128xbf16>
    %68 = vector.shape_cast %67 : vector<8x8x128xbf16> to vector<64x128xbf16>
    %c1024 = arith.constant 1024 : index
    %c0_57 = arith.constant 0 : index
    %69 = vector.load %arg4[%c1024, %c0_57] : memref<1152x128xbf16, #tpu.memory_space<vmem>>, vector<128x128xbf16>
    %cst_58 = arith.constant dense<0.000000e+00> : vector<64x128xf32>
    %70 = tpu.matmul %68, %69, %cst_58 {dimension_numbers = #tpu.dot_dimension_numbers<[1], [0], [0], [1], [0, 0, 1, 1], [], []>} : vector<64x128xbf16>, vector<128x128xbf16>, vector<64x128xf32> -> vector<64x128xf32>
    %71 = arith.addf %63, %70 : vector<64x128xf32>
    %c0_59 = arith.constant 0 : index
    %c0_60 = arith.constant 0 : index
    %72 = vector.load %arg5[%c0_59, %c0_60] : memref<1x128xf32, #tpu.memory_space<vmem>>, vector<1x128xf32>
    %73 = vector.broadcast %72 : vector<1x128xf32> to vector<64x128xf32>
    %74 = arith.addf %71, %73 : vector<64x128xf32>
    %cst_61 = arith.constant 0.000000e+00 : f32
    %75 = vector.broadcast %cst_61 : f32 to vector<64x128xf32>
    %76 = arith.maximumf %74, %75 : vector<64x128xf32>
    %77 = arith.truncf %76 : vector<64x128xf32> to vector<64x128xbf16>
    %c0_62 = arith.constant 0 : index
    %c0_63 = arith.constant 0 : index
    %78 = vector.load %arg6[%c0_62, %c0_63] : memref<64x128xbf16, #tpu.memory_space<vmem>>, vector<64x128xbf16>
    tpu.vector_store %arg6[%c0_62, %c0_63], %77 {strides = array<i32>} : memref<64x128xbf16, #tpu.memory_space<vmem>>, vector<64x128xbf16>,
    return
  }
  func.func @transform_0(%arg0: i32, %arg1: i32, %arg2: i32) -> (i32, i32, i32, i32, i32) {
    %c0_i32 = arith.constant 0 : i32
    %c0_i32_0 = arith.constant 0 : i32
    %c0_i32_1 = arith.constant 0 : i32
    %c0_i32_2 = arith.constant 0 : i32
    %c0_i32_3 = arith.constant 0 : i32
    return %arg0, %c0_i32, %c0_i32_0, %c0_i32_1, %c0_i32_2 : i32, i32, i32, i32, i32
  }
  func.func @transform_1(%arg0: i32, %arg1: i32, %arg2: i32) -> (i32, i32) {
    %c0_i32 = arith.constant 0 : i32
    %c0_i32_0 = arith.constant 0 : i32
    return %c0_i32, %arg1 : i32, i32
  }
  func.func @transform_2(%arg0: i32, %arg1: i32, %arg2: i32) -> (i32, i32) {
    %c0_i32 = arith.constant 0 : i32
    %c0_i32_0 = arith.constant 0 : i32
    return %c0_i32, %arg1 : i32, i32
  }
  func.func @transform_3(%arg0: i32, %arg1: i32, %arg2: i32) -> (i32, i32) {
    %c1_i32 = arith.constant 1 : i32
    %0 = arith.muli %arg0, %c1_i32 : i32
    %1 = arith.addi %0, %arg2 : i32
    %c0_i32 = arith.constant 0 : i32
    return %1, %arg1 : i32, i32
  }
}

module attributes {stable_mosaic.version = 11 : i64} {
  func.func @_fused_conv_kernel(%arg0: i32, %arg1: i32, %arg2: i32, %arg3: memref<1x10x1x8x384xbf16, #tpu.memory_space<vmem>>, %arg4: memref<1152x128xbf16, #tpu.memory_space<vmem>>, %arg5: memref<1x128xf32, #tpu.memory_space<vmem>>, %arg6: memref<1x9x2x8x384xbf16, #tpu.memory_space<vmem>>, %arg7: memref<128x128xbf16, #tpu.memory_space<vmem>>, %arg8: memref<64x128xf32, #tpu.memory_space<vmem>>) attributes {dimension_semantics = [#tpu.dimension_semantics<parallel>, #tpu.dimension_semantics<parallel>, #tpu.dimension_semantics<arbitrary>], iteration_bounds = array<i64: 2, 1, 1>, scalar_prefetch = 0 : i64, scratch_operands = 0 : i64, tpu.core_type = #tpu.core_type<tc>, window_params = [{transform_indices = @transform_0, window_bounds = array<i64: 1, 10, 1, 8, 384>}, {transform_indices = @transform_1, window_bounds = array<i64: 1152, 128>}, {transform_indices = @transform_2, window_bounds = array<i64: 1, 128>}, {transform_indices = @transform_3, window_bounds = array<i64: 1, 9, 2, 8, 384>}, {transform_indices = @transform_4, window_bounds = array<i64: 128, 128>}, {transform_indices = @transform_5, window_bounds = array<i64: 64, 128>}]} {
    %c8_i32 = arith.constant 8 : i32
    %0 = arith.muli %arg2, %c8_i32 : i32
    %c0_i32 = arith.constant 0 : i32
    %1 = arith.addi %0, %c0_i32 : i32
    %c0 = arith.constant 0 : index
    %2 = arith.index_cast %1 : i32 to index
    %c0_0 = arith.constant 0 : index
    %c0_1 = arith.constant 0 : index
    %c0_2 = arith.constant 0 : index
    %3 = vector.load %arg3[%c0, %2, %c0_0, %c0_1, %c0_2] : memref<1x10x1x8x384xbf16, #tpu.memory_space<vmem>>, vector<1x8x1x8x128xbf16>
    %4 = vector.shape_cast %3 : vector<1x8x1x8x128xbf16> to vector<8x8x128xbf16>
    %5 = vector.shape_cast %4 : vector<8x8x128xbf16> to vector<64x128xbf16>
    %c0_3 = arith.constant 0 : index
    %c0_4 = arith.constant 0 : index
    %6 = vector.load %arg4[%c0_3, %c0_4] : memref<1152x128xbf16, #tpu.memory_space<vmem>>, vector<128x128xbf16>
    %cst = arith.constant dense<0.000000e+00> : vector<64x128xf32>
    %7 = tpu.matmul %5, %6, %cst {dimension_numbers = #tpu.dot_dimension_numbers<[1], [0], [0], [1], [0, 0, 1, 1], [], []>} : vector<64x128xbf16>, vector<128x128xbf16>, vector<64x128xf32> -> vector<64x128xf32>
    %c0_i32_5 = arith.constant 0 : i32
    %8 = arith.addi %0, %c0_i32_5 : i32
    %c0_6 = arith.constant 0 : index
    %9 = arith.index_cast %8 : i32 to index
    %c0_7 = arith.constant 0 : index
    %c0_8 = arith.constant 0 : index
    %c128 = arith.constant 128 : index
    %10 = vector.load %arg3[%c0_6, %9, %c0_7, %c0_8, %c128] : memref<1x10x1x8x384xbf16, #tpu.memory_space<vmem>>, vector<1x8x1x8x128xbf16>
    %11 = vector.shape_cast %10 : vector<1x8x1x8x128xbf16> to vector<8x8x128xbf16>
    %12 = vector.shape_cast %11 : vector<8x8x128xbf16> to vector<64x128xbf16>
    %c128_9 = arith.constant 128 : index
    %c0_10 = arith.constant 0 : index
    %13 = vector.load %arg4[%c128_9, %c0_10] : memref<1152x128xbf16, #tpu.memory_space<vmem>>, vector<128x128xbf16>
    %cst_11 = arith.constant dense<0.000000e+00> : vector<64x128xf32>
    %14 = tpu.matmul %12, %13, %cst_11 {dimension_numbers = #tpu.dot_dimension_numbers<[1], [0], [0], [1], [0, 0, 1, 1], [], []>} : vector<64x128xbf16>, vector<128x128xbf16>, vector<64x128xf32> -> vector<64x128xf32>
    %15 = arith.addf %7, %14 : vector<64x128xf32>
    %c0_i32_12 = arith.constant 0 : i32
    %16 = arith.addi %0, %c0_i32_12 : i32
    %c0_13 = arith.constant 0 : index
    %17 = arith.index_cast %16 : i32 to index
    %c0_14 = arith.constant 0 : index
    %c0_15 = arith.constant 0 : index
    %c256 = arith.constant 256 : index
    %18 = vector.load %arg3[%c0_13, %17, %c0_14, %c0_15, %c256] : memref<1x10x1x8x384xbf16, #tpu.memory_space<vmem>>, vector<1x8x1x8x128xbf16>
    %19 = vector.shape_cast %18 : vector<1x8x1x8x128xbf16> to vector<8x8x128xbf16>
    %20 = vector.shape_cast %19 : vector<8x8x128xbf16> to vector<64x128xbf16>
    %c256_16 = arith.constant 256 : index
    %c0_17 = arith.constant 0 : index
    %21 = vector.load %arg4[%c256_16, %c0_17] : memref<1152x128xbf16, #tpu.memory_space<vmem>>, vector<128x128xbf16>
    %cst_18 = arith.constant dense<0.000000e+00> : vector<64x128xf32>
    %22 = tpu.matmul %20, %21, %cst_18 {dimension_numbers = #tpu.dot_dimension_numbers<[1], [0], [0], [1], [0, 0, 1, 1], [], []>} : vector<64x128xbf16>, vector<128x128xbf16>, vector<64x128xf32> -> vector<64x128xf32>
    %23 = arith.addf %15, %22 : vector<64x128xf32>
    %c1_i32 = arith.constant 1 : i32
    %24 = arith.addi %0, %c1_i32 : i32
    %c0_19 = arith.constant 0 : index
    %25 = arith.index_cast %24 : i32 to index
    %c0_20 = arith.constant 0 : index
    %c0_21 = arith.constant 0 : index
    %c0_22 = arith.constant 0 : index
    %26 = vector.load %arg3[%c0_19, %25, %c0_20, %c0_21, %c0_22] : memref<1x10x1x8x384xbf16, #tpu.memory_space<vmem>>, vector<1x8x1x8x128xbf16>
    %27 = vector.shape_cast %26 : vector<1x8x1x8x128xbf16> to vector<8x8x128xbf16>
    %28 = vector.shape_cast %27 : vector<8x8x128xbf16> to vector<64x128xbf16>
    %c384 = arith.constant 384 : index
    %c0_23 = arith.constant 0 : index
    %29 = vector.load %arg4[%c384, %c0_23] : memref<1152x128xbf16, #tpu.memory_space<vmem>>, vector<128x128xbf16>
    %cst_24 = arith.constant dense<0.000000e+00> : vector<64x128xf32>
    %30 = tpu.matmul %28, %29, %cst_24 {dimension_numbers = #tpu.dot_dimension_numbers<[1], [0], [0], [1], [0, 0, 1, 1], [], []>} : vector<64x128xbf16>, vector<128x128xbf16>, vector<64x128xf32> -> vector<64x128xf32>
    %31 = arith.addf %23, %30 : vector<64x128xf32>
    %c1_i32_25 = arith.constant 1 : i32
    %32 = arith.addi %0, %c1_i32_25 : i32
    %c0_26 = arith.constant 0 : index
    %33 = arith.index_cast %32 : i32 to index
    %c0_27 = arith.constant 0 : index
    %c0_28 = arith.constant 0 : index
    %c128_29 = arith.constant 128 : index
    %34 = vector.load %arg3[%c0_26, %33, %c0_27, %c0_28, %c128_29] : memref<1x10x1x8x384xbf16, #tpu.memory_space<vmem>>, vector<1x8x1x8x128xbf16>
    %35 = vector.shape_cast %34 : vector<1x8x1x8x128xbf16> to vector<8x8x128xbf16>
    %36 = vector.shape_cast %35 : vector<8x8x128xbf16> to vector<64x128xbf16>
    %c512 = arith.constant 512 : index
    %c0_30 = arith.constant 0 : index
    %37 = vector.load %arg4[%c512, %c0_30] : memref<1152x128xbf16, #tpu.memory_space<vmem>>, vector<128x128xbf16>
    %cst_31 = arith.constant dense<0.000000e+00> : vector<64x128xf32>
    %38 = tpu.matmul %36, %37, %cst_31 {dimension_numbers = #tpu.dot_dimension_numbers<[1], [0], [0], [1], [0, 0, 1, 1], [], []>} : vector<64x128xbf16>, vector<128x128xbf16>, vector<64x128xf32> -> vector<64x128xf32>
    %39 = arith.addf %31, %38 : vector<64x128xf32>
    %c1_i32_32 = arith.constant 1 : i32
    %40 = arith.addi %0, %c1_i32_32 : i32
    %c0_33 = arith.constant 0 : index
    %41 = arith.index_cast %40 : i32 to index
    %c0_34 = arith.constant 0 : index
    %c0_35 = arith.constant 0 : index
    %c256_36 = arith.constant 256 : index
    %42 = vector.load %arg3[%c0_33, %41, %c0_34, %c0_35, %c256_36] : memref<1x10x1x8x384xbf16, #tpu.memory_space<vmem>>, vector<1x8x1x8x128xbf16>
    %43 = vector.shape_cast %42 : vector<1x8x1x8x128xbf16> to vector<8x8x128xbf16>
    %44 = vector.shape_cast %43 : vector<8x8x128xbf16> to vector<64x128xbf16>
    %c640 = arith.constant 640 : index
    %c0_37 = arith.constant 0 : index
    %45 = vector.load %arg4[%c640, %c0_37] : memref<1152x128xbf16, #tpu.memory_space<vmem>>, vector<128x128xbf16>
    %cst_38 = arith.constant dense<0.000000e+00> : vector<64x128xf32>
    %46 = tpu.matmul %44, %45, %cst_38 {dimension_numbers = #tpu.dot_dimension_numbers<[1], [0], [0], [1], [0, 0, 1, 1], [], []>} : vector<64x128xbf16>, vector<128x128xbf16>, vector<64x128xf32> -> vector<64x128xf32>
    %47 = arith.addf %39, %46 : vector<64x128xf32>
    %c2_i32 = arith.constant 2 : i32
    %48 = arith.addi %0, %c2_i32 : i32
    %c0_39 = arith.constant 0 : index
    %49 = arith.index_cast %48 : i32 to index
    %c0_40 = arith.constant 0 : index
    %c0_41 = arith.constant 0 : index
    %c0_42 = arith.constant 0 : index
    %50 = vector.load %arg3[%c0_39, %49, %c0_40, %c0_41, %c0_42] : memref<1x10x1x8x384xbf16, #tpu.memory_space<vmem>>, vector<1x8x1x8x128xbf16>
    %51 = vector.shape_cast %50 : vector<1x8x1x8x128xbf16> to vector<8x8x128xbf16>
    %52 = vector.shape_cast %51 : vector<8x8x128xbf16> to vector<64x128xbf16>
    %c768 = arith.constant 768 : index
    %c0_43 = arith.constant 0 : index
    %53 = vector.load %arg4[%c768, %c0_43] : memref<1152x128xbf16, #tpu.memory_space<vmem>>, vector<128x128xbf16>
    %cst_44 = arith.constant dense<0.000000e+00> : vector<64x128xf32>
    %54 = tpu.matmul %52, %53, %cst_44 {dimension_numbers = #tpu.dot_dimension_numbers<[1], [0], [0], [1], [0, 0, 1, 1], [], []>} : vector<64x128xbf16>, vector<128x128xbf16>, vector<64x128xf32> -> vector<64x128xf32>
    %55 = arith.addf %47, %54 : vector<64x128xf32>
    %c2_i32_45 = arith.constant 2 : i32
    %56 = arith.addi %0, %c2_i32_45 : i32
    %c0_46 = arith.constant 0 : index
    %57 = arith.index_cast %56 : i32 to index
    %c0_47 = arith.constant 0 : index
    %c0_48 = arith.constant 0 : index
    %c128_49 = arith.constant 128 : index
    %58 = vector.load %arg3[%c0_46, %57, %c0_47, %c0_48, %c128_49] : memref<1x10x1x8x384xbf16, #tpu.memory_space<vmem>>, vector<1x8x1x8x128xbf16>
    %59 = vector.shape_cast %58 : vector<1x8x1x8x128xbf16> to vector<8x8x128xbf16>
    %60 = vector.shape_cast %59 : vector<8x8x128xbf16> to vector<64x128xbf16>
    %c896 = arith.constant 896 : index
    %c0_50 = arith.constant 0 : index
    %61 = vector.load %arg4[%c896, %c0_50] : memref<1152x128xbf16, #tpu.memory_space<vmem>>, vector<128x128xbf16>
    %cst_51 = arith.constant dense<0.000000e+00> : vector<64x128xf32>
    %62 = tpu.matmul %60, %61, %cst_51 {dimension_numbers = #tpu.dot_dimension_numbers<[1], [0], [0], [1], [0, 0, 1, 1], [], []>} : vector<64x128xbf16>, vector<128x128xbf16>, vector<64x128xf32> -> vector<64x128xf32>
    %63 = arith.addf %55, %62 : vector<64x128xf32>
    %c2_i32_52 = arith.constant 2 : i32
    %64 = arith.addi %0, %c2_i32_52 : i32
    %c0_53 = arith.constant 0 : index
    %65 = arith.index_cast %64 : i32 to index
    %c0_54 = arith.constant 0 : index
    %c0_55 = arith.constant 0 : index
    %c256_56 = arith.constant 256 : index
    %66 = vector.load %arg3[%c0_53, %65, %c0_54, %c0_55, %c256_56] : memref<1x10x1x8x384xbf16, #tpu.memory_space<vmem>>, vector<1x8x1x8x128xbf16>
    %67 = vector.shape_cast %66 : vector<1x8x1x8x128xbf16> to vector<8x8x128xbf16>
    %68 = vector.shape_cast %67 : vector<8x8x128xbf16> to vector<64x128xbf16>
    %c1024 = arith.constant 1024 : index
    %c0_57 = arith.constant 0 : index
    %69 = vector.load %arg4[%c1024, %c0_57] : memref<1152x128xbf16, #tpu.memory_space<vmem>>, vector<128x128xbf16>
    %cst_58 = arith.constant dense<0.000000e+00> : vector<64x128xf32>
    %70 = tpu.matmul %68, %69, %cst_58 {dimension_numbers = #tpu.dot_dimension_numbers<[1], [0], [0], [1], [0, 0, 1, 1], [], []>} : vector<64x128xbf16>, vector<128x128xbf16>, vector<64x128xf32> -> vector<64x128xf32>
    %71 = arith.addf %63, %70 : vector<64x128xf32>
    %c0_i32_59 = arith.constant 0 : i32
    %72 = arith.addi %0, %c0_i32_59 : i32
    %c0_60 = arith.constant 0 : index
    %73 = arith.index_cast %72 : i32 to index
    %c1 = arith.constant 1 : index
    %c0_61 = arith.constant 0 : index
    %c128_62 = arith.constant 128 : index
    %74 = vector.load %arg6[%c0_60, %73, %c1, %c0_61, %c128_62] : memref<1x9x2x8x384xbf16, #tpu.memory_space<vmem>>, vector<1x8x1x8x128xbf16>
    %75 = vector.shape_cast %74 : vector<1x8x1x8x128xbf16> to vector<8x8x128xbf16>
    %76 = vector.shape_cast %75 : vector<8x8x128xbf16> to vector<64x128xbf16>
    %c0_63 = arith.constant 0 : index
    %c0_64 = arith.constant 0 : index
    %77 = vector.load %arg7[%c0_63, %c0_64] : memref<128x128xbf16, #tpu.memory_space<vmem>>, vector<128x128xbf16>
    %cst_65 = arith.constant dense<0.000000e+00> : vector<64x128xf32>
    %78 = tpu.matmul %76, %77, %cst_65 {dimension_numbers = #tpu.dot_dimension_numbers<[1], [0], [0], [1], [0, 0, 1, 1], [], []>} : vector<64x128xbf16>, vector<128x128xbf16>, vector<64x128xf32> -> vector<64x128xf32>
    %79 = arith.addf %71, %78 : vector<64x128xf32>
    %c0_66 = arith.constant 0 : index
    %c0_67 = arith.constant 0 : index
    %80 = vector.load %arg5[%c0_66, %c0_67] : memref<1x128xf32, #tpu.memory_space<vmem>>, vector<1x128xf32>
    %81 = vector.broadcast %80 : vector<1x128xf32> to vector<64x128xf32>
    %82 = arith.addf %79, %81 : vector<64x128xf32>
    %cst_68 = arith.constant 0.000000e+00 : f32
    %83 = vector.broadcast %cst_68 : f32 to vector<64x128xf32>
    %84 = arith.maximumf %82, %83 : vector<64x128xf32>
    %c0_69 = arith.constant 0 : index
    %c0_70 = arith.constant 0 : index
    %85 = vector.load %arg8[%c0_69, %c0_70] : memref<64x128xf32, #tpu.memory_space<vmem>>, vector<64x128xf32>
    tpu.vector_store %arg8[%c0_69, %c0_70], %84 {strides = array<i32>} : memref<64x128xf32, #tpu.memory_space<vmem>>, vector<64x128xf32>,
    return
  }
  func.func @transform_0(%arg0: i32, %arg1: i32, %arg2: i32) -> (i32, i32, i32, i32, i32) {
    %c0_i32 = arith.constant 0 : i32
    %c0_i32_0 = arith.constant 0 : i32
    %c0_i32_1 = arith.constant 0 : i32
    %c0_i32_2 = arith.constant 0 : i32
    %c0_i32_3 = arith.constant 0 : i32
    return %arg0, %c0_i32, %c0_i32_0, %c0_i32_1, %c0_i32_2 : i32, i32, i32, i32, i32
  }
  func.func @transform_1(%arg0: i32, %arg1: i32, %arg2: i32) -> (i32, i32) {
    %c0_i32 = arith.constant 0 : i32
    %c0_i32_0 = arith.constant 0 : i32
    return %c0_i32, %arg1 : i32, i32
  }
  func.func @transform_2(%arg0: i32, %arg1: i32, %arg2: i32) -> (i32, i32) {
    %c0_i32 = arith.constant 0 : i32
    %c0_i32_0 = arith.constant 0 : i32
    return %c0_i32, %arg1 : i32, i32
  }
  func.func @transform_3(%arg0: i32, %arg1: i32, %arg2: i32) -> (i32, i32, i32, i32, i32) {
    %c0_i32 = arith.constant 0 : i32
    %c0_i32_0 = arith.constant 0 : i32
    %c0_i32_1 = arith.constant 0 : i32
    %c0_i32_2 = arith.constant 0 : i32
    %c0_i32_3 = arith.constant 0 : i32
    return %arg0, %c0_i32, %c0_i32_0, %c0_i32_1, %c0_i32_2 : i32, i32, i32, i32, i32
  }
  func.func @transform_4(%arg0: i32, %arg1: i32, %arg2: i32) -> (i32, i32) {
    %c0_i32 = arith.constant 0 : i32
    %c0_i32_0 = arith.constant 0 : i32
    return %c0_i32, %arg1 : i32, i32
  }
  func.func @transform_5(%arg0: i32, %arg1: i32, %arg2: i32) -> (i32, i32) {
    %c1_i32 = arith.constant 1 : i32
    %0 = arith.muli %arg0, %c1_i32 : i32
    %1 = arith.addi %0, %arg2 : i32
    %c0_i32 = arith.constant 0 : i32
    return %1, %arg1 : i32, i32
  }
}

</mosaic_0001>

<llo_original>
// kernel: masked_resblock_forward.2
$region0: #{masked_resblock_forward.2}
  #allocation0 [shape = 'u32[]', space=smem, size = 0x4, offset = 0x4, fixed_abs, tag = 'smem constant byte address 0x4 - core index']
  #allocation1 [shape = 'u32[144,128]{1,0:T(1,128)}', space=vmem, size = 0x12000, scoped, tag = 'internal scratch']
  %s0 = inlined_call_operand.vmem [shape: bf16[2,9,2,8,384], index: 0, kind: input, shape index: {}]
  %s1 = inlined_call_operand.vmem [shape: bf16[1152,128], index: 1, kind: input, shape index: {}]
  %s2 = inlined_call_operand.vmem [shape: f32[1,128], index: 2, kind: input, shape index: {}]
  %s3 = inlined_call_operand.vmem [shape: bf16[128,128], index: 3, kind: output, shape index: {}]
  %s4 = sld [smem:[#allocation0]]
  $region45: #{masked_resblock_forward.2} parent=0
    _
  %s6 = ssub.s32 1, %s4
  %s7 = scalar_select 0, %s6, %s4
  loop: start=0, step=1, limit=4
  $region2: #{masked_resblock_forward.2} parent=0 // loop_pre_header
    _
  $region3: #{masked_resblock_forward.2} parent=0 // loop_header
    %s9 = sphi 0, %s13
    %p10 = scmp.ge.s32.totalorder %s9, 4
    %s16 = sphi 0, %s35
    %s17 = sphi 0, %s31
    %s18 = sphi 0, %s27
    %s19 = sphi 0, %s16
    %s20 = sphi 0, %s17
    %s21 = sphi 0, %s18
    %s22 = sphi 0, %s19
    %s23 = sphi 0, %s20
    %s24 = sphi 0, %s21
    %s38 = sphi 0, %s40
    %s41 = sphi 0, %s38
    %s42 = sphi 0, %s41
    %s58 = sphi 0, %s42
    %s64 = sphi 0, %s66
    %s67 = sphi 0, %s64
    %s68 = sphi 0, %s67
    %s84 = sphi 0, %s68
    %s90 = sphi 0, %s92
    %s93 = sphi 0, %s90
    %s94 = sphi 0, %s93
    %s110 = sphi 0, %s94
    %s120 = sphi 0, %s122
    %s123 = sphi 0, %s120
    %s124 = sphi 0, %s123
    %s140 = sphi 0, %s124
  $region4: #{masked_resblock_forward.2} parent=0 // loop_header_branch
    %12 = sbr.rel (%p10) target = $region8
  $region5: #{masked_resblock_forward.2} parent=0 // loop_body
    %s14 = ssub.s32 %s9, 1
    %s15 = ssub.s32 %s9, 2
    %s25 = sadd.s32 1, %s18
    %p26 = scmp.ge.s32.totalorder %s25, 1
    %s27 = scalar_select %p26, 0, %s25
    %s28 = sadd.s32 1, %s17
    %s29 = scalar_select %p26, %s28, %s17
    %p30 = scmp.ge.s32.totalorder %s29, 1
    %s31 = scalar_select %p30, 0, %s29
    %s32 = sadd.s32 1, %s16
    %s33 = scalar_select %p30, %s32, %s16
    %p34 = scmp.ge.s32.totalorder %s33, 2
    %s35 = scalar_select %p34, 0, %s33
    %s36 = ssub.s32 %s16, %s35
    %p37 = scmp.eq.s32.totalorder %s36, 0
    %s39 = sadd.s32 %s38, 1
    %s40 = scalar_select %p37, %s38, %s39
    %p43 = pneg %p37
    %p44 = scmp.eq.s32.totalorder %s9, 1
    %p45 = por %p43, %p44
    %p46 = scmp.ne.s32.totalorder %s38, %s41
    %p47 = scmp.eq.s32.totalorder %s9, 0
    %p48 = por %p46, %p47
    %p49 = scmp.ne.s32.totalorder %s38, %s41
    %p50 = scmp.eq.s32.totalorder %s14, 1
    %p51 = por %p49, %p50
    %p52 = scmp.ne.s32.totalorder %s41, %s42
    %p53 = scmp.eq.s32.totalorder %s14, 0
    %p54 = por %p52, %p53
    %p55 = scmp.ne.s32.totalorder %s41, %s42
    %p56 = scmp.eq.s32.totalorder %s15, 1
    %p57 = por %p55, %p56
    %p59 = scmp.ne.s32.totalorder %s42, %s58
    %p60 = scmp.eq.s32.totalorder %s15, 0
    %p61 = por %p59, %p60
    %s62 = ssub.s32 %s17, %s31
    %p63 = scmp.eq.s32.totalorder %s62, 0
    %s65 = sadd.s32 %s64, 1
    %s66 = scalar_select %p63, %s64, %s65
    %p69 = pneg %p63
    %p70 = scmp.eq.s32.totalorder %s9, 1
    %p71 = por %p69, %p70
    %p72 = scmp.ne.s32.totalorder %s64, %s67
    %p73 = scmp.eq.s32.totalorder %s9, 0
    %p74 = por %p72, %p73
    %p75 = scmp.ne.s32.totalorder %s64, %s67
    %p76 = scmp.eq.s32.totalorder %s14, 1
    %p77 = por %p75, %p76
    %p78 = scmp.ne.s32.totalorder %s67, %s68
    %p79 = scmp.eq.s32.totalorder %s14, 0
    %p80 = por %p78, %p79
    %p81 = scmp.ne.s32.totalorder %s67, %s68
    %p82 = scmp.eq.s32.totalorder %s15, 1
    %p83 = por %p81, %p82
    %p85 = scmp.ne.s32.totalorder %s68, %s84
    %p86 = scmp.eq.s32.totalorder %s15, 0
    %p87 = por %p85, %p86
    %s88 = ssub.s32 %s17, %s31
    %p89 = scmp.eq.s32.totalorder %s88, 0
    %s91 = sadd.s32 %s90, 1
    %s92 = scalar_select %p89, %s90, %s91
    %p95 = pneg %p89
    %p96 = scmp.eq.s32.totalorder %s9, 1
    %p97 = por %p95, %p96
    %p98 = scmp.ne.s32.totalorder %s90, %s93
    %p99 = scmp.eq.s32.totalorder %s9, 0
    %p100 = por %p98, %p99
    %p101 = scmp.ne.s32.totalorder %s90, %s93
    %p102 = scmp.eq.s32.totalorder %s14, 1
    %p103 = por %p101, %p102
    %p104 = scmp.ne.s32.totalorder %s93, %s94
    %p105 = scmp.eq.s32.totalorder %s14, 0
    %p106 = por %p104, %p105
    %p107 = scmp.ne.s32.totalorder %s93, %s94
    %p108 = scmp.eq.s32.totalorder %s15, 1
    %p109 = por %p107, %p108
    %p111 = scmp.ne.s32.totalorder %s94, %s110
    %p112 = scmp.eq.s32.totalorder %s15, 0
    %p113 = por %p111, %p112
    %s114 = sadd.s32 %s16, %s18
    %s115 = sadd.s32 %s35, %s27
    %s116 = ssub.s32 %s114, %s115
    %s117 = ssub.s32 %s17, %s31
    %s118 = sor.u32 %s116, %s117
    %p119 = scmp.eq.s32.totalorder %s118, 0
    %s121 = sadd.s32 %s120, 1
    %s122 = scalar_select %p119, %s120, %s121
    %p125 = pneg %p119
    %p126 = scmp.eq.s32.totalorder %s9, 1
    %p127 = por %p125, %p126
    %p128 = scmp.ne.s32.totalorder %s120, %s123
    %p129 = scmp.eq.s32.totalorder %s9, 0
    %p130 = por %p128, %p129
    %p131 = scmp.ne.s32.totalorder %s120, %s123
    %p132 = scmp.eq.s32.totalorder %s14, 1
    %p133 = por %p131, %p132
    %p134 = scmp.ne.s32.totalorder %s123, %s124
    %p135 = scmp.eq.s32.totalorder %s14, 0
    %p136 = por %p134, %p135
    %p137 = scmp.ne.s32.totalorder %s123, %s124
    %p138 = scmp.eq.s32.totalorder %s15, 1
    %p139 = por %p137, %p138
    %p141 = scmp.ne.s32.totalorder %s124, %s140
    %p142 = scmp.eq.s32.totalorder %s15, 0
    %p143 = por %p141, %p142
    %p144 = scmp.le.s32.totalorder 1, %s9
    %p145 = scmp.lt.s32.totalorder %s9, 3
    %p146 = pnand %p144, %p145
    %p147 = pneg %p146
    // Predicated region
    $region9: #{masked_resblock_forward.2} parent=5 // pred_check
      _
    $region10: #{masked_resblock_forward.2} parent=5 // pred_check_branch
      %149 = sbr.rel (%p146) target = $region12
    $region11: #{masked_resblock_forward.2} parent=5 // pred_region
      %s150 = ssub.s32 %s9, 1
      // Predicated region
      $region13: #{masked_resblock_forward.2} parent=11 // pred_check
        %p151 = pneg %p80
      $region14: #{masked_resblock_forward.2} parent=11 // pred_check_branch
        %153 = sbr.rel (%p151) target = $region16
      $region15: #{masked_resblock_forward.2} parent=11 // pred_region
        %p154 = scmp.lt.s32.totalorder %s20, 0
        %s155 = scalar_select %p154, %s20, 0
        %s156 = smul.addr %s155, 4
        %s157 = scalar_lea.vmem %s1, %s156
      $region16: #{masked_resblock_forward.2} parent=11 // pred_fallthru
        _
      // Predicated region
      $region17: #{masked_resblock_forward.2} parent=11 // pred_check
        %p158 = pneg %p106
      $region18: #{masked_resblock_forward.2} parent=11 // pred_check_branch
        %160 = sbr.rel (%p158) target = $region20
      $region19: #{masked_resblock_forward.2} parent=11 // pred_region
        %p161 = scmp.lt.s32.totalorder %s20, 0
        %s162 = scalar_select %p161, %s20, 0
        %s163 = scalar_lea.vmem %s2, %s162
      $region20: #{masked_resblock_forward.2} parent=11 // pred_fallthru
        _
    $region12: #{masked_resblock_forward.2} parent=5 // pred_fallthru
      _
    %p164 = scmp.lt.s32.totalorder %s9, 2
    // Predicated region
    $region21: #{masked_resblock_forward.2} parent=5 // pred_check
      %p165 = pneg %p164
    $region22: #{masked_resblock_forward.2} parent=5 // pred_check_branch
      %167 = sbr.rel (%p165) target = $region24
    $region23: #{masked_resblock_forward.2} parent=5 // pred_region
      // Predicated region
      $region25: #{masked_resblock_forward.2} parent=23 // pred_check
        %p168 = pneg %p48
      $region26: #{masked_resblock_forward.2} parent=23 // pred_check_branch
        %170 = sbr.rel (%p168) target = $region28
      $region27: #{masked_resblock_forward.2} parent=23 // pred_region
        %p171 = scmp.lt.s32.totalorder %s16, 1
        %s172 = scalar_select %p171, %s16, 1
        %s173 = smul.addr %s172, 54
        %s174 = smul.addr %s173, 4
        %s175 = scalar_lea.vmem %s0, %s174
      $region28: #{masked_resblock_forward.2} parent=23 // pred_fallthru
        _
    $region24: #{masked_resblock_forward.2} parent=5 // pred_fallthru
      _
    %p176 = scmp.le.s32.totalorder 1, %s9
    %p177 = scmp.lt.s32.totalorder %s9, 3
    %p178 = pnand %p176, %p177
    %p179 = pneg %p178
    // Predicated region
    $region29: #{masked_resblock_forward.2} parent=5 // pred_check
      _
    $region30: #{masked_resblock_forward.2} parent=5 // pred_check_branch
      %181 = sbr.rel (%p178) target = $region32
    $region31: #{masked_resblock_forward.2} parent=5 // pred_region
      %s182 = ssub.s32 %s9, 1
      %p183 = scmp.lt.s32.totalorder %s19, 1
      %s184 = scalar_select %p183, %s19, 1
      %s185 = smul.addr %s184, 54
      %s186 = smul.addr %s185, 4
      %s187 = scalar_lea.vmem %s0, %s186
      %p188 = pneg %p54
      %p189 = pneg %p51
      %p190 = scmp.lt.s32.totalorder %s20, 0
      %s191 = scalar_select %p190, %s20, 0
      %s192 = smul.addr %s191, 4
      %s193 = scalar_lea.vmem %s1, %s192
      %p194 = pneg %p80
      %p195 = pneg %p77
      %p196 = scmp.lt.s32.totalorder %s20, 0
      %s197 = scalar_select %p196, %s20, 0
      %s198 = scalar_lea.vmem %s2, %s197
      %p199 = pneg %p106
      %p200 = pneg %p103
      %p201 = pneg %p136
      %p202 = pneg %p133
      %s203 = sadd.s32 %s19, %s21
      %s204 = smul.u32 8, %s203
      %p205 = scmp.lt.s32.totalorder %s204, 15
      %s206 = scalar_select %p205, %s204, 15
      %p207 = scmp.lt.s32.totalorder %s20, 0
      %s208 = scalar_select %p207, %s20, 0
      %s209 = sadd.s32 %s208, %s206
      %s210 = smul.addr %s209, 4
      %s211 = scalar_lea.vmem %s3, %s210
      %p212 = scmp.lt.s32.totalorder %s19, 1
      %s213 = scalar_select %p212, %s19, 1
      %s214 = smul.addr %s213, 54
      %s215 = smul.addr %s214, 4
      %s216 = scalar_lea.vmem %s0, %s215
      %p217 = scmp.lt.s32.totalorder %s20, 0
      %s218 = scalar_select %p217, %s20, 0
      %s219 = smul.addr %s218, 4
      %s220 = scalar_lea.vmem %s1, %s219
      %p221 = scmp.lt.s32.totalorder %s20, 0
      %s222 = scalar_select %p221, %s20, 0
      %s223 = scalar_lea.vmem %s2, %s222
      %s224 = sadd.s32 %s19, %s21
      %s225 = smul.u32 8, %s224
      %p226 = scmp.lt.s32.totalorder %s225, 15
      %s227 = scalar_select %p226, %s225, 15
      %p228 = scmp.lt.s32.totalorder %s20, 0
      %s229 = scalar_select %p228, %s20, 0
      %s230 = sadd.s32 %s229, %s227
      %s231 = smul.addr %s230, 4
      %s232 = scalar_lea.vmem %s3, %s231
      %s233 = sadd.s32 %s19, %s21
      %s234 = smul.u32 8, %s233
      %s236 = smul.u32 %s21, 8
      %s237 = smul.u32 %s236, 6
      %s238 = smul.addr %s237, 4
      %s239 = scalar_lea.vmem %s216, %s238
      %v240 = vld [vmem:[%s239] sm:$0xf]
      %v241 = vld [vmem:[%s239 + $0x18] sm:$0xf]
      %v242 = vld [vmem:[%s239 + $0x30] sm:$0xf]
      %v243 = vld [vmem:[%s239 + $0x48] sm:$0xf]
      %v244 = vld [vmem:[%s239 + $0x60] sm:$0xf]
      %v245 = vld [vmem:[%s239 + $0x78] sm:$0xf]
      %v246 = vld [vmem:[%s239 + $0x90] sm:$0xf]
      %v247 = vld [vmem:[%s239 + $0xa8] sm:$0xf]
      %v248 = vld [vmem:[%s220] sm:$0xf]
      %v249 = vld [vmem:[%s220 + $0x4] sm:$0xf]
      %v250 = vld [vmem:[%s220 + $0x8] sm:$0xf]
      %v251 = vld [vmem:[%s220 + $0xc] sm:$0xf]
      %v252 = vld [vmem:[%s220 + $0x10] sm:$0xf]
      %v253 = vld [vmem:[%s220 + $0x14] sm:$0xf]
      %v254 = vld [vmem:[%s220 + $0x18] sm:$0xf]
      %v255 = vld [vmem:[%s220 + $0x1c] sm:$0xf]
      %v256 = vld [vmem:[%s220 + $0x20] sm:$0xf]
      %v257 = vld [vmem:[%s220 + $0x24] sm:$0xf]
      %v258 = vld [vmem:[%s220 + $0x28] sm:$0xf]
      %v259 = vld [vmem:[%s220 + $0x2c] sm:$0xf]
      %v260 = vld [vmem:[%s220 + $0x30] sm:$0xf]
      %v261 = vld [vmem:[%s220 + $0x34] sm:$0xf]
      %v262 = vld [vmem:[%s220 + $0x38] sm:$0xf]
      %v263 = vld [vmem:[%s220 + $0x3c] sm:$0xf]
      %v264 = vld [vmem:[%s239 + $0x4] sm:$0xf]
      %v265 = vld [vmem:[%s239 + $0x1c] sm:$0xf]
      %v266 = vld [vmem:[%s239 + $0x34] sm:$0xf]
      %v267 = vld [vmem:[%s239 + $0x4c] sm:$0xf]
      %v268 = vld [vmem:[%s239 + $0x64] sm:$0xf]
      %v269 = vld [vmem:[%s239 + $0x7c] sm:$0xf]
      %v270 = vld [vmem:[%s239 + $0x94] sm:$0xf]
      %v271 = vld [vmem:[%s239 + $0xac] sm:$0xf]
      %v272 = vld [vmem:[%s220 + $0x40] sm:$0xf]
      %v273 = vld [vmem:[%s220 + $0x44] sm:$0xf]
      %v274 = vld [vmem:[%s220 + $0x48] sm:$0xf]
      %v275 = vld [vmem:[%s220 + $0x4c] sm:$0xf]
      %v276 = vld [vmem:[%s220 + $0x50] sm:$0xf]
      %v277 = vld [vmem:[%s220 + $0x54] sm:$0xf]
      %v278 = vld [vmem:[%s220 + $0x58] sm:$0xf]
      %v279 = vld [vmem:[%s220 + $0x5c] sm:$0xf]
      %v280 = vld [vmem:[%s220 + $0x60] sm:$0xf]
      %v281 = vld [vmem:[%s220 + $0x64] sm:$0xf]
      %v282 = vld [vmem:[%s220 + $0x68] sm:$0xf]
      %v283 = vld [vmem:[%s220 + $0x6c] sm:$0xf]
      %v284 = vld [vmem:[%s220 + $0x70] sm:$0xf]
      %v285 = vld [vmem:[%s220 + $0x74] sm:$0xf]
      %v286 = vld [vmem:[%s220 + $0x78] sm:$0xf]
      %v287 = vld [vmem:[%s220 + $0x7c] sm:$0xf]
      %v296 = vunpack.c.l.b16 %v264
      %v297 = vunpack.c.l.b16 %v265
      %v298 = vunpack.c.l.b16 %v266
      %v299 = vunpack.c.l.b16 %v267
      %v300 = vunpack.c.l.b16 %v268
      %v301 = vunpack.c.l.b16 %v269
      %v302 = vunpack.c.l.b16 %v270
      %v303 = vunpack.c.l.b16 %v271
      %v304 = vpack.c.b16 %v297, %v296
      %v305 = vpack.c.b16 %v299, %v298
      %v306 = vpack.c.b16 %v301, %v300
      %v307 = vpack.c.b16 %v303, %v302
      %v328 = vunpack.c.l.b16 %v272
      %v329 = vunpack.c.l.b16 %v273
      %v330 = vunpack.c.l.b16 %v274
      %v331 = vunpack.c.l.b16 %v275
      %v332 = vunpack.c.l.b16 %v276
      %v333 = vunpack.c.l.b16 %v277
      %v334 = vunpack.c.l.b16 %v278
      %v335 = vunpack.c.l.b16 %v279
      %v336 = vunpack.c.l.b16 %v280
      %v337 = vunpack.c.l.b16 %v281
      %v338 = vunpack.c.l.b16 %v282
      %v339 = vunpack.c.l.b16 %v283
      %v340 = vunpack.c.l.b16 %v284
      %v341 = vunpack.c.l.b16 %v285
      %v342 = vunpack.c.l.b16 %v286
      %v343 = vunpack.c.l.b16 %v287
      %v344 = vpack.c.b16 %v329, %v328
      %v345 = vpack.c.b16 %v331, %v330
      %v346 = vpack.c.b16 %v333, %v332
      %v347 = vpack.c.b16 %v335, %v334
      %v348 = vpack.c.b16 %v337, %v336
      %v349 = vpack.c.b16 %v339, %v338
      %v350 = vpack.c.b16 %v341, %v340
      %v351 = vpack.c.b16 %v343, %v342
      %360 = vmatprep.subr.bf16.mxu0 0
      %361 = vmatpush1.bf16.msra.mxu0 %v344
      %362 = vmatprep.subr.bf16.mxu0 0
      %363 = vmatpush1.bf16.msra.mxu0 %v345
      %364 = vmatprep.subr.bf16.mxu0 0
      %365 = vmatpush1.bf16.msra.mxu0 %v346
      %366 = vmatprep.subr.bf16.mxu0 0
      %367 = vmatpush1.bf16.msra.mxu0 %v347
      %368 = vmatprep.subr.bf16.mxu0 0
      %369 = vmatpush1.bf16.msra.mxu0 %v348
      %370 = vmatprep.subr.bf16.mxu0 0
      %371 = vmatpush1.bf16.msra.mxu0 %v349
      %372 = vmatprep.subr.bf16.mxu0 0
      %373 = vmatpush1.bf16.msra.mxu0 %v350
      %374 = vmatprep.subr.bf16.mxu0 0
      %375 = vmatpush1.bf16.msra.mxu0 %v351
      %376 = vmatprep.subr.bf16.mxu0 0
      %377 = vmatpush1.bf16.msra.mxu0 0
      %378 = vmatprep.subr.bf16.mxu0 0
      %379 = vmatpush1.bf16.msra.mxu0 0
      %380 = vmatprep.subr.bf16.mxu0 0
      %381 = vmatpush1.bf16.msra.mxu0 0
      %382 = vmatprep.subr.bf16.mxu0 0
      %383 = vmatpush1.bf16.msra.mxu0 0
      %384 = vmatprep.subr.bf16.mxu0 0
      %385 = vmatpush1.bf16.msra.mxu0 0
      %386 = vmatprep.subr.bf16.mxu0 0
      %387 = vmatpush1.bf16.msra.mxu0 0
      %388 = vmatprep.subr.bf16.mxu0 0
      %389 = vmatpush1.bf16.msra.mxu0 0
      %390 = vmatprep.subr.bf16.mxu0 0
      %391 = vmatpush1.bf16.msra.mxu0 0
      %392 = vmatprep.mubr.bf16.mxu0 0
      %393 = vmatmul.mubr.bf16.gmra.mrb[0].mxu0 %v304
      %v394 = vpop.f32.mrb[0].mxu0
      %v395 = vadd.f32 0.0, %v394
      %v396 = vpop.f32.mrb[0].mxu0
      %v397 = vpop.f32.mrb[0].mxu0
      %v398 = vadd.f32 0.0, %v397
      %v399 = vpop.f32.mrb[0].mxu0
      %400 = vmatprep.mubr.bf16.mxu0 0
      %401 = vmatmul.mubr.bf16.gmra.mrb[0].mxu0 %v305
      %v402 = vpop.f32.mrb[0].mxu0
      %v403 = vadd.f32 0.0, %v402
      %v404 = vpop.f32.mrb[0].mxu0
      %v405 = vpop.f32.mrb[0].mxu0
      %v406 = vadd.f32 0.0, %v405
      %v407 = vpop.f32.mrb[0].mxu0
      %408 = vmatprep.mubr.bf16.mxu0 0
      %409 = vmatmul.mubr.bf16.gmra.mrb[0].mxu0 %v306
      %v410 = vpop.f32.mrb[0].mxu0
      %v411 = vadd.f32 0.0, %v410
      %v412 = vpop.f32.mrb[0].mxu0
      %v413 = vpop.f32.mrb[0].mxu0
      %v414 = vadd.f32 0.0, %v413
      %v415 = vpop.f32.mrb[0].mxu0
      %416 = vmatprep.mubr.bf16.mxu0 0
      %417 = vmatmul.mubr.bf16.gmra.mrb[0].mxu0 %v307
      %v418 = vpop.f32.mrb[0].mxu0
      %v419 = vadd.f32 0.0, %v418
      %v420 = vpop.f32.mrb[0].mxu0
      %v421 = vpop.f32.mrb[0].mxu0
      %v422 = vadd.f32 0.0, %v421
      %v423 = vpop.f32.mrb[0].mxu0
      %424 = vdwg.mxu0
      %v433 = vunpack.c.l.b16 %v240
      %v434 = vunpack.c.l.b16 %v241
      %v435 = vunpack.c.l.b16 %v242
      %v436 = vunpack.c.l.b16 %v243
      %v437 = vunpack.c.l.b16 %v244
      %v438 = vunpack.c.l.b16 %v245
      %v439 = vunpack.c.l.b16 %v246
      %v440 = vunpack.c.l.b16 %v247
      %v441 = vpack.c.b16 %v434, %v433
      %v442 = vpack.c.b16 %v436, %v435
      %v443 = vpack.c.b16 %v438, %v437
      %v444 = vpack.c.b16 %v440, %v439
      %v465 = vunpack.c.l.b16 %v248
      %v466 = vunpack.c.l.b16 %v249
      %v467 = vunpack.c.l.b16 %v250
      %v468 = vunpack.c.l.b16 %v251
      %v469 = vunpack.c.l.b16 %v252
      %v470 = vunpack.c.l.b16 %v253
      %v471 = vunpack.c.l.b16 %v254
      %v472 = vunpack.c.l.b16 %v255
      %v473 = vunpack.c.l.b16 %v256
      %v474 = vunpack.c.l.b16 %v257
      %v475 = vunpack.c.l.b16 %v258
      %v476 = vunpack.c.l.b16 %v259
      %v477 = vunpack.c.l.b16 %v260
      %v478 = vunpack.c.l.b16 %v261
      %v479 = vunpack.c.l.b16 %v262
      %v480 = vunpack.c.l.b16 %v263
      %v481 = vpack.c.b16 %v466, %v465
      %v482 = vpack.c.b16 %v468, %v467
      %v483 = vpack.c.b16 %v470, %v469
      %v484 = vpack.c.b16 %v472, %v471
      %v485 = vpack.c.b16 %v474, %v473
      %v486 = vpack.c.b16 %v476, %v475
      %v487 = vpack.c.b16 %v478, %v477
      %v488 = vpack.c.b16 %v480, %v479
      %497 = vmatprep.subr.bf16.mxu0 0
      %498 = vmatpush1.bf16.msra.mxu0 %v481
      %499 = vmatprep.subr.bf16.mxu0 0
      %500 = vmatpush1.bf16.msra.mxu0 %v482
      %501 = vmatprep.subr.bf16.mxu0 0
      %502 = vmatpush1.bf16.msra.mxu0 %v483
      %503 = vmatprep.subr.bf16.mxu0 0
      %504 = vmatpush1.bf16.msra.mxu0 %v484
      %505 = vmatprep.subr.bf16.mxu0 0
      %506 = vmatpush1.bf16.msra.mxu0 %v485
      %507 = vmatprep.subr.bf16.mxu0 0
      %508 = vmatpush1.bf16.msra.mxu0 %v486
      %509 = vmatprep.subr.bf16.mxu0 0
      %510 = vmatpush1.bf16.msra.mxu0 %v487
      %511 = vmatprep.subr.bf16.mxu0 0
      %512 = vmatpush1.bf16.msra.mxu0 %v488
      %513 = vmatprep.subr.bf16.mxu0 0
      %514 = vmatpush1.bf16.msra.mxu0 0
      %515 = vmatprep.subr.bf16.mxu0 0
      %516 = vmatpush1.bf16.msra.mxu0 0
      %517 = vmatprep.subr.bf16.mxu0 0
      %518 = vmatpush1.bf16.msra.mxu0 0
      %519 = vmatprep.subr.bf16.mxu0 0
      %520 = vmatpush1.bf16.msra.mxu0 0
      %521 = vmatprep.subr.bf16.mxu0 0
      %522 = vmatpush1.bf16.msra.mxu0 0
      %523 = vmatprep.subr.bf16.mxu0 0
      %524 = vmatpush1.bf16.msra.mxu0 0
      %525 = vmatprep.subr.bf16.mxu0 0
      %526 = vmatpush1.bf16.msra.mxu0 0
      %527 = vmatprep.subr.bf16.mxu0 0
      %528 = vmatpush1.bf16.msra.mxu0 0
      %529 = vmatprep.mubr.bf16.mxu0 0
      %530 = vmatmul.mubr.bf16.gmra.mrb[0].mxu0 %v441
      %v531 = vpop.f32.mrb[0].mxu0
      %v532 = vadd.f32 %v395, %v531
      %v533 = vpop.f32.mrb[0].mxu0
      %v534 = vpop.f32.mrb[0].mxu0
      %v535 = vadd.f32 %v398, %v534
      %v536 = vpop.f32.mrb[0].mxu0
      %537 = vmatprep.mubr.bf16.mxu0 0
      %538 = vmatmul.mubr.bf16.gmra.mrb[0].mxu0 %v442
      %v539 = vpop.f32.mrb[0].mxu0
      %v540 = vadd.f32 %v403, %v539
      %v541 = vpop.f32.mrb[0].mxu0
      %v542 = vpop.f32.mrb[0].mxu0
      %v543 = vadd.f32 %v406, %v542
      %v544 = vpop.f32.mrb[0].mxu0
      %545 = vmatprep.mubr.bf16.mxu0 0
      %546 = vmatmul.mubr.bf16.gmra.mrb[0].mxu0 %v443
      %v547 = vpop.f32.mrb[0].mxu0
      %v548 = vadd.f32 %v411, %v547
      %v549 = vpop.f32.mrb[0].mxu0
      %v550 = vpop.f32.mrb[0].mxu0
      %v551 = vadd.f32 %v414, %v550
      %v552 = vpop.f32.mrb[0].mxu0
      %553 = vmatprep.mubr.bf16.mxu0 0
      %554 = vmatmul.mubr.bf16.gmra.mrb[0].mxu0 %v444
      %v555 = vpop.f32.mrb[0].mxu0
      %v556 = vadd.f32 %v419, %v555
      %v557 = vpop.f32.mrb[0].mxu0
      %v558 = vpop.f32.mrb[0].mxu0
      %v559 = vadd.f32 %v422, %v558
      %v560 = vpop.f32.mrb[0].mxu0
      %561 = vdwg.mxu0
      %v562 = vld [vmem:[%s239 + $0x8] sm:$0xf]
      %v563 = vld [vmem:[%s239 + $0x20] sm:$0xf]
      %v564 = vld [vmem:[%s239 + $0x38] sm:$0xf]
      %v565 = vld [vmem:[%s239 + $0x50] sm:$0xf]
      %v566 = vld [vmem:[%s239 + $0x68] sm:$0xf]
      %v567 = vld [vmem:[%s239 + $0x80] sm:$0xf]
      %v568 = vld [vmem:[%s239 + $0x98] sm:$0xf]
      %v569 = vld [vmem:[%s239 + $0xb0] sm:$0xf]
      %v570 = vld [vmem:[%s220 + $0x80] sm:$0xf]
      %v571 = vld [vmem:[%s220 + $0x84] sm:$0xf]
      %v572 = vld [vmem:[%s220 + $0x88] sm:$0xf]
      %v573 = vld [vmem:[%s220 + $0x8c] sm:$0xf]
      %v574 = vld [vmem:[%s220 + $0x90] sm:$0xf]
      %v575 = vld [vmem:[%s220 + $0x94] sm:$0xf]
      %v576 = vld [vmem:[%s220 + $0x98] sm:$0xf]
      %v577 = vld [vmem:[%s220 + $0x9c] sm:$0xf]
      %v578 = vld [vmem:[%s220 + $0xa0] sm:$0xf]
      %v579 = vld [vmem:[%s220 + $0xa4] sm:$0xf]
      %v580 = vld [vmem:[%s220 + $0xa8] sm:$0xf]
      %v581 = vld [vmem:[%s220 + $0xac] sm:$0xf]
      %v582 = vld [vmem:[%s220 + $0xb0] sm:$0xf]
      %v583 = vld [vmem:[%s220 + $0xb4] sm:$0xf]
      %v584 = vld [vmem:[%s220 + $0xb8] sm:$0xf]
      %v585 = vld [vmem:[%s220 + $0xbc] sm:$0xf]
      %v594 = vunpack.c.l.b16 %v562
      %v595 = vunpack.c.l.b16 %v563
      %v596 = vunpack.c.l.b16 %v564
      %v597 = vunpack.c.l.b16 %v565
      %v598 = vunpack.c.l.b16 %v566
      %v599 = vunpack.c.l.b16 %v567
      %v600 = vunpack.c.l.b16 %v568
      %v601 = vunpack.c.l.b16 %v569
      %v602 = vpack.c.b16 %v595, %v594
      %v603 = vpack.c.b16 %v597, %v596
      %v604 = vpack.c.b16 %v599, %v598
      %v605 = vpack.c.b16 %v601, %v600
      %v626 = vunpack.c.l.b16 %v570
      %v627 = vunpack.c.l.b16 %v571
      %v628 = vunpack.c.l.b16 %v572
      %v629 = vunpack.c.l.b16 %v573
      %v630 = vunpack.c.l.b16 %v574
      %v631 = vunpack.c.l.b16 %v575
      %v632 = vunpack.c.l.b16 %v576
      %v633 = vunpack.c.l.b16 %v577
      %v634 = vunpack.c.l.b16 %v578
      %v635 = vunpack.c.l.b16 %v579
      %v636 = vunpack.c.l.b16 %v580
      %v637 = vunpack.c.l.b16 %v581
      %v638 = vunpack.c.l.b16 %v582
      %v639 = vunpack.c.l.b16 %v583
      %v640 = vunpack.c.l.b16 %v584
      %v641 = vunpack.c.l.b16 %v585
      %v642 = vpack.c.b16 %v627, %v626
      %v643 = vpack.c.b16 %v629, %v628
      %v644 = vpack.c.b16 %v631, %v630
      %v645 = vpack.c.b16 %v633, %v632
      %v646 = vpack.c.b16 %v635, %v634
      %v647 = vpack.c.b16 %v637, %v636
      %v648 = vpack.c.b16 %v639, %v638
      %v649 = vpack.c.b16 %v641, %v640
      %658 = vmatprep.subr.bf16.mxu0 0
      %659 = vmatpush1.bf16.msra.mxu0 %v642
      %660 = vmatprep.subr.bf16.mxu0 0
      %661 = vmatpush1.bf16.msra.mxu0 %v643
      %662 = vmatprep.subr.bf16.mxu0 0
      %663 = vmatpush1.bf16.msra.mxu0 %v644
      %664 = vmatprep.subr.bf16.mxu0 0
      %665 = vmatpush1.bf16.msra.mxu0 %v645
      %666 = vmatprep.subr.bf16.mxu0 0
      %667 = vmatpush1.bf16.msra.mxu0 %v646
      %668 = vmatprep.subr.bf16.mxu0 0
      %669 = vmatpush1.bf16.msra.mxu0 %v647
      %670 = vmatprep.subr.bf16.mxu0 0
      %671 = vmatpush1.bf16.msra.mxu0 %v648
      %672 = vmatprep.subr.bf16.mxu0 0
      %673 = vmatpush1.bf16.msra.mxu0 %v649
      %674 = vmatprep.subr.bf16.mxu0 0
      %675 = vmatpush1.bf16.msra.mxu0 0
      %676 = vmatprep.subr.bf16.mxu0 0
      %677 = vmatpush1.bf16.msra.mxu0 0
      %678 = vmatprep.subr.bf16.mxu0 0
      %679 = vmatpush1.bf16.msra.mxu0 0
      %680 = vmatprep.subr.bf16.mxu0 0
      %681 = vmatpush1.bf16.msra.mxu0 0
      %682 = vmatprep.subr.bf16.mxu0 0
      %683 = vmatpush1.bf16.msra.mxu0 0
      %684 = vmatprep.subr.bf16.mxu0 0
      %685 = vmatpush1.bf16.msra.mxu0 0
      %686 = vmatprep.subr.bf16.mxu0 0
      %687 = vmatpush1.bf16.msra.mxu0 0
      %688 = vmatprep.subr.bf16.mxu0 0
      %689 = vmatpush1.bf16.msra.mxu0 0
      %690 = vmatprep.mubr.bf16.mxu0 0
      %691 = vmatmul.mubr.bf16.gmra.mrb[0].mxu0 %v602
      %v692 = vpop.f32.mrb[0].mxu0
      %v693 = vadd.f32 0.0, %v692
      %v694 = vpop.f32.mrb[0].mxu0
      %v695 = vpop.f32.mrb[0].mxu0
      %v696 = vadd.f32 0.0, %v695
      %v697 = vpop.f32.mrb[0].mxu0
      %698 = vmatprep.mubr.bf16.mxu0 0
      %699 = vmatmul.mubr.bf16.gmra.mrb[0].mxu0 %v603
      %v700 = vpop.f32.mrb[0].mxu0
      %v701 = vadd.f32 0.0, %v700
      %v702 = vpop.f32.mrb[0].mxu0
      %v703 = vpop.f32.mrb[0].mxu0
      %v704 = vadd.f32 0.0, %v703
      %v705 = vpop.f32.mrb[0].mxu0
      %706 = vmatprep.mubr.bf16.mxu0 0
      %707 = vmatmul.mubr.bf16.gmra.mrb[0].mxu0 %v604
      %v708 = vpop.f32.mrb[0].mxu0
      %v709 = vadd.f32 0.0, %v708
      %v710 = vpop.f32.mrb[0].mxu0
      %v711 = vpop.f32.mrb[0].mxu0
      %v712 = vadd.f32 0.0, %v711
      %v713 = vpop.f32.mrb[0].mxu0
      %714 = vmatprep.mubr.bf16.mxu0 0
      %715 = vmatmul.mubr.bf16.gmra.mrb[0].mxu0 %v605
      %v716 = vpop.f32.mrb[0].mxu0
      %v717 = vadd.f32 0.0, %v716
      %v718 = vpop.f32.mrb[0].mxu0
      %v719 = vpop.f32.mrb[0].mxu0
      %v720 = vadd.f32 0.0, %v719
      %v721 = vpop.f32.mrb[0].mxu0
      %722 = vdwg.mxu0
      %v723 = vadd.f32 %v532, %v693
      %v724 = vadd.f32 %v535, %v696
      %v725 = vadd.f32 %v540, %v701
      %v726 = vadd.f32 %v543, %v704
      %v727 = vadd.f32 %v548, %v709
      %v728 = vadd.f32 %v551, %v712
      %v729 = vadd.f32 %v556, %v717
      %v730 = vadd.f32 %v559, %v720
      %s731 = sadd.s32 3, %s237
      %s732 = smul.addr %s731, 4
      %s733 = scalar_lea.vmem %s216, %s732
      %v734 = vld [vmem:[%s733] sm:$0xf]
      %v735 = vld [vmem:[%s733 + $0x18] sm:$0xf]
      %v736 = vld [vmem:[%s733 + $0x30] sm:$0xf]
      %v737 = vld [vmem:[%s733 + $0x48] sm:$0xf]
      %v738 = vld [vmem:[%s733 + $0x60] sm:$0xf]
      %v739 = vld [vmem:[%s733 + $0x78] sm:$0xf]
      %v740 = vld [vmem:[%s733 + $0x90] sm:$0xf]
      %v741 = vld [vmem:[%s733 + $0xa8] sm:$0xf]
      %v742 = vld [vmem:[%s220 + $0xc0] sm:$0xf]
      %v743 = vld [vmem:[%s220 + $0xc4] sm:$0xf]
      %v744 = vld [vmem:[%s220 + $0xc8] sm:$0xf]
      %v745 = vld [vmem:[%s220 + $0xcc] sm:$0xf]
      %v746 = vld [vmem:[%s220 + $0xd0] sm:$0xf]
      %v747 = vld [vmem:[%s220 + $0xd4] sm:$0xf]
      %v748 = vld [vmem:[%s220 + $0xd8] sm:$0xf]
      %v749 = vld [vmem:[%s220 + $0xdc] sm:$0xf]
      %v750 = vld [vmem:[%s220 + $0xe0] sm:$0xf]
      %v751 = vld [vmem:[%s220 + $0xe4] sm:$0xf]
      %v752 = vld [vmem:[%s220 + $0xe8] sm:$0xf]
      %v753 = vld [vmem:[%s220 + $0xec] sm:$0xf]
      %v754 = vld [vmem:[%s220 + $0xf0] sm:$0xf]
      %v755 = vld [vmem:[%s220 + $0xf4] sm:$0xf]
      %v756 = vld [vmem:[%s220 + $0xf8] sm:$0xf]
      %v757 = vld [vmem:[%s220 + $0xfc] sm:$0xf]
      %v766 = vunpack.c.l.b16 %v734
      %v767 = vunpack.c.l.b16 %v735
      %v768 = vunpack.c.l.b16 %v736
      %v769 = vunpack.c.l.b16 %v737
      %v770 = vunpack.c.l.b16 %v738
      %v771 = vunpack.c.l.b16 %v739
      %v772 = vunpack.c.l.b16 %v740
      %v773 = vunpack.c.l.b16 %v741
      %v774 = vpack.c.b16 %v767, %v766
      %v775 = vpack.c.b16 %v769, %v768
      %v776 = vpack.c.b16 %v771, %v770
      %v777 = vpack.c.b16 %v773, %v772
      %v798 = vunpack.c.l.b16 %v742
      %v799 = vunpack.c.l.b16 %v743
      %v800 = vunpack.c.l.b16 %v744
      %v801 = vunpack.c.l.b16 %v745
      %v802 = vunpack.c.l.b16 %v746
      %v803 = vunpack.c.l.b16 %v747
      %v804 = vunpack.c.l.b16 %v748
      %v805 = vunpack.c.l.b16 %v749
      %v806 = vunpack.c.l.b16 %v750
      %v807 = vunpack.c.l.b16 %v751
      %v808 = vunpack.c.l.b16 %v752
      %v809 = vunpack.c.l.b16 %v753
      %v810 = vunpack.c.l.b16 %v754
      %v811 = vunpack.c.l.b16 %v755
      %v812 = vunpack.c.l.b16 %v756
      %v813 = vunpack.c.l.b16 %v757
      %v814 = vpack.c.b16 %v799, %v798
      %v815 = vpack.c.b16 %v801, %v800
      %v816 = vpack.c.b16 %v803, %v802
      %v817 = vpack.c.b16 %v805, %v804
      %v818 = vpack.c.b16 %v807, %v806
      %v819 = vpack.c.b16 %v809, %v808
      %v820 = vpack.c.b16 %v811, %v810
      %v821 = vpack.c.b16 %v813, %v812
      %830 = vmatprep.subr.bf16.mxu0 0
      %831 = vmatpush1.bf16.msra.mxu0 %v814
      %832 = vmatprep.subr.bf16.mxu0 0
      %833 = vmatpush1.bf16.msra.mxu0 %v815
      %834 = vmatprep.subr.bf16.mxu0 0
      %835 = vmatpush1.bf16.msra.mxu0 %v816
      %836 = vmatprep.subr.bf16.mxu0 0
      %837 = vmatpush1.bf16.msra.mxu0 %v817
      %838 = vmatprep.subr.bf16.mxu0 0
      %839 = vmatpush1.bf16.msra.mxu0 %v818
      %840 = vmatprep.subr.bf16.mxu0 0
      %841 = vmatpush1.bf16.msra.mxu0 %v819
      %842 = vmatprep.subr.bf16.mxu0 0
      %843 = vmatpush1.bf16.msra.mxu0 %v820
      %844 = vmatprep.subr.bf16.mxu0 0
      %845 = vmatpush1.bf16.msra.mxu0 %v821
      %846 = vmatprep.subr.bf16.mxu0 0
      %847 = vmatpush1.bf16.msra.mxu0 0
      %848 = vmatprep.subr.bf16.mxu0 0
      %849 = vmatpush1.bf16.msra.mxu0 0
      %850 = vmatprep.subr.bf16.mxu0 0
      %851 = vmatpush1.bf16.msra.mxu0 0
      %852 = vmatprep.subr.bf16.mxu0 0
      %853 = vmatpush1.bf16.msra.mxu0 0
      %854 = vmatprep.subr.bf16.mxu0 0
      %855 = vmatpush1.bf16.msra.mxu0 0
      %856 = vmatprep.subr.bf16.mxu0 0
      %857 = vmatpush1.bf16.msra.mxu0 0
      %858 = vmatprep.subr.bf16.mxu0 0
      %859 = vmatpush1.bf16.msra.mxu0 0
      %860 = vmatprep.subr.bf16.mxu0 0
      %861 = vmatpush1.bf16.msra.mxu0 0
      %862 = vmatprep.mubr.bf16.mxu0 0
      %863 = vmatmul.mubr.bf16.gmra.mrb[0].mxu0 %v774
      %v864 = vpop.f32.mrb[0].mxu0
      %v865 = vadd.f32 0.0, %v864
      %v866 = vpop.f32.mrb[0].mxu0
      %v867 = vpop.f32.mrb[0].mxu0
      %v868 = vadd.f32 0.0, %v867
      %v869 = vpop.f32.mrb[0].mxu0
      %870 = vmatprep.mubr.bf16.mxu0 0
      %871 = vmatmul.mubr.bf16.gmra.mrb[0].mxu0 %v775
      %v872 = vpop.f32.mrb[0].mxu0
      %v873 = vadd.f32 0.0, %v872
      %v874 = vpop.f32.mrb[0].mxu0
      %v875 = vpop.f32.mrb[0].mxu0
      %v876 = vadd.f32 0.0, %v875
      %v877 = vpop.f32.mrb[0].mxu0
      %878 = vmatprep.mubr.bf16.mxu0 0
      %879 = vmatmul.mubr.bf16.gmra.mrb[0].mxu0 %v776
      %v880 = vpop.f32.mrb[0].mxu0
      %v881 = vadd.f32 0.0, %v880
      %v882 = vpop.f32.mrb[0].mxu0
      %v883 = vpop.f32.mrb[0].mxu0
      %v884 = vadd.f32 0.0, %v883
      %v885 = vpop.f32.mrb[0].mxu0
      %886 = vmatprep.mubr.bf16.mxu0 0
      %887 = vmatmul.mubr.bf16.gmra.mrb[0].mxu0 %v777
      %v888 = vpop.f32.mrb[0].mxu0
      %v889 = vadd.f32 0.0, %v888
      %v890 = vpop.f32.mrb[0].mxu0
      %v891 = vpop.f32.mrb[0].mxu0
      %v892 = vadd.f32 0.0, %v891
      %v893 = vpop.f32.mrb[0].mxu0
      %894 = vdwg.mxu0
      %v895 = vadd.f32 %v723, %v865
      %v896 = vadd.f32 %v724, %v868
      %v897 = vadd.f32 %v725, %v873
      %v898 = vadd.f32 %v726, %v876
      %v899 = vadd.f32 %v727, %v881
      %v900 = vadd.f32 %v728, %v884
      %v901 = vadd.f32 %v729, %v889
      %v902 = vadd.f32 %v730, %v892
      %v903 = vld [vmem:[%s733 + $0x4] sm:$0xf]
      %v904 = vld [vmem:[%s733 + $0x1c] sm:$0xf]
      %v905 = vld [vmem:[%s733 + $0x34] sm:$0xf]
      %v906 = vld [vmem:[%s733 + $0x4c] sm:$0xf]
      %v907 = vld [vmem:[%s733 + $0x64] sm:$0xf]
      %v908 = vld [vmem:[%s733 + $0x7c] sm:$0xf]
      %v909 = vld [vmem:[%s733 + $0x94] sm:$0xf]
      %v910 = vld [vmem:[%s733 + $0xac] sm:$0xf]
      %v911 = vld [vmem:[%s220 + $0x100] sm:$0xf]
      %v912 = vld [vmem:[%s220 + $0x104] sm:$0xf]
      %v913 = vld [vmem:[%s220 + $0x108] sm:$0xf]
      %v914 = vld [vmem:[%s220 + $0x10c] sm:$0xf]
      %v915 = vld [vmem:[%s220 + $0x110] sm:$0xf]
      %v916 = vld [vmem:[%s220 + $0x114] sm:$0xf]
      %v917 = vld [vmem:[%s220 + $0x118] sm:$0xf]
      %v918 = vld [vmem:[%s220 + $0x11c] sm:$0xf]
      %v919 = vld [vmem:[%s220 + $0x120] sm:$0xf]
      %v920 = vld [vmem:[%s220 + $0x124] sm:$0xf]
      %v921 = vld [vmem:[%s220 + $0x128] sm:$0xf]
      %v922 = vld [vmem:[%s220 + $0x12c] sm:$0xf]
      %v923 = vld [vmem:[%s220 + $0x130] sm:$0xf]
      %v924 = vld [vmem:[%s220 + $0x134] sm:$0xf]
      %v925 = vld [vmem:[%s220 + $0x138] sm:$0xf]
      %v926 = vld [vmem:[%s220 + $0x13c] sm:$0xf]
      %v935 = vunpack.c.l.b16 %v903
      %v936 = vunpack.c.l.b16 %v904
      %v937 = vunpack.c.l.b16 %v905
      %v938 = vunpack.c.l.b16 %v906
      %v939 = vunpack.c.l.b16 %v907
      %v940 = vunpack.c.l.b16 %v908
      %v941 = vunpack.c.l.b16 %v909
      %v942 = vunpack.c.l.b16 %v910
      %v943 = vpack.c.b16 %v936, %v935
      %v944 = vpack.c.b16 %v938, %v937
      %v945 = vpack.c.b16 %v940, %v939
      %v946 = vpack.c.b16 %v942, %v941
      %v967 = vunpack.c.l.b16 %v911
      %v968 = vunpack.c.l.b16 %v912
      %v969 = vunpack.c.l.b16 %v913
      %v970 = vunpack.c.l.b16 %v914
      %v971 = vunpack.c.l.b16 %v915
      %v972 = vunpack.c.l.b16 %v916
      %v973 = vunpack.c.l.b16 %v917
      %v974 = vunpack.c.l.b16 %v918
      %v975 = vunpack.c.l.b16 %v919
      %v976 = vunpack.c.l.b16 %v920
      %v977 = vunpack.c.l.b16 %v921
      %v978 = vunpack.c.l.b16 %v922
      %v979 = vunpack.c.l.b16 %v923
      %v980 = vunpack.c.l.b16 %v924
      %v981 = vunpack.c.l.b16 %v925
      %v982 = vunpack.c.l.b16 %v926
      %v983 = vpack.c.b16 %v968, %v967
      %v984 = vpack.c.b16 %v970, %v969
      %v985 = vpack.c.b16 %v972, %v971
      %v986 = vpack.c.b16 %v974, %v973
      %v987 = vpack.c.b16 %v976, %v975
      %v988 = vpack.c.b16 %v978, %v977
      %v989 = vpack.c.b16 %v980, %v979
      %v990 = vpack.c.b16 %v982, %v981
      %999 = vmatprep.subr.bf16.mxu0 0
      %1000 = vmatpush1.bf16.msra.mxu0 %v983
      %1001 = vmatprep.subr.bf16.mxu0 0
      %1002 = vmatpush1.bf16.msra.mxu0 %v984
      %1003 = vmatprep.subr.bf16.mxu0 0
      %1004 = vmatpush1.bf16.msra.mxu0 %v985
      %1005 = vmatprep.subr.bf16.mxu0 0
      %1006 = vmatpush1.bf16.msra.mxu0 %v986
      %1007 = vmatprep.subr.bf16.mxu0 0
      %1008 = vmatpush1.bf16.msra.mxu0 %v987
      %1009 = vmatprep.subr.bf16.mxu0 0
      %1010 = vmatpush1.bf16.msra.mxu0 %v988
      %1011 = vmatprep.subr.bf16.mxu0 0
      %1012 = vmatpush1.bf16.msra.mxu0 %v989
      %1013 = vmatprep.subr.bf16.mxu0 0
      %1014 = vmatpush1.bf16.msra.mxu0 %v990
      %1015 = vmatprep.subr.bf16.mxu0 0
      %1016 = vmatpush1.bf16.msra.mxu0 0
      %1017 = vmatprep.subr.bf16.mxu0 0
      %1018 = vmatpush1.bf16.msra.mxu0 0
      %1019 = vmatprep.subr.bf16.mxu0 0
      %1020 = vmatpush1.bf16.msra.mxu0 0
      %1021 = vmatprep.subr.bf16.mxu0 0
      %1022 = vmatpush1.bf16.msra.mxu0 0
      %1023 = vmatprep.subr.bf16.mxu0 0
      %1024 = vmatpush1.bf16.msra.mxu0 0
      %1025 = vmatprep.subr.bf16.mxu0 0
      %1026 = vmatpush1.bf16.msra.mxu0 0
      %1027 = vmatprep.subr.bf16.mxu0 0
      %1028 = vmatpush1.bf16.msra.mxu0 0
      %1029 = vmatprep.subr.bf16.mxu0 0
      %1030 = vmatpush1.bf16.msra.mxu0 0
      %1031 = vmatprep.mubr.bf16.mxu0 0
      %1032 = vmatmul.mubr.bf16.gmra.mrb[0].mxu0 %v943
      %v1033 = vpop.f32.mrb[0].mxu0
      %v1034 = vadd.f32 0.0, %v1033
      %v1035 = vpop.f32.mrb[0].mxu0
      %v1036 = vpop.f32.mrb[0].mxu0
      %v1037 = vadd.f32 0.0, %v1036
      %v1038 = vpop.f32.mrb[0].mxu0
      %1039 = vmatprep.mubr.bf16.mxu0 0
      %1040 = vmatmul.mubr.bf16.gmra.mrb[0].mxu0 %v944
      %v1041 = vpop.f32.mrb[0].mxu0
      %v1042 = vadd.f32 0.0, %v1041
      %v1043 = vpop.f32.mrb[0].mxu0
      %v1044 = vpop.f32.mrb[0].mxu0
      %v1045 = vadd.f32 0.0, %v1044
      %v1046 = vpop.f32.mrb[0].mxu0
      %1047 = vmatprep.mubr.bf16.mxu0 0
      %1048 = vmatmul.mubr.bf16.gmra.mrb[0].mxu0 %v945
      %v1049 = vpop.f32.mrb[0].mxu0
      %v1050 = vadd.f32 0.0, %v1049
      %v1051 = vpop.f32.mrb[0].mxu0
      %v1052 = vpop.f32.mrb[0].mxu0
      %v1053 = vadd.f32 0.0, %v1052
      %v1054 = vpop.f32.mrb[0].mxu0
      %1055 = vmatprep.mubr.bf16.mxu0 0
      %1056 = vmatmul.mubr.bf16.gmra.mrb[0].mxu0 %v946
      %v1057 = vpop.f32.mrb[0].mxu0
      %v1058 = vadd.f32 0.0, %v1057
      %v1059 = vpop.f32.mrb[0].mxu0
      %v1060 = vpop.f32.mrb[0].mxu0
      %v1061 = vadd.f32 0.0, %v1060
      %v1062 = vpop.f32.mrb[0].mxu0
      %1063 = vdwg.mxu0
      %v1064 = vadd.f32 %v895, %v1034
      %v1065 = vadd.f32 %v896, %v1037
      %v1066 = vadd.f32 %v897, %v1042
      %v1067 = vadd.f32 %v898, %v1045
      %v1068 = vadd.f32 %v899, %v1050
      %v1069 = vadd.f32 %v900, %v1053
      %v1070 = vadd.f32 %v901, %v1058
      %v1071 = vadd.f32 %v902, %v1061
      %v1072 = vld [vmem:[%s733 + $0x8] sm:$0xf]
      %v1073 = vld [vmem:[%s733 + $0x20] sm:$0xf]
      %v1074 = vld [vmem:[%s733 + $0x38] sm:$0xf]
      %v1075 = vld [vmem:[%s733 + $0x50] sm:$0xf]
      %v1076 = vld [vmem:[%s733 + $0x68] sm:$0xf]
      %v1077 = vld [vmem:[%s733 + $0x80] sm:$0xf]
      %v1078 = vld [vmem:[%s733 + $0x98] sm:$0xf]
      %v1079 = vld [vmem:[%s733 + $0xb0] sm:$0xf]
      %v1080 = vld [vmem:[%s220 + $0x140] sm:$0xf]
      %v1081 = vld [vmem:[%s220 + $0x144] sm:$0xf]
      %v1082 = vld [vmem:[%s220 + $0x148] sm:$0xf]
      %v1083 = vld [vmem:[%s220 + $0x14c] sm:$0xf]
      %v1084 = vld [vmem:[%s220 + $0x150] sm:$0xf]
      %v1085 = vld [vmem:[%s220 + $0x154] sm:$0xf]
      %v1086 = vld [vmem:[%s220 + $0x158] sm:$0xf]
      %v1087 = vld [vmem:[%s220 + $0x15c] sm:$0xf]
      %v1088 = vld [vmem:[%s220 + $0x160] sm:$0xf]
      %v1089 = vld [vmem:[%s220 + $0x164] sm:$0xf]
      %v1090 = vld [vmem:[%s220 + $0x168] sm:$0xf]
      %v1091 = vld [vmem:[%s220 + $0x16c] sm:$0xf]
      %v1092 = vld [vmem:[%s220 + $0x170] sm:$0xf]
      %v1093 = vld [vmem:[%s220 + $0x174] sm:$0xf]
      %v1094 = vld [vmem:[%s220 + $0x178] sm:$0xf]
      %v1095 = vld [vmem:[%s220 + $0x17c] sm:$0xf]
      %v1104 = vunpack.c.l.b16 %v1072
      %v1105 = vunpack.c.l.b16 %v1073
      %v1106 = vunpack.c.l.b16 %v1074
      %v1107 = vunpack.c.l.b16 %v1075
      %v1108 = vunpack.c.l.b16 %v1076
      %v1109 = vunpack.c.l.b16 %v1077
      %v1110 = vunpack.c.l.b16 %v1078
      %v1111 = vunpack.c.l.b16 %v1079
      %v1112 = vpack.c.b16 %v1105, %v1104
      %v1113 = vpack.c.b16 %v1107, %v1106
      %v1114 = vpack.c.b16 %v1109, %v1108
      %v1115 = vpack.c.b16 %v1111, %v1110
      %v1136 = vunpack.c.l.b16 %v1080
      %v1137 = vunpack.c.l.b16 %v1081
      %v1138 = vunpack.c.l.b16 %v1082
      %v1139 = vunpack.c.l.b16 %v1083
      %v1140 = vunpack.c.l.b16 %v1084
      %v1141 = vunpack.c.l.b16 %v1085
      %v1142 = vunpack.c.l.b16 %v1086
      %v1143 = vunpack.c.l.b16 %v1087
      %v1144 = vunpack.c.l.b16 %v1088
      %v1145 = vunpack.c.l.b16 %v1089
      %v1146 = vunpack.c.l.b16 %v1090
      %v1147 = vunpack.c.l.b16 %v1091
      %v1148 = vunpack.c.l.b16 %v1092
      %v1149 = vunpack.c.l.b16 %v1093
      %v1150 = vunpack.c.l.b16 %v1094
      %v1151 = vunpack.c.l.b16 %v1095
      %v1152 = vpack.c.b16 %v1137, %v1136
      %v1153 = vpack.c.b16 %v1139, %v1138
      %v1154 = vpack.c.b16 %v1141, %v1140
      %v1155 = vpack.c.b16 %v1143, %v1142
      %v1156 = vpack.c.b16 %v1145, %v1144
      %v1157 = vpack.c.b16 %v1147, %v1146
      %v1158 = vpack.c.b16 %v1149, %v1148
      %v1159 = vpack.c.b16 %v1151, %v1150
      %1168 = vmatprep.subr.bf16.mxu0 0
      %1169 = vmatpush1.bf16.msra.mxu0 %v1152
      %1170 = vmatprep.subr.bf16.mxu0 0
      %1171 = vmatpush1.bf16.msra.mxu0 %v1153
      %1172 = vmatprep.subr.bf16.mxu0 0
      %1173 = vmatpush1.bf16.msra.mxu0 %v1154
      %1174 = vmatprep.subr.bf16.mxu0 0
      %1175 = vmatpush1.bf16.msra.mxu0 %v1155
      %1176 = vmatprep.subr.bf16.mxu0 0
      %1177 = vmatpush1.bf16.msra.mxu0 %v1156
      %1178 = vmatprep.subr.bf16.mxu0 0
      %1179 = vmatpush1.bf16.msra.mxu0 %v1157
      %1180 = vmatprep.subr.bf16.mxu0 0
      %1181 = vmatpush1.bf16.msra.mxu0 %v1158
      %1182 = vmatprep.subr.bf16.mxu0 0
      %1183 = vmatpush1.bf16.msra.mxu0 %v1159
      %1184 = vmatprep.subr.bf16.mxu0 0
      %1185 = vmatpush1.bf16.msra.mxu0 0
      %1186 = vmatprep.subr.bf16.mxu0 0
      %1187 = vmatpush1.bf16.msra.mxu0 0
      %1188 = vmatprep.subr.bf16.mxu0 0
      %1189 = vmatpush1.bf16.msra.mxu0 0
      %1190 = vmatprep.subr.bf16.mxu0 0
      %1191 = vmatpush1.bf16.msra.mxu0 0
      %1192 = vmatprep.subr.bf16.mxu0 0
      %1193 = vmatpush1.bf16.msra.mxu0 0
      %1194 = vmatprep.subr.bf16.mxu0 0
      %1195 = vmatpush1.bf16.msra.mxu0 0
      %1196 = vmatprep.subr.bf16.mxu0 0
      %1197 = vmatpush1.bf16.msra.mxu0 0
      %1198 = vmatprep.subr.bf16.mxu0 0
      %1199 = vmatpush1.bf16.msra.mxu0 0
      %1200 = vmatprep.mubr.bf16.mxu0 0
      %1201 = vmatmul.mubr.bf16.gmra.mrb[0].mxu0 %v1112
      %v1202 = vpop.f32.mrb[0].mxu0
      %v1203 = vadd.f32 0.0, %v1202
      %v1204 = vpop.f32.mrb[0].mxu0
      %v1205 = vpop.f32.mrb[0].mxu0
      %v1206 = vadd.f32 0.0, %v1205
      %v1207 = vpop.f32.mrb[0].mxu0
      %1208 = vmatprep.mubr.bf16.mxu0 0
      %1209 = vmatmul.mubr.bf16.gmra.mrb[0].mxu0 %v1113
      %v1210 = vpop.f32.mrb[0].mxu0
      %v1211 = vadd.f32 0.0, %v1210
      %v1212 = vpop.f32.mrb[0].mxu0
      %v1213 = vpop.f32.mrb[0].mxu0
      %v1214 = vadd.f32 0.0, %v1213
      %v1215 = vpop.f32.mrb[0].mxu0
      %1216 = vmatprep.mubr.bf16.mxu0 0
      %1217 = vmatmul.mubr.bf16.gmra.mrb[0].mxu0 %v1114
      %v1218 = vpop.f32.mrb[0].mxu0
      %v1219 = vadd.f32 0.0, %v1218
      %v1220 = vpop.f32.mrb[0].mxu0
      %v1221 = vpop.f32.mrb[0].mxu0
      %v1222 = vadd.f32 0.0, %v1221
      %v1223 = vpop.f32.mrb[0].mxu0
      %1224 = vmatprep.mubr.bf16.mxu0 0
      %1225 = vmatmul.mubr.bf16.gmra.mrb[0].mxu0 %v1115
      %v1226 = vpop.f32.mrb[0].mxu0
      %v1227 = vadd.f32 0.0, %v1226
      %v1228 = vpop.f32.mrb[0].mxu0
      %v1229 = vpop.f32.mrb[0].mxu0
      %v1230 = vadd.f32 0.0, %v1229
      %v1231 = vpop.f32.mrb[0].mxu0
      %1232 = vdwg.mxu0
      %v1233 = vadd.f32 %v1064, %v1203
      %v1234 = vadd.f32 %v1065, %v1206
      %v1235 = vadd.f32 %v1066, %v1211
      %v1236 = vadd.f32 %v1067, %v1214
      %v1237 = vadd.f32 %v1068, %v1219
      %v1238 = vadd.f32 %v1069, %v1222
      %v1239 = vadd.f32 %v1070, %v1227
      %v1240 = vadd.f32 %v1071, %v1230
      %s1241 = sadd.s32 %s236, 1
      %s1242 = smul.u32 %s1241, 6
      %s1243 = smul.addr %s1242, 4
      %s1244 = scalar_lea.vmem %s216, %s1243
      %v1245 = vld [vmem:[%s1244] sm:$0xf]
      %v1246 = vld [vmem:[%s1244 + $0x18] sm:$0xf]
      %v1247 = vld [vmem:[%s1244 + $0x30] sm:$0xf]
      %v1248 = vld [vmem:[%s1244 + $0x48] sm:$0xf]
      %v1249 = vld [vmem:[%s1244 + $0x60] sm:$0xf]
      %v1250 = vld [vmem:[%s1244 + $0x78] sm:$0xf]
      %v1251 = vld [vmem:[%s1244 + $0x90] sm:$0xf]
      %v1252 = vld [vmem:[%s1244 + $0xa8] sm:$0xf]
      %v1253 = vld [vmem:[%s220 + $0x180] sm:$0xf]
      %v1254 = vld [vmem:[%s220 + $0x184] sm:$0xf]
      %v1255 = vld [vmem:[%s220 + $0x188] sm:$0xf]
      %v1256 = vld [vmem:[%s220 + $0x18c] sm:$0xf]
      %v1257 = vld [vmem:[%s220 + $0x190] sm:$0xf]
      %v1258 = vld [vmem:[%s220 + $0x194] sm:$0xf]
      %v1259 = vld [vmem:[%s220 + $0x198] sm:$0xf]
      %v1260 = vld [vmem:[%s220 + $0x19c] sm:$0xf]
      %v1261 = vld [vmem:[%s220 + $0x1a0] sm:$0xf]
      %v1262 = vld [vmem:[%s220 + $0x1a4] sm:$0xf]
      %v1263 = vld [vmem:[%s220 + $0x1a8] sm:$0xf]
      %v1264 = vld [vmem:[%s220 + $0x1ac] sm:$0xf]
      %v1265 = vld [vmem:[%s220 + $0x1b0] sm:$0xf]
      %v1266 = vld [vmem:[%s220 + $0x1b4] sm:$0xf]
      %v1267 = vld [vmem:[%s220 + $0x1b8] sm:$0xf]
      %v1268 = vld [vmem:[%s220 + $0x1bc] sm:$0xf]
      %v1277 = vunpack.c.l.b16 %v1245
      %v1278 = vunpack.c.l.b16 %v1246
      %v1279 = vunpack.c.l.b16 %v1247
      %v1280 = vunpack.c.l.b16 %v1248
      %v1281 = vunpack.c.l.b16 %v1249
      %v1282 = vunpack.c.l.b16 %v1250
      %v1283 = vunpack.c.l.b16 %v1251
      %v1284 = vunpack.c.l.b16 %v1252
      %v1285 = vpack.c.b16 %v1278, %v1277
      %v1286 = vpack.c.b16 %v1280, %v1279
      %v1287 = vpack.c.b16 %v1282, %v1281
      %v1288 = vpack.c.b16 %v1284, %v1283
      %v1309 = vunpack.c.l.b16 %v1253
      %v1310 = vunpack.c.l.b16 %v1254
      %v1311 = vunpack.c.l.b16 %v1255
      %v1312 = vunpack.c.l.b16 %v1256
      %v1313 = vunpack.c.l.b16 %v1257
      %v1314 = vunpack.c.l.b16 %v1258
      %v1315 = vunpack.c.l.b16 %v1259
      %v1316 = vunpack.c.l.b16 %v1260
      %v1317 = vunpack.c.l.b16 %v1261
      %v1318 = vunpack.c.l.b16 %v1262
      %v1319 = vunpack.c.l.b16 %v1263
      %v1320 = vunpack.c.l.b16 %v1264
      %v1321 = vunpack.c.l.b16 %v1265
      %v1322 = vunpack.c.l.b16 %v1266
      %v1323 = vunpack.c.l.b16 %v1267
      %v1324 = vunpack.c.l.b16 %v1268
      %v1325 = vpack.c.b16 %v1310, %v1309
      %v1326 = vpack.c.b16 %v1312, %v1311
      %v1327 = vpack.c.b16 %v1314, %v1313
      %v1328 = vpack.c.b16 %v1316, %v1315
      %v1329 = vpack.c.b16 %v1318, %v1317
      %v1330 = vpack.c.b16 %v1320, %v1319
      %v1331 = vpack.c.b16 %v1322, %v1321
      %v1332 = vpack.c.b16 %v1324, %v1323
      %1341 = vmatprep.subr.bf16.mxu0 0
      %1342 = vmatpush1.bf16.msra.mxu0 %v1325
      %1343 = vmatprep.subr.bf16.mxu0 0
      %1344 = vmatpush1.bf16.msra.mxu0 %v1326
      %1345 = vmatprep.subr.bf16.mxu0 0
      %1346 = vmatpush1.bf16.msra.mxu0 %v1327
      %1347 = vmatprep.subr.bf16.mxu0 0
      %1348 = vmatpush1.bf16.msra.mxu0 %v1328
      %1349 = vmatprep.subr.bf16.mxu0 0
      %1350 = vmatpush1.bf16.msra.mxu0 %v1329
      %1351 = vmatprep.subr.bf16.mxu0 0
      %1352 = vmatpush1.bf16.msra.mxu0 %v1330
      %1353 = vmatprep.subr.bf16.mxu0 0
      %1354 = vmatpush1.bf16.msra.mxu0 %v1331
      %1355 = vmatprep.subr.bf16.mxu0 0
      %1356 = vmatpush1.bf16.msra.mxu0 %v1332
      %1357 = vmatprep.subr.bf16.mxu0 0
      %1358 = vmatpush1.bf16.msra.mxu0 0
      %1359 = vmatprep.subr.bf16.mxu0 0
      %1360 = vmatpush1.bf16.msra.mxu0 0
      %1361 = vmatprep.subr.bf16.mxu0 0
      %1362 = vmatpush1.bf16.msra.mxu0 0
      %1363 = vmatprep.subr.bf16.mxu0 0
      %1364 = vmatpush1.bf16.msra.mxu0 0
      %1365 = vmatprep.subr.bf16.mxu0 0
      %1366 = vmatpush1.bf16.msra.mxu0 0
      %1367 = vmatprep.subr.bf16.mxu0 0
      %1368 = vmatpush1.bf16.msra.mxu0 0
      %1369 = vmatprep.subr.bf16.mxu0 0
      %1370 = vmatpush1.bf16.msra.mxu0 0
      %1371 = vmatprep.subr.bf16.mxu0 0
      %1372 = vmatpush1.bf16.msra.mxu0 0
      %1373 = vmatprep.mubr.bf16.mxu0 0
      %1374 = vmatmul.mubr.bf16.gmra.mrb[0].mxu0 %v1285
      %v1375 = vpop.f32.mrb[0].mxu0
      %v1376 = vadd.f32 0.0, %v1375
      %v1377 = vpop.f32.mrb[0].mxu0
      %v1378 = vpop.f32.mrb[0].mxu0
      %v1379 = vadd.f32 0.0, %v1378
      %v1380 = vpop.f32.mrb[0].mxu0
      %1381 = vmatprep.mubr.bf16.mxu0 0
      %1382 = vmatmul.mubr.bf16.gmra.mrb[0].mxu0 %v1286
      %v1383 = vpop.f32.mrb[0].mxu0
      %v1384 = vadd.f32 0.0, %v1383
      %v1385 = vpop.f32.mrb[0].mxu0
      %v1386 = vpop.f32.mrb[0].mxu0
      %v1387 = vadd.f32 0.0, %v1386
      %v1388 = vpop.f32.mrb[0].mxu0
      %1389 = vmatprep.mubr.bf16.mxu0 0
      %1390 = vmatmul.mubr.bf16.gmra.mrb[0].mxu0 %v1287
      %v1391 = vpop.f32.mrb[0].mxu0
      %v1392 = vadd.f32 0.0, %v1391
      %v1393 = vpop.f32.mrb[0].mxu0
      %v1394 = vpop.f32.mrb[0].mxu0
      %v1395 = vadd.f32 0.0, %v1394
      %v1396 = vpop.f32.mrb[0].mxu0
      %1397 = vmatprep.mubr.bf16.mxu0 0
      %1398 = vmatmul.mubr.bf16.gmra.mrb[0].mxu0 %v1288
      %v1399 = vpop.f32.mrb[0].mxu0
      %v1400 = vadd.f32 0.0, %v1399
      %v1401 = vpop.f32.mrb[0].mxu0
      %v1402 = vpop.f32.mrb[0].mxu0
      %v1403 = vadd.f32 0.0, %v1402
      %v1404 = vpop.f32.mrb[0].mxu0
      %1405 = vdwg.mxu0
      %v1406 = vadd.f32 %v1233, %v1376
      %v1407 = vadd.f32 %v1234, %v1379
      %v1408 = vadd.f32 %v1235, %v1384
      %v1409 = vadd.f32 %v1236, %v1387
      %v1410 = vadd.f32 %v1237, %v1392
      %v1411 = vadd.f32 %v1238, %v1395
      %v1412 = vadd.f32 %v1239, %v1400
      %v1413 = vadd.f32 %v1240, %v1403
      %v1414 = vld [vmem:[%s1244 + $0x4] sm:$0xf]
      %v1415 = vld [vmem:[%s1244 + $0x1c] sm:$0xf]
      %v1416 = vld [vmem:[%s1244 + $0x34] sm:$0xf]
      %v1417 = vld [vmem:[%s1244 + $0x4c] sm:$0xf]
      %v1418 = vld [vmem:[%s1244 + $0x64] sm:$0xf]
      %v1419 = vld [vmem:[%s1244 + $0x7c] sm:$0xf]
      %v1420 = vld [vmem:[%s1244 + $0x94] sm:$0xf]
      %v1421 = vld [vmem:[%s1244 + $0xac] sm:$0xf]
      %v1422 = vld [vmem:[%s220 + $0x1c0] sm:$0xf]
      %v1423 = vld [vmem:[%s220 + $0x1c4] sm:$0xf]
      %v1424 = vld [vmem:[%s220 + $0x1c8] sm:$0xf]
      %v1425 = vld [vmem:[%s220 + $0x1cc] sm:$0xf]
      %v1426 = vld [vmem:[%s220 + $0x1d0] sm:$0xf]
      %v1427 = vld [vmem:[%s220 + $0x1d4] sm:$0xf]
      %v1428 = vld [vmem:[%s220 + $0x1d8] sm:$0xf]
      %v1429 = vld [vmem:[%s220 + $0x1dc] sm:$0xf]
      %v1430 = vld [vmem:[%s220 + $0x1e0] sm:$0xf]
      %v1431 = vld [vmem:[%s220 + $0x1e4] sm:$0xf]
      %v1432 = vld [vmem:[%s220 + $0x1e8] sm:$0xf]
      %v1433 = vld [vmem:[%s220 + $0x1ec] sm:$0xf]
      %v1434 = vld [vmem:[%s220 + $0x1f0] sm:$0xf]
      %v1435 = vld [vmem:[%s220 + $0x1f4] sm:$0xf]
      %v1436 = vld [vmem:[%s220 + $0x1f8] sm:$0xf]
      %v1437 = vld [vmem:[%s220 + $0x1fc] sm:$0xf]
      %v1446 = vunpack.c.l.b16 %v1414
      %v1447 = vunpack.c.l.b16 %v1415
      %v1448 = vunpack.c.l.b16 %v1416
      %v1449 = vunpack.c.l.b16 %v1417
      %v1450 = vunpack.c.l.b16 %v1418
      %v1451 = vunpack.c.l.b16 %v1419
      %v1452 = vunpack.c.l.b16 %v1420
      %v1453 = vunpack.c.l.b16 %v1421
      %v1454 = vpack.c.b16 %v1447, %v1446
      %v1455 = vpack.c.b16 %v1449, %v1448
      %v1456 = vpack.c.b16 %v1451, %v1450
      %v1457 = vpack.c.b16 %v1453, %v1452
      %v1478 = vunpack.c.l.b16 %v1422
      %v1479 = vunpack.c.l.b16 %v1423
      %v1480 = vunpack.c.l.b16 %v1424
      %v1481 = vunpack.c.l.b16 %v1425
      %v1482 = vunpack.c.l.b16 %v1426
      %v1483 = vunpack.c.l.b16 %v1427
      %v1484 = vunpack.c.l.b16 %v1428
      %v1485 = vunpack.c.l.b16 %v1429
      %v1486 = vunpack.c.l.b16 %v1430
      %v1487 = vunpack.c.l.b16 %v1431
      %v1488 = vunpack.c.l.b16 %v1432
      %v1489 = vunpack.c.l.b16 %v1433
      %v1490 = vunpack.c.l.b16 %v1434
      %v1491 = vunpack.c.l.b16 %v1435
      %v1492 = vunpack.c.l.b16 %v1436
      %v1493 = vunpack.c.l.b16 %v1437
      %v1494 = vpack.c.b16 %v1479, %v1478
      %v1495 = vpack.c.b16 %v1481, %v1480
      %v1496 = vpack.c.b16 %v1483, %v1482
      %v1497 = vpack.c.b16 %v1485, %v1484
      %v1498 = vpack.c.b16 %v1487, %v1486
      %v1499 = vpack.c.b16 %v1489, %v1488
      %v1500 = vpack.c.b16 %v1491, %v1490
      %v1501 = vpack.c.b16 %v1493, %v1492
      %1510 = vmatprep.subr.bf16.mxu0 0
      %1511 = vmatpush1.bf16.msra.mxu0 %v1494
      %1512 = vmatprep.subr.bf16.mxu0 0
      %1513 = vmatpush1.bf16.msra.mxu0 %v1495
      %1514 = vmatprep.subr.bf16.mxu0 0
      %1515 = vmatpush1.bf16.msra.mxu0 %v1496
      %1516 = vmatprep.subr.bf16.mxu0 0
      %1517 = vmatpush1.bf16.msra.mxu0 %v1497
      %1518 = vmatprep.subr.bf16.mxu0 0
      %1519 = vmatpush1.bf16.msra.mxu0 %v1498
      %1520 = vmatprep.subr.bf16.mxu0 0
      %1521 = vmatpush1.bf16.msra.mxu0 %v1499
      %1522 = vmatprep.subr.bf16.mxu0 0
      %1523 = vmatpush1.bf16.msra.mxu0 %v1500
      %1524 = vmatprep.subr.bf16.mxu0 0
      %1525 = vmatpush1.bf16.msra.mxu0 %v1501
      %1526 = vmatprep.subr.bf16.mxu0 0
      %1527 = vmatpush1.bf16.msra.mxu0 0
      %1528 = vmatprep.subr.bf16.mxu0 0
      %1529 = vmatpush1.bf16.msra.mxu0 0
      %1530 = vmatprep.subr.bf16.mxu0 0
      %1531 = vmatpush1.bf16.msra.mxu0 0
      %1532 = vmatprep.subr.bf16.mxu0 0
      %1533 = vmatpush1.bf16.msra.mxu0 0
      %1534 = vmatprep.subr.bf16.mxu0 0
      %1535 = vmatpush1.bf16.msra.mxu0 0
      %1536 = vmatprep.subr.bf16.mxu0 0
      %1537 = vmatpush1.bf16.msra.mxu0 0
      %1538 = vmatprep.subr.bf16.mxu0 0
      %1539 = vmatpush1.bf16.msra.mxu0 0
      %1540 = vmatprep.subr.bf16.mxu0 0
      %1541 = vmatpush1.bf16.msra.mxu0 0
      %1542 = vmatprep.mubr.bf16.mxu0 0
      %1543 = vmatmul.mubr.bf16.gmra.mrb[0].mxu0 %v1454
      %v1544 = vpop.f32.mrb[0].mxu0
      %v1545 = vadd.f32 0.0, %v1544
      %v1546 = vpop.f32.mrb[0].mxu0
      %v1547 = vpop.f32.mrb[0].mxu0
      %v1548 = vadd.f32 0.0, %v1547
      %v1549 = vpop.f32.mrb[0].mxu0
      %1550 = vmatprep.mubr.bf16.mxu0 0
      %1551 = vmatmul.mubr.bf16.gmra.mrb[0].mxu0 %v1455
      %v1552 = vpop.f32.mrb[0].mxu0
      %v1553 = vadd.f32 0.0, %v1552
      %v1554 = vpop.f32.mrb[0].mxu0
      %v1555 = vpop.f32.mrb[0].mxu0
      %v1556 = vadd.f32 0.0, %v1555
      %v1557 = vpop.f32.mrb[0].mxu0
      %1558 = vmatprep.mubr.bf16.mxu0 0
      %1559 = vmatmul.mubr.bf16.gmra.mrb[0].mxu0 %v1456
      %v1560 = vpop.f32.mrb[0].mxu0
      %v1561 = vadd.f32 0.0, %v1560
      %v1562 = vpop.f32.mrb[0].mxu0
      %v1563 = vpop.f32.mrb[0].mxu0
      %v1564 = vadd.f32 0.0, %v1563
      %v1565 = vpop.f32.mrb[0].mxu0
      %1566 = vmatprep.mubr.bf16.mxu0 0
      %1567 = vmatmul.mubr.bf16.gmra.mrb[0].mxu0 %v1457
      %v1568 = vpop.f32.mrb[0].mxu0
      %v1569 = vadd.f32 0.0, %v1568
      %v1570 = vpop.f32.mrb[0].mxu0
      %v1571 = vpop.f32.mrb[0].mxu0
      %v1572 = vadd.f32 0.0, %v1571
      %v1573 = vpop.f32.mrb[0].mxu0
      %1574 = vdwg.mxu0
      %v1575 = vadd.f32 %v1406, %v1545
      %v1576 = vadd.f32 %v1407, %v1548
      %v1577 = vadd.f32 %v1408, %v1553
      %v1578 = vadd.f32 %v1409, %v1556
      %v1579 = vadd.f32 %v1410, %v1561
      %v1580 = vadd.f32 %v1411, %v1564
      %v1581 = vadd.f32 %v1412, %v1569
      %v1582 = vadd.f32 %v1413, %v1572
      %v1583 = vld [vmem:[%s1244 + $0x8] sm:$0xf]
      %v1584 = vld [vmem:[%s1244 + $0x20] sm:$0xf]
      %v1585 = vld [vmem:[%s1244 + $0x38] sm:$0xf]
      %v1586 = vld [vmem:[%s1244 + $0x50] sm:$0xf]
      %v1587 = vld [vmem:[%s1244 + $0x68] sm:$0xf]
      %v1588 = vld [vmem:[%s1244 + $0x80] sm:$0xf]
      %v1589 = vld [vmem:[%s1244 + $0x98] sm:$0xf]
      %v1590 = vld [vmem:[%s1244 + $0xb0] sm:$0xf]
      %v1591 = vld [vmem:[%s220 + $0x200] sm:$0xf]
      %v1592 = vld [vmem:[%s220 + $0x204] sm:$0xf]
      %v1593 = vld [vmem:[%s220 + $0x208] sm:$0xf]
      %v1594 = vld [vmem:[%s220 + $0x20c] sm:$0xf]
      %v1595 = vld [vmem:[%s220 + $0x210] sm:$0xf]
      %v1596 = vld [vmem:[%s220 + $0x214] sm:$0xf]
      %v1597 = vld [vmem:[%s220 + $0x218] sm:$0xf]
      %v1598 = vld [vmem:[%s220 + $0x21c] sm:$0xf]
      %v1599 = vld [vmem:[%s220 + $0x220] sm:$0xf]
      %v1600 = vld [vmem:[%s220 + $0x224] sm:$0xf]
      %v1601 = vld [vmem:[%s220 + $0x228] sm:$0xf]
      %v1602 = vld [vmem:[%s220 + $0x22c] sm:$0xf]
      %v1603 = vld [vmem:[%s220 + $0x230] sm:$0xf]
      %v1604 = vld [vmem:[%s220 + $0x234] sm:$0xf]
      %v1605 = vld [vmem:[%s220 + $0x238] sm:$0xf]
      %v1606 = vld [vmem:[%s220 + $0x23c] sm:$0xf]
      %v1615 = vunpack.c.l.b16 %v1583
      %v1616 = vunpack.c.l.b16 %v1584
      %v1617 = vunpack.c.l.b16 %v1585
      %v1618 = vunpack.c.l.b16 %v1586
      %v1619 = vunpack.c.l.b16 %v1587
      %v1620 = vunpack.c.l.b16 %v1588
      %v1621 = vunpack.c.l.b16 %v1589
      %v1622 = vunpack.c.l.b16 %v1590
      %v1623 = vpack.c.b16 %v1616, %v1615
      %v1624 = vpack.c.b16 %v1618, %v1617
      %v1625 = vpack.c.b16 %v1620, %v1619
      %v1626 = vpack.c.b16 %v1622, %v1621
      %v1647 = vunpack.c.l.b16 %v1591
      %v1648 = vunpack.c.l.b16 %v1592
      %v1649 = vunpack.c.l.b16 %v1593
      %v1650 = vunpack.c.l.b16 %v1594
      %v1651 = vunpack.c.l.b16 %v1595
      %v1652 = vunpack.c.l.b16 %v1596
      %v1653 = vunpack.c.l.b16 %v1597
      %v1654 = vunpack.c.l.b16 %v1598
      %v1655 = vunpack.c.l.b16 %v1599
      %v1656 = vunpack.c.l.b16 %v1600
      %v1657 = vunpack.c.l.b16 %v1601
      %v1658 = vunpack.c.l.b16 %v1602
      %v1659 = vunpack.c.l.b16 %v1603
      %v1660 = vunpack.c.l.b16 %v1604
      %v1661 = vunpack.c.l.b16 %v1605
      %v1662 = vunpack.c.l.b16 %v1606
      %v1663 = vpack.c.b16 %v1648, %v1647
      %v1664 = vpack.c.b16 %v1650, %v1649
      %v1665 = vpack.c.b16 %v1652, %v1651
      %v1666 = vpack.c.b16 %v1654, %v1653
      %v1667 = vpack.c.b16 %v1656, %v1655
      %v1668 = vpack.c.b16 %v1658, %v1657
      %v1669 = vpack.c.b16 %v1660, %v1659
      %v1670 = vpack.c.b16 %v1662, %v1661
      %1679 = vmatprep.subr.bf16.mxu0 0
      %1680 = vmatpush1.bf16.msra.mxu0 %v1663
      %1681 = vmatprep.subr.bf16.mxu0 0
      %1682 = vmatpush1.bf16.msra.mxu0 %v1664
      %1683 = vmatprep.subr.bf16.mxu0 0
      %1684 = vmatpush1.bf16.msra.mxu0 %v1665
      %1685 = vmatprep.subr.bf16.mxu0 0
      %1686 = vmatpush1.bf16.msra.mxu0 %v1666
      %1687 = vmatprep.subr.bf16.mxu0 0
      %1688 = vmatpush1.bf16.msra.mxu0 %v1667
      %1689 = vmatprep.subr.bf16.mxu0 0
      %1690 = vmatpush1.bf16.msra.mxu0 %v1668
      %1691 = vmatprep.subr.bf16.mxu0 0
      %1692 = vmatpush1.bf16.msra.mxu0 %v1669
      %1693 = vmatprep.subr.bf16.mxu0 0
      %1694 = vmatpush1.bf16.msra.mxu0 %v1670
      %1695 = vmatprep.subr.bf16.mxu0 0
      %1696 = vmatpush1.bf16.msra.mxu0 0
      %1697 = vmatprep.subr.bf16.mxu0 0
      %1698 = vmatpush1.bf16.msra.mxu0 0
      %1699 = vmatprep.subr.bf16.mxu0 0
      %1700 = vmatpush1.bf16.msra.mxu0 0
      %1701 = vmatprep.subr.bf16.mxu0 0
      %1702 = vmatpush1.bf16.msra.mxu0 0
      %1703 = vmatprep.subr.bf16.mxu0 0
      %1704 = vmatpush1.bf16.msra.mxu0 0
      %1705 = vmatprep.subr.bf16.mxu0 0
      %1706 = vmatpush1.bf16.msra.mxu0 0
      %1707 = vmatprep.subr.bf16.mxu0 0
      %1708 = vmatpush1.bf16.msra.mxu0 0
      %1709 = vmatprep.subr.bf16.mxu0 0
      %1710 = vmatpush1.bf16.msra.mxu0 0
      %1711 = vmatprep.mubr.bf16.mxu0 0
      %1712 = vmatmul.mubr.bf16.gmra.mrb[0].mxu0 %v1623
      %v1713 = vpop.f32.mrb[0].mxu0
      %v1714 = vadd.f32 0.0, %v1713
      %v1715 = vpop.f32.mrb[0].mxu0
      %v1716 = vpop.f32.mrb[0].mxu0
      %v1717 = vadd.f32 0.0, %v1716
      %v1718 = vpop.f32.mrb[0].mxu0
      %1719 = vmatprep.mubr.bf16.mxu0 0
      %1720 = vmatmul.mubr.bf16.gmra.mrb[0].mxu0 %v1624
      %v1721 = vpop.f32.mrb[0].mxu0
      %v1722 = vadd.f32 0.0, %v1721
      %v1723 = vpop.f32.mrb[0].mxu0
      %v1724 = vpop.f32.mrb[0].mxu0
      %v1725 = vadd.f32 0.0, %v1724
      %v1726 = vpop.f32.mrb[0].mxu0
      %1727 = vmatprep.mubr.bf16.mxu0 0
      %1728 = vmatmul.mubr.bf16.gmra.mrb[0].mxu0 %v1625
      %v1729 = vpop.f32.mrb[0].mxu0
      %v1730 = vadd.f32 0.0, %v1729
      %v1731 = vpop.f32.mrb[0].mxu0
      %v1732 = vpop.f32.mrb[0].mxu0
      %v1733 = vadd.f32 0.0, %v1732
      %v1734 = vpop.f32.mrb[0].mxu0
      %1735 = vmatprep.mubr.bf16.mxu0 0
      %1736 = vmatmul.mubr.bf16.gmra.mrb[0].mxu0 %v1626
      %v1737 = vpop.f32.mrb[0].mxu0
      %v1738 = vadd.f32 0.0, %v1737
      %v1739 = vpop.f32.mrb[0].mxu0
      %v1740 = vpop.f32.mrb[0].mxu0
      %v1741 = vadd.f32 0.0, %v1740
      %v1742 = vpop.f32.mrb[0].mxu0
      %1743 = vdwg.mxu0
      %v1744 = vadd.f32 %v1575, %v1714
      %v1745 = vadd.f32 %v1576, %v1717
      %v1746 = vadd.f32 %v1577, %v1722
      %v1747 = vadd.f32 %v1578, %v1725
      %v1748 = vadd.f32 %v1579, %v1730
      %v1749 = vadd.f32 %v1580, %v1733
      %v1750 = vadd.f32 %v1581, %v1738
      %v1751 = vadd.f32 %v1582, %v1741
      %v1752 = vld [vmem:[%s223] sm:$0x1]
      %v1754 = vlaneseq
      %v1755 = vshrl.u32 %v1754, 7
      %v1756 = vsub.s32 0, %v1755
      %v1757 = vrot.slane %v1752, %v1756
      %v1759 = vadd.f32 %v1744, %v1757
      %v1760 = vadd.f32 %v1745, %v1757
      %v1761 = vadd.f32 %v1746, %v1757
      %v1762 = vadd.f32 %v1747, %v1757
      %v1763 = vadd.f32 %v1748, %v1757
      %v1764 = vadd.f32 %v1749, %v1757
      %v1765 = vadd.f32 %v1750, %v1757
      %v1766 = vadd.f32 %v1751, %v1757
      %v1767 = vmax.f32 %v1759, 0.0
      %v1768 = vmax.f32 %v1760, 0.0
      %v1769 = vmax.f32 %v1761, 0.0
      %v1770 = vmax.f32 %v1762, 0.0
      %v1771 = vmax.f32 %v1763, 0.0
      %v1772 = vmax.f32 %v1764, 0.0
      %v1773 = vmax.f32 %v1765, 0.0
      %v1774 = vmax.f32 %v1766, 0.0
      %v1775 = vpack.c.bf16 %v1768, %v1767
      %v1776 = vpack.c.bf16 %v1770, %v1769
      %v1777 = vpack.c.bf16 %v1772, %v1771
      %v1778 = vpack.c.bf16 %v1774, %v1773
      %v1783 = vunpack.c.l.b16 %v1775
      %v1784 = vunpack.c.h.b16 %v1775
      %v1785 = vunpack.c.l.b16 %v1776
      %v1786 = vunpack.c.h.b16 %v1776
      %v1787 = vunpack.c.l.b16 %v1777
      %v1788 = vunpack.c.h.b16 %v1777
      %v1789 = vunpack.c.l.b16 %v1778
      %v1790 = vunpack.c.h.b16 %v1778
      %v1791 = vpack.c.b16 %v1783, %v1783
      %v1792 = vpack.c.b16 %v1784, %v1784
      %v1793 = vpack.c.b16 %v1785, %v1785
      %v1794 = vpack.c.b16 %v1786, %v1786
      %v1795 = vpack.c.b16 %v1787, %v1787
      %v1796 = vpack.c.b16 %v1788, %v1788
      %v1797 = vpack.c.b16 %v1789, %v1789
      %v1798 = vpack.c.b16 %v1790, %v1790
      %1807 = vst [vmem:[%s232] sm:$0xf] %v1791
      %1808 = vst [vmem:[%s232 + $0x4] sm:$0xf] %v1792
      %1809 = vst [vmem:[%s232 + $0x8] sm:$0xf] %v1793
      %1810 = vst [vmem:[%s232 + $0xc] sm:$0xf] %v1794
      %1811 = vst [vmem:[%s232 + $0x10] sm:$0xf] %v1795
      %1812 = vst [vmem:[%s232 + $0x14] sm:$0xf] %v1796
      %1813 = vst [vmem:[%s232 + $0x18] sm:$0xf] %v1797
      %1814 = vst [vmem:[%s232 + $0x1c] sm:$0xf] %v1798
      %s1815 = sadd.s32 %s19, %s21
      %s1816 = smul.u32 8, %s1815
      %p1817 = scmp.lt.s32.totalorder %s1816, 15
      %s1818 = scalar_select %p1817, %s1816, 15
      %p1819 = scmp.lt.s32.totalorder %s20, 0
      %s1820 = scalar_select %p1819, %s20, 0
      %s1821 = sadd.s32 %s1820, %s1818
      %s1822 = smul.addr %s1821, 4
      %s1823 = scalar_lea.vmem %s3, %s1822
      // Predicated region
      $region33: #{masked_resblock_forward.2} parent=31 // pred_check
        %p1824 = pneg %p133
      $region34: #{masked_resblock_forward.2} parent=31 // pred_check_branch
        %1826 = sbr.rel (%p1824) target = $region36
      $region35: #{masked_resblock_forward.2} parent=31 // pred_region
        %s1827 = sadd.s32 %s19, %s21
        %s1828 = smul.u32 8, %s1827
      $region36: #{masked_resblock_forward.2} parent=31 // pred_fallthru
        _
    $region32: #{masked_resblock_forward.2} parent=5 // pred_fallthru
      _
    %p1829 = scmp.le.s32.totalorder 2, %s9
    // Predicated region
    $region37: #{masked_resblock_forward.2} parent=5 // pred_check
      %p1830 = pneg %p1829
    $region38: #{masked_resblock_forward.2} parent=5 // pred_check_branch
      %1832 = sbr.rel (%p1830) target = $region40
    $region39: #{masked_resblock_forward.2} parent=5 // pred_region
      %s1833 = ssub.s32 %s9, 2
      // Predicated region
      $region41: #{masked_resblock_forward.2} parent=39 // pred_check
        %p1834 = pneg %p139
      $region42: #{masked_resblock_forward.2} parent=39 // pred_check_branch
        %1836 = sbr.rel (%p1834) target = $region44
      $region43: #{masked_resblock_forward.2} parent=39 // pred_region
        %s1837 = sadd.s32 %s22, %s24
        %s1838 = smul.u32 8, %s1837
        %p1839 = scmp.lt.s32.totalorder %s1838, 15
        %s1840 = scalar_select %p1839, %s1838, 15
        %p1841 = scmp.lt.s32.totalorder %s23, 0
        %s1842 = scalar_select %p1841, %s23, 0
        %s1843 = sadd.s32 %s1842, %s1840
        %s1844 = smul.addr %s1843, 4
        %s1845 = scalar_lea.vmem %s3, %s1844
      $region44: #{masked_resblock_forward.2} parent=39 // pred_fallthru
        _
    $region40: #{masked_resblock_forward.2} parent=5 // pred_fallthru
      _
  $region6: #{masked_resblock_forward.2} parent=0 // loop_footer
    %s13 = sadd.s32 1, %s9
  $region7: #{masked_resblock_forward.2} parent=0 // loop_footer_branch
    %8 = sbr.rel target = $region3
  $region8: #{masked_resblock_forward.2} parent=0 // loop_exit
    _

// kernel: masked_resblock_forward.3
$region0: #{masked_resblock_forward.3}
  #allocation0 [shape = 'u32[]', space=smem, size = 0x4, offset = 0x4, fixed_abs, tag = 'smem constant byte address 0x4 - core index']
  #allocation1 [shape = 'u32[144,128]{1,0:T(1,128)}', space=vmem, size = 0x12000, scoped, tag = 'internal scratch']
  %s0 = inlined_call_operand.vmem [shape: bf16[2,10,1,8,384], index: 0, kind: input, shape index: {}]
  %s1 = inlined_call_operand.vmem [shape: bf16[1152,128], index: 1, kind: input, shape index: {}]
  %s2 = inlined_call_operand.vmem [shape: f32[1,128], index: 2, kind: input, shape index: {}]
  %s3 = inlined_call_operand.vmem [shape: bf16[2,9,2,8,384], index: 3, kind: input, shape index: {}]
  %s4 = inlined_call_operand.vmem [shape: bf16[128,128], index: 4, kind: input, shape index: {}]
  %s5 = inlined_call_operand.vmem [shape: f32[128,128], index: 5, kind: output, shape index: {}]
  %s6 = sld [smem:[#allocation0]]
  $region53: #{masked_resblock_forward.3} parent=0
    _
  %s8 = ssub.s32 1, %s6
  %s9 = scalar_select 0, %s8, %s6
  loop: start=0, step=1, limit=4
  $region2: #{masked_resblock_forward.3} parent=0 // loop_pre_header
    _
  $region3: #{masked_resblock_forward.3} parent=0 // loop_header
    %s11 = sphi 0, %s15
    %p12 = scmp.ge.s32.totalorder %s11, 4
    %s18 = sphi 0, %s37
    %s19 = sphi 0, %s33
    %s20 = sphi 0, %s29
    %s21 = sphi 0, %s18
    %s22 = sphi 0, %s19
    %s23 = sphi 0, %s20
    %s24 = sphi 0, %s21
    %s25 = sphi 0, %s22
    %s26 = sphi 0, %s23
    %s40 = sphi 0, %s42
    %s43 = sphi 0, %s40
    %s44 = sphi 0, %s43
    %s60 = sphi 0, %s44
    %s66 = sphi 0, %s68
    %s69 = sphi 0, %s66
    %s70 = sphi 0, %s69
    %s86 = sphi 0, %s70
    %s92 = sphi 0, %s94
    %s95 = sphi 0, %s92
    %s96 = sphi 0, %s95
    %s112 = sphi 0, %s96
    %s118 = sphi 0, %s120
    %s121 = sphi 0, %s118
    %s122 = sphi 0, %s121
    %s138 = sphi 0, %s122
    %s144 = sphi 0, %s146
    %s147 = sphi 0, %s144
    %s148 = sphi 0, %s147
    %s164 = sphi 0, %s148
    %s174 = sphi 0, %s176
    %s177 = sphi 0, %s174
    %s178 = sphi 0, %s177
    %s194 = sphi 0, %s178
  $region4: #{masked_resblock_forward.3} parent=0 // loop_header_branch
    %14 = sbr.rel (%p12) target = $region8
  $region5: #{masked_resblock_forward.3} parent=0 // loop_body
    %s16 = ssub.s32 %s11, 1
    %s17 = ssub.s32 %s11, 2
    %s27 = sadd.s32 1, %s20
    %p28 = scmp.ge.s32.totalorder %s27, 1
    %s29 = scalar_select %p28, 0, %s27
    %s30 = sadd.s32 1, %s19
    %s31 = scalar_select %p28, %s30, %s19
    %p32 = scmp.ge.s32.totalorder %s31, 1
    %s33 = scalar_select %p32, 0, %s31
    %s34 = sadd.s32 1, %s18
    %s35 = scalar_select %p32, %s34, %s18
    %p36 = scmp.ge.s32.totalorder %s35, 2
    %s37 = scalar_select %p36, 0, %s35
    %s38 = ssub.s32 %s18, %s37
    %p39 = scmp.eq.s32.totalorder %s38, 0
    %s41 = sadd.s32 %s40, 1
    %s42 = scalar_select %p39, %s40, %s41
    %p45 = pneg %p39
    %p46 = scmp.eq.s32.totalorder %s11, 1
    %p47 = por %p45, %p46
    %p48 = scmp.ne.s32.totalorder %s40, %s43
    %p49 = scmp.eq.s32.totalorder %s11, 0
    %p50 = por %p48, %p49
    %p51 = scmp.ne.s32.totalorder %s40, %s43
    %p52 = scmp.eq.s32.totalorder %s16, 1
    %p53 = por %p51, %p52
    %p54 = scmp.ne.s32.totalorder %s43, %s44
    %p55 = scmp.eq.s32.totalorder %s16, 0
    %p56 = por %p54, %p55
    %p57 = scmp.ne.s32.totalorder %s43, %s44
    %p58 = scmp.eq.s32.totalorder %s17, 1
    %p59 = por %p57, %p58
    %p61 = scmp.ne.s32.totalorder %s44, %s60
    %p62 = scmp.eq.s32.totalorder %s17, 0
    %p63 = por %p61, %p62
    %s64 = ssub.s32 %s19, %s33
    %p65 = scmp.eq.s32.totalorder %s64, 0
    %s67 = sadd.s32 %s66, 1
    %s68 = scalar_select %p65, %s66, %s67
    %p71 = pneg %p65
    %p72 = scmp.eq.s32.totalorder %s11, 1
    %p73 = por %p71, %p72
    %p74 = scmp.ne.s32.totalorder %s66, %s69
    %p75 = scmp.eq.s32.totalorder %s11, 0
    %p76 = por %p74, %p75
    %p77 = scmp.ne.s32.totalorder %s66, %s69
    %p78 = scmp.eq.s32.totalorder %s16, 1
    %p79 = por %p77, %p78
    %p80 = scmp.ne.s32.totalorder %s69, %s70
    %p81 = scmp.eq.s32.totalorder %s16, 0
    %p82 = por %p80, %p81
    %p83 = scmp.ne.s32.totalorder %s69, %s70
    %p84 = scmp.eq.s32.totalorder %s17, 1
    %p85 = por %p83, %p84
    %p87 = scmp.ne.s32.totalorder %s70, %s86
    %p88 = scmp.eq.s32.totalorder %s17, 0
    %p89 = por %p87, %p88
    %s90 = ssub.s32 %s19, %s33
    %p91 = scmp.eq.s32.totalorder %s90, 0
    %s93 = sadd.s32 %s92, 1
    %s94 = scalar_select %p91, %s92, %s93
    %p97 = pneg %p91
    %p98 = scmp.eq.s32.totalorder %s11, 1
    %p99 = por %p97, %p98
    %p100 = scmp.ne.s32.totalorder %s92, %s95
    %p101 = scmp.eq.s32.totalorder %s11, 0
    %p102 = por %p100, %p101
    %p103 = scmp.ne.s32.totalorder %s92, %s95
    %p104 = scmp.eq.s32.totalorder %s16, 1
    %p105 = por %p103, %p104
    %p106 = scmp.ne.s32.totalorder %s95, %s96
    %p107 = scmp.eq.s32.totalorder %s16, 0
    %p108 = por %p106, %p107
    %p109 = scmp.ne.s32.totalorder %s95, %s96
    %p110 = scmp.eq.s32.totalorder %s17, 1
    %p111 = por %p109, %p110
    %p113 = scmp.ne.s32.totalorder %s96, %s112
    %p114 = scmp.eq.s32.totalorder %s17, 0
    %p115 = por %p113, %p114
    %s116 = ssub.s32 %s18, %s37
    %p117 = scmp.eq.s32.totalorder %s116, 0
    %s119 = sadd.s32 %s118, 1
    %s120 = scalar_select %p117, %s118, %s119
    %p123 = pneg %p117
    %p124 = scmp.eq.s32.totalorder %s11, 1
    %p125 = por %p123, %p124
    %p126 = scmp.ne.s32.totalorder %s118, %s121
    %p127 = scmp.eq.s32.totalorder %s11, 0
    %p128 = por %p126, %p127
    %p129 = scmp.ne.s32.totalorder %s118, %s121
    %p130 = scmp.eq.s32.totalorder %s16, 1
    %p131 = por %p129, %p130
    %p132 = scmp.ne.s32.totalorder %s121, %s122
    %p133 = scmp.eq.s32.totalorder %s16, 0
    %p134 = por %p132, %p133
    %p135 = scmp.ne.s32.totalorder %s121, %s122
    %p136 = scmp.eq.s32.totalorder %s17, 1
    %p137 = por %p135, %p136
    %p139 = scmp.ne.s32.totalorder %s122, %s138
    %p140 = scmp.eq.s32.totalorder %s17, 0
    %p141 = por %p139, %p140
    %s142 = ssub.s32 %s19, %s33
    %p143 = scmp.eq.s32.totalorder %s142, 0
    %s145 = sadd.s32 %s144, 1
    %s146 = scalar_select %p143, %s144, %s145
    %p149 = pneg %p143
    %p150 = scmp.eq.s32.totalorder %s11, 1
    %p151 = por %p149, %p150
    %p152 = scmp.ne.s32.totalorder %s144, %s147
    %p153 = scmp.eq.s32.totalorder %s11, 0
    %p154 = por %p152, %p153
    %p155 = scmp.ne.s32.totalorder %s144, %s147
    %p156 = scmp.eq.s32.totalorder %s16, 1
    %p157 = por %p155, %p156
    %p158 = scmp.ne.s32.totalorder %s147, %s148
    %p159 = scmp.eq.s32.totalorder %s16, 0
    %p160 = por %p158, %p159
    %p161 = scmp.ne.s32.totalorder %s147, %s148
    %p162 = scmp.eq.s32.totalorder %s17, 1
    %p163 = por %p161, %p162
    %p165 = scmp.ne.s32.totalorder %s148, %s164
    %p166 = scmp.eq.s32.totalorder %s17, 0
    %p167 = por %p165, %p166
    %s168 = sadd.s32 %s18, %s20
    %s169 = sadd.s32 %s37, %s29
    %s170 = ssub.s32 %s168, %s169
    %s171 = ssub.s32 %s19, %s33
    %s172 = sor.u32 %s170, %s171
    %p173 = scmp.eq.s32.totalorder %s172, 0
    %s175 = sadd.s32 %s174, 1
    %s176 = scalar_select %p173, %s174, %s175
    %p179 = pneg %p173
    %p180 = scmp.eq.s32.totalorder %s11, 1
    %p181 = por %p179, %p180
    %p182 = scmp.ne.s32.totalorder %s174, %s177
    %p183 = scmp.eq.s32.totalorder %s11, 0
    %p184 = por %p182, %p183
    %p185 = scmp.ne.s32.totalorder %s174, %s177
    %p186 = scmp.eq.s32.totalorder %s16, 1
    %p187 = por %p185, %p186
    %p188 = scmp.ne.s32.totalorder %s177, %s178
    %p189 = scmp.eq.s32.totalorder %s16, 0
    %p190 = por %p188, %p189
    %p191 = scmp.ne.s32.totalorder %s177, %s178
    %p192 = scmp.eq.s32.totalorder %s17, 1
    %p193 = por %p191, %p192
    %p195 = scmp.ne.s32.totalorder %s178, %s194
    %p196 = scmp.eq.s32.totalorder %s17, 0
    %p197 = por %p195, %p196
    %p198 = scmp.le.s32.totalorder 1, %s11
    %p199 = scmp.lt.s32.totalorder %s11, 3
    %p200 = pnand %p198, %p199
    %p201 = pneg %p200
    // Predicated region
    $region9: #{masked_resblock_forward.3} parent=5 // pred_check
      _
    $region10: #{masked_resblock_forward.3} parent=5 // pred_check_branch
      %203 = sbr.rel (%p200) target = $region12
    $region11: #{masked_resblock_forward.3} parent=5 // pred_region
      %s204 = ssub.s32 %s11, 1
      // Predicated region
      $region13: #{masked_resblock_forward.3} parent=11 // pred_check
        %p205 = pneg %p82
      $region14: #{masked_resblock_forward.3} parent=11 // pred_check_branch
        %207 = sbr.rel (%p205) target = $region16
      $region15: #{masked_resblock_forward.3} parent=11 // pred_region
        %p208 = scmp.lt.s32.totalorder %s22, 0
        %s209 = scalar_select %p208, %s22, 0
        %s210 = smul.addr %s209, 4
        %s211 = scalar_lea.vmem %s1, %s210
      $region16: #{masked_resblock_forward.3} parent=11 // pred_fallthru
        _
      // Predicated region
      $region17: #{masked_resblock_forward.3} parent=11 // pred_check
        %p212 = pneg %p108
      $region18: #{masked_resblock_forward.3} parent=11 // pred_check_branch
        %214 = sbr.rel (%p212) target = $region20
      $region19: #{masked_resblock_forward.3} parent=11 // pred_region
        %p215 = scmp.lt.s32.totalorder %s22, 0
        %s216 = scalar_select %p215, %s22, 0
        %s217 = scalar_lea.vmem %s2, %s216
      $region20: #{masked_resblock_forward.3} parent=11 // pred_fallthru
        _
      // Predicated region
      $region21: #{masked_resblock_forward.3} parent=11 // pred_check
        %p218 = pneg %p160
      $region22: #{masked_resblock_forward.3} parent=11 // pred_check_branch
        %220 = sbr.rel (%p218) target = $region24
      $region23: #{masked_resblock_forward.3} parent=11 // pred_region
        %p221 = scmp.lt.s32.totalorder %s22, 0
        %s222 = scalar_select %p221, %s22, 0
        %s223 = smul.addr %s222, 4
        %s224 = scalar_lea.vmem %s4, %s223
      $region24: #{masked_resblock_forward.3} parent=11 // pred_fallthru
        _
    $region12: #{masked_resblock_forward.3} parent=5 // pred_fallthru
      _
    %p225 = scmp.lt.s32.totalorder %s11, 2
    // Predicated region
    $region25: #{masked_resblock_forward.3} parent=5 // pred_check
      %p226 = pneg %p225
    $region26: #{masked_resblock_forward.3} parent=5 // pred_check_branch
      %228 = sbr.rel (%p226) target = $region28
    $region27: #{masked_resblock_forward.3} parent=5 // pred_region
      // Predicated region
      $region29: #{masked_resblock_forward.3} parent=27 // pred_check
        %p229 = pneg %p50
      $region30: #{masked_resblock_forward.3} parent=27 // pred_check_branch
        %231 = sbr.rel (%p229) target = $region32
      $region31: #{masked_resblock_forward.3} parent=27 // pred_region
        %p232 = scmp.lt.s32.totalorder %s18, 1
        %s233 = scalar_select %p232, %s18, 1
        %s234 = smul.addr %s233, 30
        %s235 = smul.addr %s234, 4
        %s236 = scalar_lea.vmem %s0, %s235
      $region32: #{masked_resblock_forward.3} parent=27 // pred_fallthru
        _
      // Predicated region
      $region33: #{masked_resblock_forward.3} parent=27 // pred_check
        %p237 = pneg %p128
      $region34: #{masked_resblock_forward.3} parent=27 // pred_check_branch
        %239 = sbr.rel (%p237) target = $region36
      $region35: #{masked_resblock_forward.3} parent=27 // pred_region
        %p240 = scmp.lt.s32.totalorder %s18, 1
        %s241 = scalar_select %p240, %s18, 1
        %s242 = smul.addr %s241, 54
        %s243 = smul.addr %s242, 4
        %s244 = scalar_lea.vmem %s3, %s243
      $region36: #{masked_resblock_forward.3} parent=27 // pred_fallthru
        _
    $region28: #{masked_resblock_forward.3} parent=5 // pred_fallthru
      _
    %p245 = scmp.le.s32.totalorder 1, %s11
    %p246 = scmp.lt.s32.totalorder %s11, 3
    %p247 = pnand %p245, %p246
    %p248 = pneg %p247
    // Predicated region
    $region37: #{masked_resblock_forward.3} parent=5 // pred_check
      _
    $region38: #{masked_resblock_forward.3} parent=5 // pred_check_branch
      %250 = sbr.rel (%p247) target = $region40
    $region39: #{masked_resblock_forward.3} parent=5 // pred_region
      %s251 = ssub.s32 %s11, 1
      %p252 = scmp.lt.s32.totalorder %s21, 1
      %s253 = scalar_select %p252, %s21, 1
      %s254 = smul.addr %s253, 30
      %s255 = smul.addr %s254, 4
      %s256 = scalar_lea.vmem %s0, %s255
      %p257 = pneg %p56
      %p258 = pneg %p53
      %p259 = scmp.lt.s32.totalorder %s22, 0
      %s260 = scalar_select %p259, %s22, 0
      %s261 = smul.addr %s260, 4
      %s262 = scalar_lea.vmem %s1, %s261
      %p263 = pneg %p82
      %p264 = pneg %p79
      %p265 = scmp.lt.s32.totalorder %s22, 0
      %s266 = scalar_select %p265, %s22, 0
      %s267 = scalar_lea.vmem %s2, %s266
      %p268 = pneg %p108
      %p269 = pneg %p105
      %p270 = scmp.lt.s32.totalorder %s21, 1
      %s271 = scalar_select %p270, %s21, 1
      %s272 = smul.addr %s271, 54
      %s273 = smul.addr %s272, 4
      %s274 = scalar_lea.vmem %s3, %s273
      %p275 = pneg %p134
      %p276 = pneg %p131
      %p277 = scmp.lt.s32.totalorder %s22, 0
      %s278 = scalar_select %p277, %s22, 0
      %s279 = smul.addr %s278, 4
      %s280 = scalar_lea.vmem %s4, %s279
      %p281 = pneg %p160
      %p282 = pneg %p157
      %p283 = pneg %p190
      %p284 = pneg %p187
      %s285 = sadd.s32 %s21, %s23
      %s286 = smul.u32 8, %s285
      %p287 = scmp.lt.s32.totalorder %s286, 15
      %s288 = scalar_select %p287, %s286, 15
      %p289 = scmp.lt.s32.totalorder %s22, 0
      %s290 = scalar_select %p289, %s22, 0
      %s291 = sadd.s32 %s290, %s288
      %s292 = smul.addr %s291, 8
      %s293 = scalar_lea.vmem %s5, %s292
      %p294 = scmp.lt.s32.totalorder %s21, 1
      %s295 = scalar_select %p294, %s21, 1
      %s296 = smul.addr %s295, 30
      %s297 = smul.addr %s296, 4
      %s298 = scalar_lea.vmem %s0, %s297
      %p299 = scmp.lt.s32.totalorder %s22, 0
      %s300 = scalar_select %p299, %s22, 0
      %s301 = smul.addr %s300, 4
      %s302 = scalar_lea.vmem %s1, %s301
      %p303 = scmp.lt.s32.totalorder %s22, 0
      %s304 = scalar_select %p303, %s22, 0
      %s305 = scalar_lea.vmem %s2, %s304
      %p306 = scmp.lt.s32.totalorder %s21, 1
      %s307 = scalar_select %p306, %s21, 1
      %s308 = smul.addr %s307, 54
      %s309 = smul.addr %s308, 4
      %s310 = scalar_lea.vmem %s3, %s309
      %p311 = scmp.lt.s32.totalorder %s22, 0
      %s312 = scalar_select %p311, %s22, 0
      %s313 = smul.addr %s312, 4
      %s314 = scalar_lea.vmem %s4, %s313
      %s315 = sadd.s32 %s21, %s23
      %s316 = smul.u32 8, %s315
      %p317 = scmp.lt.s32.totalorder %s316, 15
      %s318 = scalar_select %p317, %s316, 15
      %p319 = scmp.lt.s32.totalorder %s22, 0
      %s320 = scalar_select %p319, %s22, 0
      %s321 = sadd.s32 %s320, %s318
      %s322 = smul.addr %s321, 8
      %s323 = scalar_lea.vmem %s5, %s322
      %s324 = sadd.s32 %s21, %s23
      %s325 = smul.u32 8, %s324
      %s327 = smul.u32 %s23, 8
      %s328 = smul.u32 %s327, 3
      %s329 = smul.addr %s328, 4
      %s330 = scalar_lea.vmem %s298, %s329
      %v331 = vld [vmem:[%s330] sm:$0xf]
      %v332 = vld [vmem:[%s330 + $0xc] sm:$0xf]
      %v333 = vld [vmem:[%s330 + $0x18] sm:$0xf]
      %v334 = vld [vmem:[%s330 + $0x24] sm:$0xf]
      %v335 = vld [vmem:[%s330 + $0x30] sm:$0xf]
      %v336 = vld [vmem:[%s330 + $0x3c] sm:$0xf]
      %v337 = vld [vmem:[%s330 + $0x48] sm:$0xf]
      %v338 = vld [vmem:[%s330 + $0x54] sm:$0xf]
      %v339 = vld [vmem:[%s302] sm:$0xf]
      %v340 = vld [vmem:[%s302 + $0x4] sm:$0xf]
      %v341 = vld [vmem:[%s302 + $0x8] sm:$0xf]
      %v342 = vld [vmem:[%s302 + $0xc] sm:$0xf]
      %v343 = vld [vmem:[%s302 + $0x10] sm:$0xf]
      %v344 = vld [vmem:[%s302 + $0x14] sm:$0xf]
      %v345 = vld [vmem:[%s302 + $0x18] sm:$0xf]
      %v346 = vld [vmem:[%s302 + $0x1c] sm:$0xf]
      %v347 = vld [vmem:[%s302 + $0x20] sm:$0xf]
      %v348 = vld [vmem:[%s302 + $0x24] sm:$0xf]
      %v349 = vld [vmem:[%s302 + $0x28] sm:$0xf]
      %v350 = vld [vmem:[%s302 + $0x2c] sm:$0xf]
      %v351 = vld [vmem:[%s302 + $0x30] sm:$0xf]
      %v352 = vld [vmem:[%s302 + $0x34] sm:$0xf]
      %v353 = vld [vmem:[%s302 + $0x38] sm:$0xf]
      %v354 = vld [vmem:[%s302 + $0x3c] sm:$0xf]
      %v355 = vld [vmem:[%s330 + $0x4] sm:$0xf]
      %v356 = vld [vmem:[%s330 + $0x10] sm:$0xf]
      %v357 = vld [vmem:[%s330 + $0x1c] sm:$0xf]
      %v358 = vld [vmem:[%s330 + $0x28] sm:$0xf]
      %v359 = vld [vmem:[%s330 + $0x34] sm:$0xf]
      %v360 = vld [vmem:[%s330 + $0x40] sm:$0xf]
      %v361 = vld [vmem:[%s330 + $0x4c] sm:$0xf]
      %v362 = vld [vmem:[%s330 + $0x58] sm:$0xf]
      %v363 = vld [vmem:[%s302 + $0x40] sm:$0xf]
      %v364 = vld [vmem:[%s302 + $0x44] sm:$0xf]
      %v365 = vld [vmem:[%s302 + $0x48] sm:$0xf]
      %v366 = vld [vmem:[%s302 + $0x4c] sm:$0xf]
      %v367 = vld [vmem:[%s302 + $0x50] sm:$0xf]
      %v368 = vld [vmem:[%s302 + $0x54] sm:$0xf]
      %v369 = vld [vmem:[%s302 + $0x58] sm:$0xf]
      %v370 = vld [vmem:[%s302 + $0x5c] sm:$0xf]
      %v371 = vld [vmem:[%s302 + $0x60] sm:$0xf]
      %v372 = vld [vmem:[%s302 + $0x64] sm:$0xf]
      %v373 = vld [vmem:[%s302 + $0x68] sm:$0xf]
      %v374 = vld [vmem:[%s302 + $0x6c] sm:$0xf]
      %v375 = vld [vmem:[%s302 + $0x70] sm:$0xf]
      %v376 = vld [vmem:[%s302 + $0x74] sm:$0xf]
      %v377 = vld [vmem:[%s302 + $0x78] sm:$0xf]
      %v378 = vld [vmem:[%s302 + $0x7c] sm:$0xf]
      %v387 = vunpack.c.l.b16 %v355
      %v388 = vunpack.c.l.b16 %v356
      %v389 = vunpack.c.l.b16 %v357
      %v390 = vunpack.c.l.b16 %v358
      %v391 = vunpack.c.l.b16 %v359
      %v392 = vunpack.c.l.b16 %v360
      %v393 = vunpack.c.l.b16 %v361
      %v394 = vunpack.c.l.b16 %v362
      %v395 = vpack.c.b16 %v388, %v387
      %v396 = vpack.c.b16 %v390, %v389
      %v397 = vpack.c.b16 %v392, %v391
      %v398 = vpack.c.b16 %v394, %v393
      %v419 = vunpack.c.l.b16 %v363
      %v420 = vunpack.c.l.b16 %v364
      %v421 = vunpack.c.l.b16 %v365
      %v422 = vunpack.c.l.b16 %v366
      %v423 = vunpack.c.l.b16 %v367
      %v424 = vunpack.c.l.b16 %v368
      %v425 = vunpack.c.l.b16 %v369
      %v426 = vunpack.c.l.b16 %v370
      %v427 = vunpack.c.l.b16 %v371
      %v428 = vunpack.c.l.b16 %v372
      %v429 = vunpack.c.l.b16 %v373
      %v430 = vunpack.c.l.b16 %v374
      %v431 = vunpack.c.l.b16 %v375
      %v432 = vunpack.c.l.b16 %v376
      %v433 = vunpack.c.l.b16 %v377
      %v434 = vunpack.c.l.b16 %v378
      %v435 = vpack.c.b16 %v420, %v419
      %v436 = vpack.c.b16 %v422, %v421
      %v437 = vpack.c.b16 %v424, %v423
      %v438 = vpack.c.b16 %v426, %v425
      %v439 = vpack.c.b16 %v428, %v427
      %v440 = vpack.c.b16 %v430, %v429
      %v441 = vpack.c.b16 %v432, %v431
      %v442 = vpack.c.b16 %v434, %v433
      %451 = vmatprep.subr.bf16.mxu0 0
      %452 = vmatpush1.bf16.msra.mxu0 %v435
      %453 = vmatprep.subr.bf16.mxu0 0
      %454 = vmatpush1.bf16.msra.mxu0 %v436
      %455 = vmatprep.subr.bf16.mxu0 0
      %456 = vmatpush1.bf16.msra.mxu0 %v437
      %457 = vmatprep.subr.bf16.mxu0 0
      %458 = vmatpush1.bf16.msra.mxu0 %v438
      %459 = vmatprep.subr.bf16.mxu0 0
      %460 = vmatpush1.bf16.msra.mxu0 %v439
      %461 = vmatprep.subr.bf16.mxu0 0
      %462 = vmatpush1.bf16.msra.mxu0 %v440
      %463 = vmatprep.subr.bf16.mxu0 0
      %464 = vmatpush1.bf16.msra.mxu0 %v441
      %465 = vmatprep.subr.bf16.mxu0 0
      %466 = vmatpush1.bf16.msra.mxu0 %v442
      %467 = vmatprep.subr.bf16.mxu0 0
      %468 = vmatpush1.bf16.msra.mxu0 0
      %469 = vmatprep.subr.bf16.mxu0 0
      %470 = vmatpush1.bf16.msra.mxu0 0
      %471 = vmatprep.subr.bf16.mxu0 0
      %472 = vmatpush1.bf16.msra.mxu0 0
      %473 = vmatprep.subr.bf16.mxu0 0
      %474 = vmatpush1.bf16.msra.mxu0 0
      %475 = vmatprep.subr.bf16.mxu0 0
      %476 = vmatpush1.bf16.msra.mxu0 0
      %477 = vmatprep.subr.bf16.mxu0 0
      %478 = vmatpush1.bf16.msra.mxu0 0
      %479 = vmatprep.subr.bf16.mxu0 0
      %480 = vmatpush1.bf16.msra.mxu0 0
      %481 = vmatprep.subr.bf16.mxu0 0
      %482 = vmatpush1.bf16.msra.mxu0 0
      %483 = vmatprep.mubr.bf16.mxu0 0
      %484 = vmatmul.mubr.bf16.gmra.mrb[0].mxu0 %v395
      %v485 = vpop.f32.mrb[0].mxu0
      %v486 = vadd.f32 0.0, %v485
      %v487 = vpop.f32.mrb[0].mxu0
      %v488 = vpop.f32.mrb[0].mxu0
      %v489 = vadd.f32 0.0, %v488
      %v490 = vpop.f32.mrb[0].mxu0
      %491 = vmatprep.mubr.bf16.mxu0 0
      %492 = vmatmul.mubr.bf16.gmra.mrb[0].mxu0 %v396
      %v493 = vpop.f32.mrb[0].mxu0
      %v494 = vadd.f32 0.0, %v493
      %v495 = vpop.f32.mrb[0].mxu0
      %v496 = vpop.f32.mrb[0].mxu0
      %v497 = vadd.f32 0.0, %v496
      %v498 = vpop.f32.mrb[0].mxu0
      %499 = vmatprep.mubr.bf16.mxu0 0
      %500 = vmatmul.mubr.bf16.gmra.mrb[0].mxu0 %v397
      %v501 = vpop.f32.mrb[0].mxu0
      %v502 = vadd.f32 0.0, %v501
      %v503 = vpop.f32.mrb[0].mxu0
      %v504 = vpop.f32.mrb[0].mxu0
      %v505 = vadd.f32 0.0, %v504
      %v506 = vpop.f32.mrb[0].mxu0
      %507 = vmatprep.mubr.bf16.mxu0 0
      %508 = vmatmul.mubr.bf16.gmra.mrb[0].mxu0 %v398
      %v509 = vpop.f32.mrb[0].mxu0
      %v510 = vadd.f32 0.0, %v509
      %v511 = vpop.f32.mrb[0].mxu0
      %v512 = vpop.f32.mrb[0].mxu0
      %v513 = vadd.f32 0.0, %v512
      %v514 = vpop.f32.mrb[0].mxu0
      %515 = vdwg.mxu0
      %v524 = vunpack.c.l.b16 %v331
      %v525 = vunpack.c.l.b16 %v332
      %v526 = vunpack.c.l.b16 %v333
      %v527 = vunpack.c.l.b16 %v334
      %v528 = vunpack.c.l.b16 %v335
      %v529 = vunpack.c.l.b16 %v336
      %v530 = vunpack.c.l.b16 %v337
      %v531 = vunpack.c.l.b16 %v338
      %v532 = vpack.c.b16 %v525, %v524
      %v533 = vpack.c.b16 %v527, %v526
      %v534 = vpack.c.b16 %v529, %v528
      %v535 = vpack.c.b16 %v531, %v530
      %v556 = vunpack.c.l.b16 %v339
      %v557 = vunpack.c.l.b16 %v340
      %v558 = vunpack.c.l.b16 %v341
      %v559 = vunpack.c.l.b16 %v342
      %v560 = vunpack.c.l.b16 %v343
      %v561 = vunpack.c.l.b16 %v344
      %v562 = vunpack.c.l.b16 %v345
      %v563 = vunpack.c.l.b16 %v346
      %v564 = vunpack.c.l.b16 %v347
      %v565 = vunpack.c.l.b16 %v348
      %v566 = vunpack.c.l.b16 %v349
      %v567 = vunpack.c.l.b16 %v350
      %v568 = vunpack.c.l.b16 %v351
      %v569 = vunpack.c.l.b16 %v352
      %v570 = vunpack.c.l.b16 %v353
      %v571 = vunpack.c.l.b16 %v354
      %v572 = vpack.c.b16 %v557, %v556
      %v573 = vpack.c.b16 %v559, %v558
      %v574 = vpack.c.b16 %v561, %v560
      %v575 = vpack.c.b16 %v563, %v562
      %v576 = vpack.c.b16 %v565, %v564
      %v577 = vpack.c.b16 %v567, %v566
      %v578 = vpack.c.b16 %v569, %v568
      %v579 = vpack.c.b16 %v571, %v570
      %588 = vmatprep.subr.bf16.mxu0 0
      %589 = vmatpush1.bf16.msra.mxu0 %v572
      %590 = vmatprep.subr.bf16.mxu0 0
      %591 = vmatpush1.bf16.msra.mxu0 %v573
      %592 = vmatprep.subr.bf16.mxu0 0
      %593 = vmatpush1.bf16.msra.mxu0 %v574
      %594 = vmatprep.subr.bf16.mxu0 0
      %595 = vmatpush1.bf16.msra.mxu0 %v575
      %596 = vmatprep.subr.bf16.mxu0 0
      %597 = vmatpush1.bf16.msra.mxu0 %v576
      %598 = vmatprep.subr.bf16.mxu0 0
      %599 = vmatpush1.bf16.msra.mxu0 %v577
      %600 = vmatprep.subr.bf16.mxu0 0
      %601 = vmatpush1.bf16.msra.mxu0 %v578
      %602 = vmatprep.subr.bf16.mxu0 0
      %603 = vmatpush1.bf16.msra.mxu0 %v579
      %604 = vmatprep.subr.bf16.mxu0 0
      %605 = vmatpush1.bf16.msra.mxu0 0
      %606 = vmatprep.subr.bf16.mxu0 0
      %607 = vmatpush1.bf16.msra.mxu0 0
      %608 = vmatprep.subr.bf16.mxu0 0
      %609 = vmatpush1.bf16.msra.mxu0 0
      %610 = vmatprep.subr.bf16.mxu0 0
      %611 = vmatpush1.bf16.msra.mxu0 0
      %612 = vmatprep.subr.bf16.mxu0 0
      %613 = vmatpush1.bf16.msra.mxu0 0
      %614 = vmatprep.subr.bf16.mxu0 0
      %615 = vmatpush1.bf16.msra.mxu0 0
      %616 = vmatprep.subr.bf16.mxu0 0
      %617 = vmatpush1.bf16.msra.mxu0 0
      %618 = vmatprep.subr.bf16.mxu0 0
      %619 = vmatpush1.bf16.msra.mxu0 0
      %620 = vmatprep.mubr.bf16.mxu0 0
      %621 = vmatmul.mubr.bf16.gmra.mrb[0].mxu0 %v532
      %v622 = vpop.f32.mrb[0].mxu0
      %v623 = vadd.f32 %v486, %v622
      %v624 = vpop.f32.mrb[0].mxu0
      %v625 = vpop.f32.mrb[0].mxu0
      %v626 = vadd.f32 %v489, %v625
      %v627 = vpop.f32.mrb[0].mxu0
      %628 = vmatprep.mubr.bf16.mxu0 0
      %629 = vmatmul.mubr.bf16.gmra.mrb[0].mxu0 %v533
      %v630 = vpop.f32.mrb[0].mxu0
      %v631 = vadd.f32 %v494, %v630
      %v632 = vpop.f32.mrb[0].mxu0
      %v633 = vpop.f32.mrb[0].mxu0
      %v634 = vadd.f32 %v497, %v633
      %v635 = vpop.f32.mrb[0].mxu0
      %636 = vmatprep.mubr.bf16.mxu0 0
      %637 = vmatmul.mubr.bf16.gmra.mrb[0].mxu0 %v534
      %v638 = vpop.f32.mrb[0].mxu0
      %v639 = vadd.f32 %v502, %v638
      %v640 = vpop.f32.mrb[0].mxu0
      %v641 = vpop.f32.mrb[0].mxu0
      %v642 = vadd.f32 %v505, %v641
      %v643 = vpop.f32.mrb[0].mxu0
      %644 = vmatprep.mubr.bf16.mxu0 0
      %645 = vmatmul.mubr.bf16.gmra.mrb[0].mxu0 %v535
      %v646 = vpop.f32.mrb[0].mxu0
      %v647 = vadd.f32 %v510, %v646
      %v648 = vpop.f32.mrb[0].mxu0
      %v649 = vpop.f32.mrb[0].mxu0
      %v650 = vadd.f32 %v513, %v649
      %v651 = vpop.f32.mrb[0].mxu0
      %652 = vdwg.mxu0
      %v653 = vld [vmem:[%s330 + $0x8] sm:$0xf]
      %v654 = vld [vmem:[%s330 + $0x14] sm:$0xf]
      %v655 = vld [vmem:[%s330 + $0x20] sm:$0xf]
      %v656 = vld [vmem:[%s330 + $0x2c] sm:$0xf]
      %v657 = vld [vmem:[%s330 + $0x38] sm:$0xf]
      %v658 = vld [vmem:[%s330 + $0x44] sm:$0xf]
      %v659 = vld [vmem:[%s330 + $0x50] sm:$0xf]
      %v660 = vld [vmem:[%s330 + $0x5c] sm:$0xf]
      %v661 = vld [vmem:[%s302 + $0x80] sm:$0xf]
      %v662 = vld [vmem:[%s302 + $0x84] sm:$0xf]
      %v663 = vld [vmem:[%s302 + $0x88] sm:$0xf]
      %v664 = vld [vmem:[%s302 + $0x8c] sm:$0xf]
      %v665 = vld [vmem:[%s302 + $0x90] sm:$0xf]
      %v666 = vld [vmem:[%s302 + $0x94] sm:$0xf]
      %v667 = vld [vmem:[%s302 + $0x98] sm:$0xf]
      %v668 = vld [vmem:[%s302 + $0x9c] sm:$0xf]
      %v669 = vld [vmem:[%s302 + $0xa0] sm:$0xf]
      %v670 = vld [vmem:[%s302 + $0xa4] sm:$0xf]
      %v671 = vld [vmem:[%s302 + $0xa8] sm:$0xf]
      %v672 = vld [vmem:[%s302 + $0xac] sm:$0xf]
      %v673 = vld [vmem:[%s302 + $0xb0] sm:$0xf]
      %v674 = vld [vmem:[%s302 + $0xb4] sm:$0xf]
      %v675 = vld [vmem:[%s302 + $0xb8] sm:$0xf]
      %v676 = vld [vmem:[%s302 + $0xbc] sm:$0xf]
      %v685 = vunpack.c.l.b16 %v653
      %v686 = vunpack.c.l.b16 %v654
      %v687 = vunpack.c.l.b16 %v655
      %v688 = vunpack.c.l.b16 %v656
      %v689 = vunpack.c.l.b16 %v657
      %v690 = vunpack.c.l.b16 %v658
      %v691 = vunpack.c.l.b16 %v659
      %v692 = vunpack.c.l.b16 %v660
      %v693 = vpack.c.b16 %v686, %v685
      %v694 = vpack.c.b16 %v688, %v687
      %v695 = vpack.c.b16 %v690, %v689
      %v696 = vpack.c.b16 %v692, %v691
      %v717 = vunpack.c.l.b16 %v661
      %v718 = vunpack.c.l.b16 %v662
      %v719 = vunpack.c.l.b16 %v663
      %v720 = vunpack.c.l.b16 %v664
      %v721 = vunpack.c.l.b16 %v665
      %v722 = vunpack.c.l.b16 %v666
      %v723 = vunpack.c.l.b16 %v667
      %v724 = vunpack.c.l.b16 %v668
      %v725 = vunpack.c.l.b16 %v669
      %v726 = vunpack.c.l.b16 %v670
      %v727 = vunpack.c.l.b16 %v671
      %v728 = vunpack.c.l.b16 %v672
      %v729 = vunpack.c.l.b16 %v673
      %v730 = vunpack.c.l.b16 %v674
      %v731 = vunpack.c.l.b16 %v675
      %v732 = vunpack.c.l.b16 %v676
      %v733 = vpack.c.b16 %v718, %v717
      %v734 = vpack.c.b16 %v720, %v719
      %v735 = vpack.c.b16 %v722, %v721
      %v736 = vpack.c.b16 %v724, %v723
      %v737 = vpack.c.b16 %v726, %v725
      %v738 = vpack.c.b16 %v728, %v727
      %v739 = vpack.c.b16 %v730, %v729
      %v740 = vpack.c.b16 %v732, %v731
      %749 = vmatprep.subr.bf16.mxu0 0
      %750 = vmatpush1.bf16.msra.mxu0 %v733
      %751 = vmatprep.subr.bf16.mxu0 0
      %752 = vmatpush1.bf16.msra.mxu0 %v734
      %753 = vmatprep.subr.bf16.mxu0 0
      %754 = vmatpush1.bf16.msra.mxu0 %v735
      %755 = vmatprep.subr.bf16.mxu0 0
      %756 = vmatpush1.bf16.msra.mxu0 %v736
      %757 = vmatprep.subr.bf16.mxu0 0
      %758 = vmatpush1.bf16.msra.mxu0 %v737
      %759 = vmatprep.subr.bf16.mxu0 0
      %760 = vmatpush1.bf16.msra.mxu0 %v738
      %761 = vmatprep.subr.bf16.mxu0 0
      %762 = vmatpush1.bf16.msra.mxu0 %v739
      %763 = vmatprep.subr.bf16.mxu0 0
      %764 = vmatpush1.bf16.msra.mxu0 %v740
      %765 = vmatprep.subr.bf16.mxu0 0
      %766 = vmatpush1.bf16.msra.mxu0 0
      %767 = vmatprep.subr.bf16.mxu0 0
      %768 = vmatpush1.bf16.msra.mxu0 0
      %769 = vmatprep.subr.bf16.mxu0 0
      %770 = vmatpush1.bf16.msra.mxu0 0
      %771 = vmatprep.subr.bf16.mxu0 0
      %772 = vmatpush1.bf16.msra.mxu0 0
      %773 = vmatprep.subr.bf16.mxu0 0
      %774 = vmatpush1.bf16.msra.mxu0 0
      %775 = vmatprep.subr.bf16.mxu0 0
      %776 = vmatpush1.bf16.msra.mxu0 0
      %777 = vmatprep.subr.bf16.mxu0 0
      %778 = vmatpush1.bf16.msra.mxu0 0
      %779 = vmatprep.subr.bf16.mxu0 0
      %780 = vmatpush1.bf16.msra.mxu0 0
      %781 = vmatprep.mubr.bf16.mxu0 0
      %782 = vmatmul.mubr.bf16.gmra.mrb[0].mxu0 %v693
      %v783 = vpop.f32.mrb[0].mxu0
      %v784 = vadd.f32 0.0, %v783
      %v785 = vpop.f32.mrb[0].mxu0
      %v786 = vpop.f32.mrb[0].mxu0
      %v787 = vadd.f32 0.0, %v786
      %v788 = vpop.f32.mrb[0].mxu0
      %789 = vmatprep.mubr.bf16.mxu0 0
      %790 = vmatmul.mubr.bf16.gmra.mrb[0].mxu0 %v694
      %v791 = vpop.f32.mrb[0].mxu0
      %v792 = vadd.f32 0.0, %v791
      %v793 = vpop.f32.mrb[0].mxu0
      %v794 = vpop.f32.mrb[0].mxu0
      %v795 = vadd.f32 0.0, %v794
      %v796 = vpop.f32.mrb[0].mxu0
      %797 = vmatprep.mubr.bf16.mxu0 0
      %798 = vmatmul.mubr.bf16.gmra.mrb[0].mxu0 %v695
      %v799 = vpop.f32.mrb[0].mxu0
      %v800 = vadd.f32 0.0, %v799
      %v801 = vpop.f32.mrb[0].mxu0
      %v802 = vpop.f32.mrb[0].mxu0
      %v803 = vadd.f32 0.0, %v802
      %v804 = vpop.f32.mrb[0].mxu0
      %805 = vmatprep.mubr.bf16.mxu0 0
      %806 = vmatmul.mubr.bf16.gmra.mrb[0].mxu0 %v696
      %v807 = vpop.f32.mrb[0].mxu0
      %v808 = vadd.f32 0.0, %v807
      %v809 = vpop.f32.mrb[0].mxu0
      %v810 = vpop.f32.mrb[0].mxu0
      %v811 = vadd.f32 0.0, %v810
      %v812 = vpop.f32.mrb[0].mxu0
      %813 = vdwg.mxu0
      %v814 = vadd.f32 %v623, %v784
      %v815 = vadd.f32 %v626, %v787
      %v816 = vadd.f32 %v631, %v792
      %v817 = vadd.f32 %v634, %v795
      %v818 = vadd.f32 %v639, %v800
      %v819 = vadd.f32 %v642, %v803
      %v820 = vadd.f32 %v647, %v808
      %v821 = vadd.f32 %v650, %v811
      %s822 = sadd.s32 %s327, 1
      %s823 = smul.u32 %s822, 3
      %s824 = smul.addr %s823, 4
      %s825 = scalar_lea.vmem %s298, %s824
      %v826 = vld [vmem:[%s825] sm:$0xf]
      %v827 = vld [vmem:[%s825 + $0xc] sm:$0xf]
      %v828 = vld [vmem:[%s825 + $0x18] sm:$0xf]
      %v829 = vld [vmem:[%s825 + $0x24] sm:$0xf]
      %v830 = vld [vmem:[%s825 + $0x30] sm:$0xf]
      %v831 = vld [vmem:[%s825 + $0x3c] sm:$0xf]
      %v832 = vld [vmem:[%s825 + $0x48] sm:$0xf]
      %v833 = vld [vmem:[%s825 + $0x54] sm:$0xf]
      %v834 = vld [vmem:[%s302 + $0xc0] sm:$0xf]
      %v835 = vld [vmem:[%s302 + $0xc4] sm:$0xf]
      %v836 = vld [vmem:[%s302 + $0xc8] sm:$0xf]
      %v837 = vld [vmem:[%s302 + $0xcc] sm:$0xf]
      %v838 = vld [vmem:[%s302 + $0xd0] sm:$0xf]
      %v839 = vld [vmem:[%s302 + $0xd4] sm:$0xf]
      %v840 = vld [vmem:[%s302 + $0xd8] sm:$0xf]
      %v841 = vld [vmem:[%s302 + $0xdc] sm:$0xf]
      %v842 = vld [vmem:[%s302 + $0xe0] sm:$0xf]
      %v843 = vld [vmem:[%s302 + $0xe4] sm:$0xf]
      %v844 = vld [vmem:[%s302 + $0xe8] sm:$0xf]
      %v845 = vld [vmem:[%s302 + $0xec] sm:$0xf]
      %v846 = vld [vmem:[%s302 + $0xf0] sm:$0xf]
      %v847 = vld [vmem:[%s302 + $0xf4] sm:$0xf]
      %v848 = vld [vmem:[%s302 + $0xf8] sm:$0xf]
      %v849 = vld [vmem:[%s302 + $0xfc] sm:$0xf]
      %v858 = vunpack.c.l.b16 %v826
      %v859 = vunpack.c.l.b16 %v827
      %v860 = vunpack.c.l.b16 %v828
      %v861 = vunpack.c.l.b16 %v829
      %v862 = vunpack.c.l.b16 %v830
      %v863 = vunpack.c.l.b16 %v831
      %v864 = vunpack.c.l.b16 %v832
      %v865 = vunpack.c.l.b16 %v833
      %v866 = vpack.c.b16 %v859, %v858
      %v867 = vpack.c.b16 %v861, %v860
      %v868 = vpack.c.b16 %v863, %v862
      %v869 = vpack.c.b16 %v865, %v864
      %v890 = vunpack.c.l.b16 %v834
      %v891 = vunpack.c.l.b16 %v835
      %v892 = vunpack.c.l.b16 %v836
      %v893 = vunpack.c.l.b16 %v837
      %v894 = vunpack.c.l.b16 %v838
      %v895 = vunpack.c.l.b16 %v839
      %v896 = vunpack.c.l.b16 %v840
      %v897 = vunpack.c.l.b16 %v841
      %v898 = vunpack.c.l.b16 %v842
      %v899 = vunpack.c.l.b16 %v843
      %v900 = vunpack.c.l.b16 %v844
      %v901 = vunpack.c.l.b16 %v845
      %v902 = vunpack.c.l.b16 %v846
      %v903 = vunpack.c.l.b16 %v847
      %v904 = vunpack.c.l.b16 %v848
      %v905 = vunpack.c.l.b16 %v849
      %v906 = vpack.c.b16 %v891, %v890
      %v907 = vpack.c.b16 %v893, %v892
      %v908 = vpack.c.b16 %v895, %v894
      %v909 = vpack.c.b16 %v897, %v896
      %v910 = vpack.c.b16 %v899, %v898
      %v911 = vpack.c.b16 %v901, %v900
      %v912 = vpack.c.b16 %v903, %v902
      %v913 = vpack.c.b16 %v905, %v904
      %922 = vmatprep.subr.bf16.mxu0 0
      %923 = vmatpush1.bf16.msra.mxu0 %v906
      %924 = vmatprep.subr.bf16.mxu0 0
      %925 = vmatpush1.bf16.msra.mxu0 %v907
      %926 = vmatprep.subr.bf16.mxu0 0
      %927 = vmatpush1.bf16.msra.mxu0 %v908
      %928 = vmatprep.subr.bf16.mxu0 0
      %929 = vmatpush1.bf16.msra.mxu0 %v909
      %930 = vmatprep.subr.bf16.mxu0 0
      %931 = vmatpush1.bf16.msra.mxu0 %v910
      %932 = vmatprep.subr.bf16.mxu0 0
      %933 = vmatpush1.bf16.msra.mxu0 %v911
      %934 = vmatprep.subr.bf16.mxu0 0
      %935 = vmatpush1.bf16.msra.mxu0 %v912
      %936 = vmatprep.subr.bf16.mxu0 0
      %937 = vmatpush1.bf16.msra.mxu0 %v913
      %938 = vmatprep.subr.bf16.mxu0 0
      %939 = vmatpush1.bf16.msra.mxu0 0
      %940 = vmatprep.subr.bf16.mxu0 0
      %941 = vmatpush1.bf16.msra.mxu0 0
      %942 = vmatprep.subr.bf16.mxu0 0
      %943 = vmatpush1.bf16.msra.mxu0 0
      %944 = vmatprep.subr.bf16.mxu0 0
      %945 = vmatpush1.bf16.msra.mxu0 0
      %946 = vmatprep.subr.bf16.mxu0 0
      %947 = vmatpush1.bf16.msra.mxu0 0
      %948 = vmatprep.subr.bf16.mxu0 0
      %949 = vmatpush1.bf16.msra.mxu0 0
      %950 = vmatprep.subr.bf16.mxu0 0
      %951 = vmatpush1.bf16.msra.mxu0 0
      %952 = vmatprep.subr.bf16.mxu0 0
      %953 = vmatpush1.bf16.msra.mxu0 0
      %954 = vmatprep.mubr.bf16.mxu0 0
      %955 = vmatmul.mubr.bf16.gmra.mrb[0].mxu0 %v866
      %v956 = vpop.f32.mrb[0].mxu0
      %v957 = vadd.f32 0.0, %v956
      %v958 = vpop.f32.mrb[0].mxu0
      %v959 = vpop.f32.mrb[0].mxu0
      %v960 = vadd.f32 0.0, %v959
      %v961 = vpop.f32.mrb[0].mxu0
      %962 = vmatprep.mubr.bf16.mxu0 0
      %963 = vmatmul.mubr.bf16.gmra.mrb[0].mxu0 %v867
      %v964 = vpop.f32.mrb[0].mxu0
      %v965 = vadd.f32 0.0, %v964
      %v966 = vpop.f32.mrb[0].mxu0
      %v967 = vpop.f32.mrb[0].mxu0
      %v968 = vadd.f32 0.0, %v967
      %v969 = vpop.f32.mrb[0].mxu0
      %970 = vmatprep.mubr.bf16.mxu0 0
      %971 = vmatmul.mubr.bf16.gmra.mrb[0].mxu0 %v868
      %v972 = vpop.f32.mrb[0].mxu0
      %v973 = vadd.f32 0.0, %v972
      %v974 = vpop.f32.mrb[0].mxu0
      %v975 = vpop.f32.mrb[0].mxu0
      %v976 = vadd.f32 0.0, %v975
      %v977 = vpop.f32.mrb[0].mxu0
      %978 = vmatprep.mubr.bf16.mxu0 0
      %979 = vmatmul.mubr.bf16.gmra.mrb[0].mxu0 %v869
      %v980 = vpop.f32.mrb[0].mxu0
      %v981 = vadd.f32 0.0, %v980
      %v982 = vpop.f32.mrb[0].mxu0
      %v983 = vpop.f32.mrb[0].mxu0
      %v984 = vadd.f32 0.0, %v983
      %v985 = vpop.f32.mrb[0].mxu0
      %986 = vdwg.mxu0
      %v987 = vadd.f32 %v814, %v957
      %v988 = vadd.f32 %v815, %v960
      %v989 = vadd.f32 %v816, %v965
      %v990 = vadd.f32 %v817, %v968
      %v991 = vadd.f32 %v818, %v973
      %v992 = vadd.f32 %v819, %v976
      %v993 = vadd.f32 %v820, %v981
      %v994 = vadd.f32 %v821, %v984
      %v995 = vld [vmem:[%s825 + $0x4] sm:$0xf]
      %v996 = vld [vmem:[%s825 + $0x10] sm:$0xf]
      %v997 = vld [vmem:[%s825 + $0x1c] sm:$0xf]
      %v998 = vld [vmem:[%s825 + $0x28] sm:$0xf]
      %v999 = vld [vmem:[%s825 + $0x34] sm:$0xf]
      %v1000 = vld [vmem:[%s825 + $0x40] sm:$0xf]
      %v1001 = vld [vmem:[%s825 + $0x4c] sm:$0xf]
      %v1002 = vld [vmem:[%s825 + $0x58] sm:$0xf]
      %v1003 = vld [vmem:[%s302 + $0x100] sm:$0xf]
      %v1004 = vld [vmem:[%s302 + $0x104] sm:$0xf]
      %v1005 = vld [vmem:[%s302 + $0x108] sm:$0xf]
      %v1006 = vld [vmem:[%s302 + $0x10c] sm:$0xf]
      %v1007 = vld [vmem:[%s302 + $0x110] sm:$0xf]
      %v1008 = vld [vmem:[%s302 + $0x114] sm:$0xf]
      %v1009 = vld [vmem:[%s302 + $0x118] sm:$0xf]
      %v1010 = vld [vmem:[%s302 + $0x11c] sm:$0xf]
      %v1011 = vld [vmem:[%s302 + $0x120] sm:$0xf]
      %v1012 = vld [vmem:[%s302 + $0x124] sm:$0xf]
      %v1013 = vld [vmem:[%s302 + $0x128] sm:$0xf]
      %v1014 = vld [vmem:[%s302 + $0x12c] sm:$0xf]
      %v1015 = vld [vmem:[%s302 + $0x130] sm:$0xf]
      %v1016 = vld [vmem:[%s302 + $0x134] sm:$0xf]
      %v1017 = vld [vmem:[%s302 + $0x138] sm:$0xf]
      %v1018 = vld [vmem:[%s302 + $0x13c] sm:$0xf]
      %v1027 = vunpack.c.l.b16 %v995
      %v1028 = vunpack.c.l.b16 %v996
      %v1029 = vunpack.c.l.b16 %v997
      %v1030 = vunpack.c.l.b16 %v998
      %v1031 = vunpack.c.l.b16 %v999
      %v1032 = vunpack.c.l.b16 %v1000
      %v1033 = vunpack.c.l.b16 %v1001
      %v1034 = vunpack.c.l.b16 %v1002
      %v1035 = vpack.c.b16 %v1028, %v1027
      %v1036 = vpack.c.b16 %v1030, %v1029
      %v1037 = vpack.c.b16 %v1032, %v1031
      %v1038 = vpack.c.b16 %v1034, %v1033
      %v1059 = vunpack.c.l.b16 %v1003
      %v1060 = vunpack.c.l.b16 %v1004
      %v1061 = vunpack.c.l.b16 %v1005
      %v1062 = vunpack.c.l.b16 %v1006
      %v1063 = vunpack.c.l.b16 %v1007
      %v1064 = vunpack.c.l.b16 %v1008
      %v1065 = vunpack.c.l.b16 %v1009
      %v1066 = vunpack.c.l.b16 %v1010
      %v1067 = vunpack.c.l.b16 %v1011
      %v1068 = vunpack.c.l.b16 %v1012
      %v1069 = vunpack.c.l.b16 %v1013
      %v1070 = vunpack.c.l.b16 %v1014
      %v1071 = vunpack.c.l.b16 %v1015
      %v1072 = vunpack.c.l.b16 %v1016
      %v1073 = vunpack.c.l.b16 %v1017
      %v1074 = vunpack.c.l.b16 %v1018
      %v1075 = vpack.c.b16 %v1060, %v1059
      %v1076 = vpack.c.b16 %v1062, %v1061
      %v1077 = vpack.c.b16 %v1064, %v1063
      %v1078 = vpack.c.b16 %v1066, %v1065
      %v1079 = vpack.c.b16 %v1068, %v1067
      %v1080 = vpack.c.b16 %v1070, %v1069
      %v1081 = vpack.c.b16 %v1072, %v1071
      %v1082 = vpack.c.b16 %v1074, %v1073
      %1091 = vmatprep.subr.bf16.mxu0 0
      %1092 = vmatpush1.bf16.msra.mxu0 %v1075
      %1093 = vmatprep.subr.bf16.mxu0 0
      %1094 = vmatpush1.bf16.msra.mxu0 %v1076
      %1095 = vmatprep.subr.bf16.mxu0 0
      %1096 = vmatpush1.bf16.msra.mxu0 %v1077
      %1097 = vmatprep.subr.bf16.mxu0 0
      %1098 = vmatpush1.bf16.msra.mxu0 %v1078
      %1099 = vmatprep.subr.bf16.mxu0 0
      %1100 = vmatpush1.bf16.msra.mxu0 %v1079
      %1101 = vmatprep.subr.bf16.mxu0 0
      %1102 = vmatpush1.bf16.msra.mxu0 %v1080
      %1103 = vmatprep.subr.bf16.mxu0 0
      %1104 = vmatpush1.bf16.msra.mxu0 %v1081
      %1105 = vmatprep.subr.bf16.mxu0 0
      %1106 = vmatpush1.bf16.msra.mxu0 %v1082
      %1107 = vmatprep.subr.bf16.mxu0 0
      %1108 = vmatpush1.bf16.msra.mxu0 0
      %1109 = vmatprep.subr.bf16.mxu0 0
      %1110 = vmatpush1.bf16.msra.mxu0 0
      %1111 = vmatprep.subr.bf16.mxu0 0
      %1112 = vmatpush1.bf16.msra.mxu0 0
      %1113 = vmatprep.subr.bf16.mxu0 0
      %1114 = vmatpush1.bf16.msra.mxu0 0
      %1115 = vmatprep.subr.bf16.mxu0 0
      %1116 = vmatpush1.bf16.msra.mxu0 0
      %1117 = vmatprep.subr.bf16.mxu0 0
      %1118 = vmatpush1.bf16.msra.mxu0 0
      %1119 = vmatprep.subr.bf16.mxu0 0
      %1120 = vmatpush1.bf16.msra.mxu0 0
      %1121 = vmatprep.subr.bf16.mxu0 0
      %1122 = vmatpush1.bf16.msra.mxu0 0
      %1123 = vmatprep.mubr.bf16.mxu0 0
      %1124 = vmatmul.mubr.bf16.gmra.mrb[0].mxu0 %v1035
      %v1125 = vpop.f32.mrb[0].mxu0
      %v1126 = vadd.f32 0.0, %v1125
      %v1127 = vpop.f32.mrb[0].mxu0
      %v1128 = vpop.f32.mrb[0].mxu0
      %v1129 = vadd.f32 0.0, %v1128
      %v1130 = vpop.f32.mrb[0].mxu0
      %1131 = vmatprep.mubr.bf16.mxu0 0
      %1132 = vmatmul.mubr.bf16.gmra.mrb[0].mxu0 %v1036
      %v1133 = vpop.f32.mrb[0].mxu0
      %v1134 = vadd.f32 0.0, %v1133
      %v1135 = vpop.f32.mrb[0].mxu0
      %v1136 = vpop.f32.mrb[0].mxu0
      %v1137 = vadd.f32 0.0, %v1136
      %v1138 = vpop.f32.mrb[0].mxu0
      %1139 = vmatprep.mubr.bf16.mxu0 0
      %1140 = vmatmul.mubr.bf16.gmra.mrb[0].mxu0 %v1037
      %v1141 = vpop.f32.mrb[0].mxu0
      %v1142 = vadd.f32 0.0, %v1141
      %v1143 = vpop.f32.mrb[0].mxu0
      %v1144 = vpop.f32.mrb[0].mxu0
      %v1145 = vadd.f32 0.0, %v1144
      %v1146 = vpop.f32.mrb[0].mxu0
      %1147 = vmatprep.mubr.bf16.mxu0 0
      %1148 = vmatmul.mubr.bf16.gmra.mrb[0].mxu0 %v1038
      %v1149 = vpop.f32.mrb[0].mxu0
      %v1150 = vadd.f32 0.0, %v1149
      %v1151 = vpop.f32.mrb[0].mxu0
      %v1152 = vpop.f32.mrb[0].mxu0
      %v1153 = vadd.f32 0.0, %v1152
      %v1154 = vpop.f32.mrb[0].mxu0
      %1155 = vdwg.mxu0
      %v1156 = vadd.f32 %v987, %v1126
      %v1157 = vadd.f32 %v988, %v1129
      %v1158 = vadd.f32 %v989, %v1134
      %v1159 = vadd.f32 %v990, %v1137
      %v1160 = vadd.f32 %v991, %v1142
      %v1161 = vadd.f32 %v992, %v1145
      %v1162 = vadd.f32 %v993, %v1150
      %v1163 = vadd.f32 %v994, %v1153
      %v1164 = vld [vmem:[%s825 + $0x8] sm:$0xf]
      %v1165 = vld [vmem:[%s825 + $0x14] sm:$0xf]
      %v1166 = vld [vmem:[%s825 + $0x20] sm:$0xf]
      %v1167 = vld [vmem:[%s825 + $0x2c] sm:$0xf]
      %v1168 = vld [vmem:[%s825 + $0x38] sm:$0xf]
      %v1169 = vld [vmem:[%s825 + $0x44] sm:$0xf]
      %v1170 = vld [vmem:[%s825 + $0x50] sm:$0xf]
      %v1171 = vld [vmem:[%s825 + $0x5c] sm:$0xf]
      %v1172 = vld [vmem:[%s302 + $0x140] sm:$0xf]
      %v1173 = vld [vmem:[%s302 + $0x144] sm:$0xf]
      %v1174 = vld [vmem:[%s302 + $0x148] sm:$0xf]
      %v1175 = vld [vmem:[%s302 + $0x14c] sm:$0xf]
      %v1176 = vld [vmem:[%s302 + $0x150] sm:$0xf]
      %v1177 = vld [vmem:[%s302 + $0x154] sm:$0xf]
      %v1178 = vld [vmem:[%s302 + $0x158] sm:$0xf]
      %v1179 = vld [vmem:[%s302 + $0x15c] sm:$0xf]
      %v1180 = vld [vmem:[%s302 + $0x160] sm:$0xf]
      %v1181 = vld [vmem:[%s302 + $0x164] sm:$0xf]
      %v1182 = vld [vmem:[%s302 + $0x168] sm:$0xf]
      %v1183 = vld [vmem:[%s302 + $0x16c] sm:$0xf]
      %v1184 = vld [vmem:[%s302 + $0x170] sm:$0xf]
      %v1185 = vld [vmem:[%s302 + $0x174] sm:$0xf]
      %v1186 = vld [vmem:[%s302 + $0x178] sm:$0xf]
      %v1187 = vld [vmem:[%s302 + $0x17c] sm:$0xf]
      %v1196 = vunpack.c.l.b16 %v1164
      %v1197 = vunpack.c.l.b16 %v1165
      %v1198 = vunpack.c.l.b16 %v1166
      %v1199 = vunpack.c.l.b16 %v1167
      %v1200 = vunpack.c.l.b16 %v1168
      %v1201 = vunpack.c.l.b16 %v1169
      %v1202 = vunpack.c.l.b16 %v1170
      %v1203 = vunpack.c.l.b16 %v1171
      %v1204 = vpack.c.b16 %v1197, %v1196
      %v1205 = vpack.c.b16 %v1199, %v1198
      %v1206 = vpack.c.b16 %v1201, %v1200
      %v1207 = vpack.c.b16 %v1203, %v1202
      %v1228 = vunpack.c.l.b16 %v1172
      %v1229 = vunpack.c.l.b16 %v1173
      %v1230 = vunpack.c.l.b16 %v1174
      %v1231 = vunpack.c.l.b16 %v1175
      %v1232 = vunpack.c.l.b16 %v1176
      %v1233 = vunpack.c.l.b16 %v1177
      %v1234 = vunpack.c.l.b16 %v1178
      %v1235 = vunpack.c.l.b16 %v1179
      %v1236 = vunpack.c.l.b16 %v1180
      %v1237 = vunpack.c.l.b16 %v1181
      %v1238 = vunpack.c.l.b16 %v1182
      %v1239 = vunpack.c.l.b16 %v1183
      %v1240 = vunpack.c.l.b16 %v1184
      %v1241 = vunpack.c.l.b16 %v1185
      %v1242 = vunpack.c.l.b16 %v1186
      %v1243 = vunpack.c.l.b16 %v1187
      %v1244 = vpack.c.b16 %v1229, %v1228
      %v1245 = vpack.c.b16 %v1231, %v1230
      %v1246 = vpack.c.b16 %v1233, %v1232
      %v1247 = vpack.c.b16 %v1235, %v1234
      %v1248 = vpack.c.b16 %v1237, %v1236
      %v1249 = vpack.c.b16 %v1239, %v1238
      %v1250 = vpack.c.b16 %v1241, %v1240
      %v1251 = vpack.c.b16 %v1243, %v1242
      %1260 = vmatprep.subr.bf16.mxu0 0
      %1261 = vmatpush1.bf16.msra.mxu0 %v1244
      %1262 = vmatprep.subr.bf16.mxu0 0
      %1263 = vmatpush1.bf16.msra.mxu0 %v1245
      %1264 = vmatprep.subr.bf16.mxu0 0
      %1265 = vmatpush1.bf16.msra.mxu0 %v1246
      %1266 = vmatprep.subr.bf16.mxu0 0
      %1267 = vmatpush1.bf16.msra.mxu0 %v1247
      %1268 = vmatprep.subr.bf16.mxu0 0
      %1269 = vmatpush1.bf16.msra.mxu0 %v1248
      %1270 = vmatprep.subr.bf16.mxu0 0
      %1271 = vmatpush1.bf16.msra.mxu0 %v1249
      %1272 = vmatprep.subr.bf16.mxu0 0
      %1273 = vmatpush1.bf16.msra.mxu0 %v1250
      %1274 = vmatprep.subr.bf16.mxu0 0
      %1275 = vmatpush1.bf16.msra.mxu0 %v1251
      %1276 = vmatprep.subr.bf16.mxu0 0
      %1277 = vmatpush1.bf16.msra.mxu0 0
      %1278 = vmatprep.subr.bf16.mxu0 0
      %1279 = vmatpush1.bf16.msra.mxu0 0
      %1280 = vmatprep.subr.bf16.mxu0 0
      %1281 = vmatpush1.bf16.msra.mxu0 0
      %1282 = vmatprep.subr.bf16.mxu0 0
      %1283 = vmatpush1.bf16.msra.mxu0 0
      %1284 = vmatprep.subr.bf16.mxu0 0
      %1285 = vmatpush1.bf16.msra.mxu0 0
      %1286 = vmatprep.subr.bf16.mxu0 0
      %1287 = vmatpush1.bf16.msra.mxu0 0
      %1288 = vmatprep.subr.bf16.mxu0 0
      %1289 = vmatpush1.bf16.msra.mxu0 0
      %1290 = vmatprep.subr.bf16.mxu0 0
      %1291 = vmatpush1.bf16.msra.mxu0 0
      %1292 = vmatprep.mubr.bf16.mxu0 0
      %1293 = vmatmul.mubr.bf16.gmra.mrb[0].mxu0 %v1204
      %v1294 = vpop.f32.mrb[0].mxu0
      %v1295 = vadd.f32 0.0, %v1294
      %v1296 = vpop.f32.mrb[0].mxu0
      %v1297 = vpop.f32.mrb[0].mxu0
      %v1298 = vadd.f32 0.0, %v1297
      %v1299 = vpop.f32.mrb[0].mxu0
      %1300 = vmatprep.mubr.bf16.mxu0 0
      %1301 = vmatmul.mubr.bf16.gmra.mrb[0].mxu0 %v1205
      %v1302 = vpop.f32.mrb[0].mxu0
      %v1303 = vadd.f32 0.0, %v1302
      %v1304 = vpop.f32.mrb[0].mxu0
      %v1305 = vpop.f32.mrb[0].mxu0
      %v1306 = vadd.f32 0.0, %v1305
      %v1307 = vpop.f32.mrb[0].mxu0
      %1308 = vmatprep.mubr.bf16.mxu0 0
      %1309 = vmatmul.mubr.bf16.gmra.mrb[0].mxu0 %v1206
      %v1310 = vpop.f32.mrb[0].mxu0
      %v1311 = vadd.f32 0.0, %v1310
      %v1312 = vpop.f32.mrb[0].mxu0
      %v1313 = vpop.f32.mrb[0].mxu0
      %v1314 = vadd.f32 0.0, %v1313
      %v1315 = vpop.f32.mrb[0].mxu0
      %1316 = vmatprep.mubr.bf16.mxu0 0
      %1317 = vmatmul.mubr.bf16.gmra.mrb[0].mxu0 %v1207
      %v1318 = vpop.f32.mrb[0].mxu0
      %v1319 = vadd.f32 0.0, %v1318
      %v1320 = vpop.f32.mrb[0].mxu0
      %v1321 = vpop.f32.mrb[0].mxu0
      %v1322 = vadd.f32 0.0, %v1321
      %v1323 = vpop.f32.mrb[0].mxu0
      %1324 = vdwg.mxu0
      %v1325 = vadd.f32 %v1156, %v1295
      %v1326 = vadd.f32 %v1157, %v1298
      %v1327 = vadd.f32 %v1158, %v1303
      %v1328 = vadd.f32 %v1159, %v1306
      %v1329 = vadd.f32 %v1160, %v1311
      %v1330 = vadd.f32 %v1161, %v1314
      %v1331 = vadd.f32 %v1162, %v1319
      %v1332 = vadd.f32 %v1163, %v1322
      %s1333 = sadd.s32 %s327, 2
      %s1334 = smul.u32 %s1333, 3
      %s1335 = smul.addr %s1334, 4
      %s1336 = scalar_lea.vmem %s298, %s1335
      %v1337 = vld [vmem:[%s1336] sm:$0xf]
      %v1338 = vld [vmem:[%s1336 + $0xc] sm:$0xf]
      %v1339 = vld [vmem:[%s1336 + $0x18] sm:$0xf]
      %v1340 = vld [vmem:[%s1336 + $0x24] sm:$0xf]
      %v1341 = vld [vmem:[%s1336 + $0x30] sm:$0xf]
      %v1342 = vld [vmem:[%s1336 + $0x3c] sm:$0xf]
      %v1343 = vld [vmem:[%s1336 + $0x48] sm:$0xf]
      %v1344 = vld [vmem:[%s1336 + $0x54] sm:$0xf]
      %v1345 = vld [vmem:[%s302 + $0x180] sm:$0xf]
      %v1346 = vld [vmem:[%s302 + $0x184] sm:$0xf]
      %v1347 = vld [vmem:[%s302 + $0x188] sm:$0xf]
      %v1348 = vld [vmem:[%s302 + $0x18c] sm:$0xf]
      %v1349 = vld [vmem:[%s302 + $0x190] sm:$0xf]
      %v1350 = vld [vmem:[%s302 + $0x194] sm:$0xf]
      %v1351 = vld [vmem:[%s302 + $0x198] sm:$0xf]
      %v1352 = vld [vmem:[%s302 + $0x19c] sm:$0xf]
      %v1353 = vld [vmem:[%s302 + $0x1a0] sm:$0xf]
      %v1354 = vld [vmem:[%s302 + $0x1a4] sm:$0xf]
      %v1355 = vld [vmem:[%s302 + $0x1a8] sm:$0xf]
      %v1356 = vld [vmem:[%s302 + $0x1ac] sm:$0xf]
      %v1357 = vld [vmem:[%s302 + $0x1b0] sm:$0xf]
      %v1358 = vld [vmem:[%s302 + $0x1b4] sm:$0xf]
      %v1359 = vld [vmem:[%s302 + $0x1b8] sm:$0xf]
      %v1360 = vld [vmem:[%s302 + $0x1bc] sm:$0xf]
      %v1369 = vunpack.c.l.b16 %v1337
      %v1370 = vunpack.c.l.b16 %v1338
      %v1371 = vunpack.c.l.b16 %v1339
      %v1372 = vunpack.c.l.b16 %v1340
      %v1373 = vunpack.c.l.b16 %v1341
      %v1374 = vunpack.c.l.b16 %v1342
      %v1375 = vunpack.c.l.b16 %v1343
      %v1376 = vunpack.c.l.b16 %v1344
      %v1377 = vpack.c.b16 %v1370, %v1369
      %v1378 = vpack.c.b16 %v1372, %v1371
      %v1379 = vpack.c.b16 %v1374, %v1373
      %v1380 = vpack.c.b16 %v1376, %v1375
      %v1401 = vunpack.c.l.b16 %v1345
      %v1402 = vunpack.c.l.b16 %v1346
      %v1403 = vunpack.c.l.b16 %v1347
      %v1404 = vunpack.c.l.b16 %v1348
      %v1405 = vunpack.c.l.b16 %v1349
      %v1406 = vunpack.c.l.b16 %v1350
      %v1407 = vunpack.c.l.b16 %v1351
      %v1408 = vunpack.c.l.b16 %v1352
      %v1409 = vunpack.c.l.b16 %v1353
      %v1410 = vunpack.c.l.b16 %v1354
      %v1411 = vunpack.c.l.b16 %v1355
      %v1412 = vunpack.c.l.b16 %v1356
      %v1413 = vunpack.c.l.b16 %v1357
      %v1414 = vunpack.c.l.b16 %v1358
      %v1415 = vunpack.c.l.b16 %v1359
      %v1416 = vunpack.c.l.b16 %v1360
      %v1417 = vpack.c.b16 %v1402, %v1401
      %v1418 = vpack.c.b16 %v1404, %v1403
      %v1419 = vpack.c.b16 %v1406, %v1405
      %v1420 = vpack.c.b16 %v1408, %v1407
      %v1421 = vpack.c.b16 %v1410, %v1409
      %v1422 = vpack.c.b16 %v1412, %v1411
      %v1423 = vpack.c.b16 %v1414, %v1413
      %v1424 = vpack.c.b16 %v1416, %v1415
      %1433 = vmatprep.subr.bf16.mxu0 0
      %1434 = vmatpush1.bf16.msra.mxu0 %v1417
      %1435 = vmatprep.subr.bf16.mxu0 0
      %1436 = vmatpush1.bf16.msra.mxu0 %v1418
      %1437 = vmatprep.subr.bf16.mxu0 0
      %1438 = vmatpush1.bf16.msra.mxu0 %v1419
      %1439 = vmatprep.subr.bf16.mxu0 0
      %1440 = vmatpush1.bf16.msra.mxu0 %v1420
      %1441 = vmatprep.subr.bf16.mxu0 0
      %1442 = vmatpush1.bf16.msra.mxu0 %v1421
      %1443 = vmatprep.subr.bf16.mxu0 0
      %1444 = vmatpush1.bf16.msra.mxu0 %v1422
      %1445 = vmatprep.subr.bf16.mxu0 0
      %1446 = vmatpush1.bf16.msra.mxu0 %v1423
      %1447 = vmatprep.subr.bf16.mxu0 0
      %1448 = vmatpush1.bf16.msra.mxu0 %v1424
      %1449 = vmatprep.subr.bf16.mxu0 0
      %1450 = vmatpush1.bf16.msra.mxu0 0
      %1451 = vmatprep.subr.bf16.mxu0 0
      %1452 = vmatpush1.bf16.msra.mxu0 0
      %1453 = vmatprep.subr.bf16.mxu0 0
      %1454 = vmatpush1.bf16.msra.mxu0 0
      %1455 = vmatprep.subr.bf16.mxu0 0
      %1456 = vmatpush1.bf16.msra.mxu0 0
      %1457 = vmatprep.subr.bf16.mxu0 0
      %1458 = vmatpush1.bf16.msra.mxu0 0
      %1459 = vmatprep.subr.bf16.mxu0 0
      %1460 = vmatpush1.bf16.msra.mxu0 0
      %1461 = vmatprep.subr.bf16.mxu0 0
      %1462 = vmatpush1.bf16.msra.mxu0 0
      %1463 = vmatprep.subr.bf16.mxu0 0
      %1464 = vmatpush1.bf16.msra.mxu0 0
      %1465 = vmatprep.mubr.bf16.mxu0 0
      %1466 = vmatmul.mubr.bf16.gmra.mrb[0].mxu0 %v1377
      %v1467 = vpop.f32.mrb[0].mxu0
      %v1468 = vadd.f32 0.0, %v1467
      %v1469 = vpop.f32.mrb[0].mxu0
      %v1470 = vpop.f32.mrb[0].mxu0
      %v1471 = vadd.f32 0.0, %v1470
      %v1472 = vpop.f32.mrb[0].mxu0
      %1473 = vmatprep.mubr.bf16.mxu0 0
      %1474 = vmatmul.mubr.bf16.gmra.mrb[0].mxu0 %v1378
      %v1475 = vpop.f32.mrb[0].mxu0
      %v1476 = vadd.f32 0.0, %v1475
      %v1477 = vpop.f32.mrb[0].mxu0
      %v1478 = vpop.f32.mrb[0].mxu0
      %v1479 = vadd.f32 0.0, %v1478
      %v1480 = vpop.f32.mrb[0].mxu0
      %1481 = vmatprep.mubr.bf16.mxu0 0
      %1482 = vmatmul.mubr.bf16.gmra.mrb[0].mxu0 %v1379
      %v1483 = vpop.f32.mrb[0].mxu0
      %v1484 = vadd.f32 0.0, %v1483
      %v1485 = vpop.f32.mrb[0].mxu0
      %v1486 = vpop.f32.mrb[0].mxu0
      %v1487 = vadd.f32 0.0, %v1486
      %v1488 = vpop.f32.mrb[0].mxu0
      %1489 = vmatprep.mubr.bf16.mxu0 0
      %1490 = vmatmul.mubr.bf16.gmra.mrb[0].mxu0 %v1380
      %v1491 = vpop.f32.mrb[0].mxu0
      %v1492 = vadd.f32 0.0, %v1491
      %v1493 = vpop.f32.mrb[0].mxu0
      %v1494 = vpop.f32.mrb[0].mxu0
      %v1495 = vadd.f32 0.0, %v1494
      %v1496 = vpop.f32.mrb[0].mxu0
      %1497 = vdwg.mxu0
      %v1498 = vadd.f32 %v1325, %v1468
      %v1499 = vadd.f32 %v1326, %v1471
      %v1500 = vadd.f32 %v1327, %v1476
      %v1501 = vadd.f32 %v1328, %v1479
      %v1502 = vadd.f32 %v1329, %v1484
      %v1503 = vadd.f32 %v1330, %v1487
      %v1504 = vadd.f32 %v1331, %v1492
      %v1505 = vadd.f32 %v1332, %v1495
      %v1506 = vld [vmem:[%s1336 + $0x4] sm:$0xf]
      %v1507 = vld [vmem:[%s1336 + $0x10] sm:$0xf]
      %v1508 = vld [vmem:[%s1336 + $0x1c] sm:$0xf]
      %v1509 = vld [vmem:[%s1336 + $0x28] sm:$0xf]
      %v1510 = vld [vmem:[%s1336 + $0x34] sm:$0xf]
      %v1511 = vld [vmem:[%s1336 + $0x40] sm:$0xf]
      %v1512 = vld [vmem:[%s1336 + $0x4c] sm:$0xf]
      %v1513 = vld [vmem:[%s1336 + $0x58] sm:$0xf]
      %v1514 = vld [vmem:[%s302 + $0x1c0] sm:$0xf]
      %v1515 = vld [vmem:[%s302 + $0x1c4] sm:$0xf]
      %v1516 = vld [vmem:[%s302 + $0x1c8] sm:$0xf]
      %v1517 = vld [vmem:[%s302 + $0x1cc] sm:$0xf]
      %v1518 = vld [vmem:[%s302 + $0x1d0] sm:$0xf]
      %v1519 = vld [vmem:[%s302 + $0x1d4] sm:$0xf]
      %v1520 = vld [vmem:[%s302 + $0x1d8] sm:$0xf]
      %v1521 = vld [vmem:[%s302 + $0x1dc] sm:$0xf]
      %v1522 = vld [vmem:[%s302 + $0x1e0] sm:$0xf]
      %v1523 = vld [vmem:[%s302 + $0x1e4] sm:$0xf]
      %v1524 = vld [vmem:[%s302 + $0x1e8] sm:$0xf]
      %v1525 = vld [vmem:[%s302 + $0x1ec] sm:$0xf]
      %v1526 = vld [vmem:[%s302 + $0x1f0] sm:$0xf]
      %v1527 = vld [vmem:[%s302 + $0x1f4] sm:$0xf]
      %v1528 = vld [vmem:[%s302 + $0x1f8] sm:$0xf]
      %v1529 = vld [vmem:[%s302 + $0x1fc] sm:$0xf]
      %v1538 = vunpack.c.l.b16 %v1506
      %v1539 = vunpack.c.l.b16 %v1507
      %v1540 = vunpack.c.l.b16 %v1508
      %v1541 = vunpack.c.l.b16 %v1509
      %v1542 = vunpack.c.l.b16 %v1510
      %v1543 = vunpack.c.l.b16 %v1511
      %v1544 = vunpack.c.l.b16 %v1512
      %v1545 = vunpack.c.l.b16 %v1513
      %v1546 = vpack.c.b16 %v1539, %v1538
      %v1547 = vpack.c.b16 %v1541, %v1540
      %v1548 = vpack.c.b16 %v1543, %v1542
      %v1549 = vpack.c.b16 %v1545, %v1544
      %v1570 = vunpack.c.l.b16 %v1514
      %v1571 = vunpack.c.l.b16 %v1515
      %v1572 = vunpack.c.l.b16 %v1516
      %v1573 = vunpack.c.l.b16 %v1517
      %v1574 = vunpack.c.l.b16 %v1518
      %v1575 = vunpack.c.l.b16 %v1519
      %v1576 = vunpack.c.l.b16 %v1520
      %v1577 = vunpack.c.l.b16 %v1521
      %v1578 = vunpack.c.l.b16 %v1522
      %v1579 = vunpack.c.l.b16 %v1523
      %v1580 = vunpack.c.l.b16 %v1524
      %v1581 = vunpack.c.l.b16 %v1525
      %v1582 = vunpack.c.l.b16 %v1526
      %v1583 = vunpack.c.l.b16 %v1527
      %v1584 = vunpack.c.l.b16 %v1528
      %v1585 = vunpack.c.l.b16 %v1529
      %v1586 = vpack.c.b16 %v1571, %v1570
      %v1587 = vpack.c.b16 %v1573, %v1572
      %v1588 = vpack.c.b16 %v1575, %v1574
      %v1589 = vpack.c.b16 %v1577, %v1576
      %v1590 = vpack.c.b16 %v1579, %v1578
      %v1591 = vpack.c.b16 %v1581, %v1580
      %v1592 = vpack.c.b16 %v1583, %v1582
      %v1593 = vpack.c.b16 %v1585, %v1584
      %1602 = vmatprep.subr.bf16.mxu0 0
      %1603 = vmatpush1.bf16.msra.mxu0 %v1586
      %1604 = vmatprep.subr.bf16.mxu0 0
      %1605 = vmatpush1.bf16.msra.mxu0 %v1587
      %1606 = vmatprep.subr.bf16.mxu0 0
      %1607 = vmatpush1.bf16.msra.mxu0 %v1588
      %1608 = vmatprep.subr.bf16.mxu0 0
      %1609 = vmatpush1.bf16.msra.mxu0 %v1589
      %1610 = vmatprep.subr.bf16.mxu0 0
      %1611 = vmatpush1.bf16.msra.mxu0 %v1590
      %1612 = vmatprep.subr.bf16.mxu0 0
      %1613 = vmatpush1.bf16.msra.mxu0 %v1591
      %1614 = vmatprep.subr.bf16.mxu0 0
      %1615 = vmatpush1.bf16.msra.mxu0 %v1592
      %1616 = vmatprep.subr.bf16.mxu0 0
      %1617 = vmatpush1.bf16.msra.mxu0 %v1593
      %1618 = vmatprep.subr.bf16.mxu0 0
      %1619 = vmatpush1.bf16.msra.mxu0 0
      %1620 = vmatprep.subr.bf16.mxu0 0
      %1621 = vmatpush1.bf16.msra.mxu0 0
      %1622 = vmatprep.subr.bf16.mxu0 0
      %1623 = vmatpush1.bf16.msra.mxu0 0
      %1624 = vmatprep.subr.bf16.mxu0 0
      %1625 = vmatpush1.bf16.msra.mxu0 0
      %1626 = vmatprep.subr.bf16.mxu0 0
      %1627 = vmatpush1.bf16.msra.mxu0 0
      %1628 = vmatprep.subr.bf16.mxu0 0
      %1629 = vmatpush1.bf16.msra.mxu0 0
      %1630 = vmatprep.subr.bf16.mxu0 0
      %1631 = vmatpush1.bf16.msra.mxu0 0
      %1632 = vmatprep.subr.bf16.mxu0 0
      %1633 = vmatpush1.bf16.msra.mxu0 0
      %1634 = vmatprep.mubr.bf16.mxu0 0
      %1635 = vmatmul.mubr.bf16.gmra.mrb[0].mxu0 %v1546
      %v1636 = vpop.f32.mrb[0].mxu0
      %v1637 = vadd.f32 0.0, %v1636
      %v1638 = vpop.f32.mrb[0].mxu0
      %v1639 = vpop.f32.mrb[0].mxu0
      %v1640 = vadd.f32 0.0, %v1639
      %v1641 = vpop.f32.mrb[0].mxu0
      %1642 = vmatprep.mubr.bf16.mxu0 0
      %1643 = vmatmul.mubr.bf16.gmra.mrb[0].mxu0 %v1547
      %v1644 = vpop.f32.mrb[0].mxu0
      %v1645 = vadd.f32 0.0, %v1644
      %v1646 = vpop.f32.mrb[0].mxu0
      %v1647 = vpop.f32.mrb[0].mxu0
      %v1648 = vadd.f32 0.0, %v1647
      %v1649 = vpop.f32.mrb[0].mxu0
      %1650 = vmatprep.mubr.bf16.mxu0 0
      %1651 = vmatmul.mubr.bf16.gmra.mrb[0].mxu0 %v1548
      %v1652 = vpop.f32.mrb[0].mxu0
      %v1653 = vadd.f32 0.0, %v1652
      %v1654 = vpop.f32.mrb[0].mxu0
      %v1655 = vpop.f32.mrb[0].mxu0
      %v1656 = vadd.f32 0.0, %v1655
      %v1657 = vpop.f32.mrb[0].mxu0
      %1658 = vmatprep.mubr.bf16.mxu0 0
      %1659 = vmatmul.mubr.bf16.gmra.mrb[0].mxu0 %v1549
      %v1660 = vpop.f32.mrb[0].mxu0
      %v1661 = vadd.f32 0.0, %v1660
      %v1662 = vpop.f32.mrb[0].mxu0
      %v1663 = vpop.f32.mrb[0].mxu0
      %v1664 = vadd.f32 0.0, %v1663
      %v1665 = vpop.f32.mrb[0].mxu0
      %1666 = vdwg.mxu0
      %v1667 = vadd.f32 %v1498, %v1637
      %v1668 = vadd.f32 %v1499, %v1640
      %v1669 = vadd.f32 %v1500, %v1645
      %v1670 = vadd.f32 %v1501, %v1648
      %v1671 = vadd.f32 %v1502, %v1653
      %v1672 = vadd.f32 %v1503, %v1656
      %v1673 = vadd.f32 %v1504, %v1661
      %v1674 = vadd.f32 %v1505, %v1664
      %v1675 = vld [vmem:[%s1336 + $0x8] sm:$0xf]
      %v1676 = vld [vmem:[%s1336 + $0x14] sm:$0xf]
      %v1677 = vld [vmem:[%s1336 + $0x20] sm:$0xf]
      %v1678 = vld [vmem:[%s1336 + $0x2c] sm:$0xf]
      %v1679 = vld [vmem:[%s1336 + $0x38] sm:$0xf]
      %v1680 = vld [vmem:[%s1336 + $0x44] sm:$0xf]
      %v1681 = vld [vmem:[%s1336 + $0x50] sm:$0xf]
      %v1682 = vld [vmem:[%s1336 + $0x5c] sm:$0xf]
      %v1683 = vld [vmem:[%s302 + $0x200] sm:$0xf]
      %v1684 = vld [vmem:[%s302 + $0x204] sm:$0xf]
      %v1685 = vld [vmem:[%s302 + $0x208] sm:$0xf]
      %v1686 = vld [vmem:[%s302 + $0x20c] sm:$0xf]
      %v1687 = vld [vmem:[%s302 + $0x210] sm:$0xf]
      %v1688 = vld [vmem:[%s302 + $0x214] sm:$0xf]
      %v1689 = vld [vmem:[%s302 + $0x218] sm:$0xf]
      %v1690 = vld [vmem:[%s302 + $0x21c] sm:$0xf]
      %v1691 = vld [vmem:[%s302 + $0x220] sm:$0xf]
      %v1692 = vld [vmem:[%s302 + $0x224] sm:$0xf]
      %v1693 = vld [vmem:[%s302 + $0x228] sm:$0xf]
      %v1694 = vld [vmem:[%s302 + $0x22c] sm:$0xf]
      %v1695 = vld [vmem:[%s302 + $0x230] sm:$0xf]
      %v1696 = vld [vmem:[%s302 + $0x234] sm:$0xf]
      %v1697 = vld [vmem:[%s302 + $0x238] sm:$0xf]
      %v1698 = vld [vmem:[%s302 + $0x23c] sm:$0xf]
      %v1707 = vunpack.c.l.b16 %v1675
      %v1708 = vunpack.c.l.b16 %v1676
      %v1709 = vunpack.c.l.b16 %v1677
      %v1710 = vunpack.c.l.b16 %v1678
      %v1711 = vunpack.c.l.b16 %v1679
      %v1712 = vunpack.c.l.b16 %v1680
      %v1713 = vunpack.c.l.b16 %v1681
      %v1714 = vunpack.c.l.b16 %v1682
      %v1715 = vpack.c.b16 %v1708, %v1707
      %v1716 = vpack.c.b16 %v1710, %v1709
      %v1717 = vpack.c.b16 %v1712, %v1711
      %v1718 = vpack.c.b16 %v1714, %v1713
      %v1739 = vunpack.c.l.b16 %v1683
      %v1740 = vunpack.c.l.b16 %v1684
      %v1741 = vunpack.c.l.b16 %v1685
      %v1742 = vunpack.c.l.b16 %v1686
      %v1743 = vunpack.c.l.b16 %v1687
      %v1744 = vunpack.c.l.b16 %v1688
      %v1745 = vunpack.c.l.b16 %v1689
      %v1746 = vunpack.c.l.b16 %v1690
      %v1747 = vunpack.c.l.b16 %v1691
      %v1748 = vunpack.c.l.b16 %v1692
      %v1749 = vunpack.c.l.b16 %v1693
      %v1750 = vunpack.c.l.b16 %v1694
      %v1751 = vunpack.c.l.b16 %v1695
      %v1752 = vunpack.c.l.b16 %v1696
      %v1753 = vunpack.c.l.b16 %v1697
      %v1754 = vunpack.c.l.b16 %v1698
      %v1755 = vpack.c.b16 %v1740, %v1739
      %v1756 = vpack.c.b16 %v1742, %v1741
      %v1757 = vpack.c.b16 %v1744, %v1743
      %v1758 = vpack.c.b16 %v1746, %v1745
      %v1759 = vpack.c.b16 %v1748, %v1747
      %v1760 = vpack.c.b16 %v1750, %v1749
      %v1761 = vpack.c.b16 %v1752, %v1751
      %v1762 = vpack.c.b16 %v1754, %v1753
      %1771 = vmatprep.subr.bf16.mxu0 0
      %1772 = vmatpush1.bf16.msra.mxu0 %v1755
      %1773 = vmatprep.subr.bf16.mxu0 0
      %1774 = vmatpush1.bf16.msra.mxu0 %v1756
      %1775 = vmatprep.subr.bf16.mxu0 0
      %1776 = vmatpush1.bf16.msra.mxu0 %v1757
      %1777 = vmatprep.subr.bf16.mxu0 0
      %1778 = vmatpush1.bf16.msra.mxu0 %v1758
      %1779 = vmatprep.subr.bf16.mxu0 0
      %1780 = vmatpush1.bf16.msra.mxu0 %v1759
      %1781 = vmatprep.subr.bf16.mxu0 0
      %1782 = vmatpush1.bf16.msra.mxu0 %v1760
      %1783 = vmatprep.subr.bf16.mxu0 0
      %1784 = vmatpush1.bf16.msra.mxu0 %v1761
      %1785 = vmatprep.subr.bf16.mxu0 0
      %1786 = vmatpush1.bf16.msra.mxu0 %v1762
      %1787 = vmatprep.subr.bf16.mxu0 0
      %1788 = vmatpush1.bf16.msra.mxu0 0
      %1789 = vmatprep.subr.bf16.mxu0 0
      %1790 = vmatpush1.bf16.msra.mxu0 0
      %1791 = vmatprep.subr.bf16.mxu0 0
      %1792 = vmatpush1.bf16.msra.mxu0 0
      %1793 = vmatprep.subr.bf16.mxu0 0
      %1794 = vmatpush1.bf16.msra.mxu0 0
      %1795 = vmatprep.subr.bf16.mxu0 0
      %1796 = vmatpush1.bf16.msra.mxu0 0
      %1797 = vmatprep.subr.bf16.mxu0 0
      %1798 = vmatpush1.bf16.msra.mxu0 0
      %1799 = vmatprep.subr.bf16.mxu0 0
      %1800 = vmatpush1.bf16.msra.mxu0 0
      %1801 = vmatprep.subr.bf16.mxu0 0
      %1802 = vmatpush1.bf16.msra.mxu0 0
      %1803 = vmatprep.mubr.bf16.mxu0 0
      %1804 = vmatmul.mubr.bf16.gmra.mrb[0].mxu0 %v1715
      %v1805 = vpop.f32.mrb[0].mxu0
      %v1806 = vadd.f32 0.0, %v1805
      %v1807 = vpop.f32.mrb[0].mxu0
      %v1808 = vpop.f32.mrb[0].mxu0
      %v1809 = vadd.f32 0.0, %v1808
      %v1810 = vpop.f32.mrb[0].mxu0
      %1811 = vmatprep.mubr.bf16.mxu0 0
      %1812 = vmatmul.mubr.bf16.gmra.mrb[0].mxu0 %v1716
      %v1813 = vpop.f32.mrb[0].mxu0
      %v1814 = vadd.f32 0.0, %v1813
      %v1815 = vpop.f32.mrb[0].mxu0
      %v1816 = vpop.f32.mrb[0].mxu0
      %v1817 = vadd.f32 0.0, %v1816
      %v1818 = vpop.f32.mrb[0].mxu0
      %1819 = vmatprep.mubr.bf16.mxu0 0
      %1820 = vmatmul.mubr.bf16.gmra.mrb[0].mxu0 %v1717
      %v1821 = vpop.f32.mrb[0].mxu0
      %v1822 = vadd.f32 0.0, %v1821
      %v1823 = vpop.f32.mrb[0].mxu0
      %v1824 = vpop.f32.mrb[0].mxu0
      %v1825 = vadd.f32 0.0, %v1824
      %v1826 = vpop.f32.mrb[0].mxu0
      %1827 = vmatprep.mubr.bf16.mxu0 0
      %1828 = vmatmul.mubr.bf16.gmra.mrb[0].mxu0 %v1718
      %v1829 = vpop.f32.mrb[0].mxu0
      %v1830 = vadd.f32 0.0, %v1829
      %v1831 = vpop.f32.mrb[0].mxu0
      %v1832 = vpop.f32.mrb[0].mxu0
      %v1833 = vadd.f32 0.0, %v1832
      %v1834 = vpop.f32.mrb[0].mxu0
      %1835 = vdwg.mxu0
      %v1836 = vadd.f32 %v1667, %v1806
      %v1837 = vadd.f32 %v1668, %v1809
      %v1838 = vadd.f32 %v1669, %v1814
      %v1839 = vadd.f32 %v1670, %v1817
      %v1840 = vadd.f32 %v1671, %v1822
      %v1841 = vadd.f32 %v1672, %v1825
      %v1842 = vadd.f32 %v1673, %v1830
      %v1843 = vadd.f32 %v1674, %v1833
      %s1844 = smul.u32 %s327, 6
      %s1845 = sadd.s32 3, %s1844
      %s1846 = smul.addr %s1845, 4
      %s1847 = scalar_lea.vmem %s310, %s1846
      %v1848 = vld [vmem:[%s1847 + $0x4] sm:$0xf]
      %v1849 = vld [vmem:[%s1847 + $0x1c] sm:$0xf]
      %v1850 = vld [vmem:[%s1847 + $0x34] sm:$0xf]
      %v1851 = vld [vmem:[%s1847 + $0x4c] sm:$0xf]
      %v1852 = vld [vmem:[%s1847 + $0x64] sm:$0xf]
      %v1853 = vld [vmem:[%s1847 + $0x7c] sm:$0xf]
      %v1854 = vld [vmem:[%s1847 + $0x94] sm:$0xf]
      %v1855 = vld [vmem:[%s1847 + $0xac] sm:$0xf]
      %v1856 = vld [vmem:[%s314] sm:$0xf]
      %v1857 = vld [vmem:[%s314 + $0x4] sm:$0xf]
      %v1858 = vld [vmem:[%s314 + $0x8] sm:$0xf]
      %v1859 = vld [vmem:[%s314 + $0xc] sm:$0xf]
      %v1860 = vld [vmem:[%s314 + $0x10] sm:$0xf]
      %v1861 = vld [vmem:[%s314 + $0x14] sm:$0xf]
      %v1862 = vld [vmem:[%s314 + $0x18] sm:$0xf]
      %v1863 = vld [vmem:[%s314 + $0x1c] sm:$0xf]
      %v1864 = vld [vmem:[%s314 + $0x20] sm:$0xf]
      %v1865 = vld [vmem:[%s314 + $0x24] sm:$0xf]
      %v1866 = vld [vmem:[%s314 + $0x28] sm:$0xf]
      %v1867 = vld [vmem:[%s314 + $0x2c] sm:$0xf]
      %v1868 = vld [vmem:[%s314 + $0x30] sm:$0xf]
      %v1869 = vld [vmem:[%s314 + $0x34] sm:$0xf]
      %v1870 = vld [vmem:[%s314 + $0x38] sm:$0xf]
      %v1871 = vld [vmem:[%s314 + $0x3c] sm:$0xf]
      %v1880 = vunpack.c.l.b16 %v1848
      %v1881 = vunpack.c.l.b16 %v1849
      %v1882 = vunpack.c.l.b16 %v1850
      %v1883 = vunpack.c.l.b16 %v1851
      %v1884 = vunpack.c.l.b16 %v1852
      %v1885 = vunpack.c.l.b16 %v1853
      %v1886 = vunpack.c.l.b16 %v1854
      %v1887 = vunpack.c.l.b16 %v1855
      %v1888 = vpack.c.b16 %v1881, %v1880
      %v1889 = vpack.c.b16 %v1883, %v1882
      %v1890 = vpack.c.b16 %v1885, %v1884
      %v1891 = vpack.c.b16 %v1887, %v1886
      %v1912 = vunpack.c.l.b16 %v1856
      %v1913 = vunpack.c.l.b16 %v1857
      %v1914 = vunpack.c.l.b16 %v1858
      %v1915 = vunpack.c.l.b16 %v1859
      %v1916 = vunpack.c.l.b16 %v1860
      %v1917 = vunpack.c.l.b16 %v1861
      %v1918 = vunpack.c.l.b16 %v1862
      %v1919 = vunpack.c.l.b16 %v1863
      %v1920 = vunpack.c.l.b16 %v1864
      %v1921 = vunpack.c.l.b16 %v1865
      %v1922 = vunpack.c.l.b16 %v1866
      %v1923 = vunpack.c.l.b16 %v1867
      %v1924 = vunpack.c.l.b16 %v1868
      %v1925 = vunpack.c.l.b16 %v1869
      %v1926 = vunpack.c.l.b16 %v1870
      %v1927 = vunpack.c.l.b16 %v1871
      %v1928 = vpack.c.b16 %v1913, %v1912
      %v1929 = vpack.c.b16 %v1915, %v1914
      %v1930 = vpack.c.b16 %v1917, %v1916
      %v1931 = vpack.c.b16 %v1919, %v1918
      %v1932 = vpack.c.b16 %v1921, %v1920
      %v1933 = vpack.c.b16 %v1923, %v1922
      %v1934 = vpack.c.b16 %v1925, %v1924
      %v1935 = vpack.c.b16 %v1927, %v1926
      %1944 = vmatprep.subr.bf16.mxu0 0
      %1945 = vmatpush1.bf16.msra.mxu0 %v1928
      %1946 = vmatprep.subr.bf16.mxu0 0
      %1947 = vmatpush1.bf16.msra.mxu0 %v1929
      %1948 = vmatprep.subr.bf16.mxu0 0
      %1949 = vmatpush1.bf16.msra.mxu0 %v1930
      %1950 = vmatprep.subr.bf16.mxu0 0
      %1951 = vmatpush1.bf16.msra.mxu0 %v1931
      %1952 = vmatprep.subr.bf16.mxu0 0
      %1953 = vmatpush1.bf16.msra.mxu0 %v1932
      %1954 = vmatprep.subr.bf16.mxu0 0
      %1955 = vmatpush1.bf16.msra.mxu0 %v1933
      %1956 = vmatprep.subr.bf16.mxu0 0
      %1957 = vmatpush1.bf16.msra.mxu0 %v1934
      %1958 = vmatprep.subr.bf16.mxu0 0
      %1959 = vmatpush1.bf16.msra.mxu0 %v1935
      %1960 = vmatprep.subr.bf16.mxu0 0
      %1961 = vmatpush1.bf16.msra.mxu0 0
      %1962 = vmatprep.subr.bf16.mxu0 0
      %1963 = vmatpush1.bf16.msra.mxu0 0
      %1964 = vmatprep.subr.bf16.mxu0 0
      %1965 = vmatpush1.bf16.msra.mxu0 0
      %1966 = vmatprep.subr.bf16.mxu0 0
      %1967 = vmatpush1.bf16.msra.mxu0 0
      %1968 = vmatprep.subr.bf16.mxu0 0
      %1969 = vmatpush1.bf16.msra.mxu0 0
      %1970 = vmatprep.subr.bf16.mxu0 0
      %1971 = vmatpush1.bf16.msra.mxu0 0
      %1972 = vmatprep.subr.bf16.mxu0 0
      %1973 = vmatpush1.bf16.msra.mxu0 0
      %1974 = vmatprep.subr.bf16.mxu0 0
      %1975 = vmatpush1.bf16.msra.mxu0 0
      %1976 = vmatprep.mubr.bf16.mxu0 0
      %1977 = vmatmul.mubr.bf16.gmra.mrb[0].mxu0 %v1888
      %v1978 = vpop.f32.mrb[0].mxu0
      %v1979 = vadd.f32 0.0, %v1978
      %v1980 = vpop.f32.mrb[0].mxu0
      %v1981 = vpop.f32.mrb[0].mxu0
      %v1982 = vadd.f32 0.0, %v1981
      %v1983 = vpop.f32.mrb[0].mxu0
      %1984 = vmatprep.mubr.bf16.mxu0 0
      %1985 = vmatmul.mubr.bf16.gmra.mrb[0].mxu0 %v1889
      %v1986 = vpop.f32.mrb[0].mxu0
      %v1987 = vadd.f32 0.0, %v1986
      %v1988 = vpop.f32.mrb[0].mxu0
      %v1989 = vpop.f32.mrb[0].mxu0
      %v1990 = vadd.f32 0.0, %v1989
      %v1991 = vpop.f32.mrb[0].mxu0
      %1992 = vmatprep.mubr.bf16.mxu0 0
      %1993 = vmatmul.mubr.bf16.gmra.mrb[0].mxu0 %v1890
      %v1994 = vpop.f32.mrb[0].mxu0
      %v1995 = vadd.f32 0.0, %v1994
      %v1996 = vpop.f32.mrb[0].mxu0
      %v1997 = vpop.f32.mrb[0].mxu0
      %v1998 = vadd.f32 0.0, %v1997
      %v1999 = vpop.f32.mrb[0].mxu0
      %2000 = vmatprep.mubr.bf16.mxu0 0
      %2001 = vmatmul.mubr.bf16.gmra.mrb[0].mxu0 %v1891
      %v2002 = vpop.f32.mrb[0].mxu0
      %v2003 = vadd.f32 0.0, %v2002
      %v2004 = vpop.f32.mrb[0].mxu0
      %v2005 = vpop.f32.mrb[0].mxu0
      %v2006 = vadd.f32 0.0, %v2005
      %v2007 = vpop.f32.mrb[0].mxu0
      %2008 = vdwg.mxu0
      %v2009 = vadd.f32 %v1836, %v1979
      %v2010 = vadd.f32 %v1837, %v1982
      %v2011 = vadd.f32 %v1838, %v1987
      %v2012 = vadd.f32 %v1839, %v1990
      %v2013 = vadd.f32 %v1840, %v1995
      %v2014 = vadd.f32 %v1841, %v1998
      %v2015 = vadd.f32 %v1842, %v2003
      %v2016 = vadd.f32 %v1843, %v2006
      %v2017 = vld [vmem:[%s305] sm:$0x1]
      %v2019 = vlaneseq
      %v2020 = vshrl.u32 %v2019, 7
      %v2021 = vsub.s32 0, %v2020
      %v2022 = vrot.slane %v2017, %v2021
      %v2024 = vadd.f32 %v2009, %v2022
      %v2025 = vadd.f32 %v2010, %v2022
      %v2026 = vadd.f32 %v2011, %v2022
      %v2027 = vadd.f32 %v2012, %v2022
      %v2028 = vadd.f32 %v2013, %v2022
      %v2029 = vadd.f32 %v2014, %v2022
      %v2030 = vadd.f32 %v2015, %v2022
      %v2031 = vadd.f32 %v2016, %v2022
      %v2032 = vmax.f32 %v2024, 0.0
      %v2033 = vmax.f32 %v2025, 0.0
      %v2034 = vmax.f32 %v2026, 0.0
      %v2035 = vmax.f32 %v2027, 0.0
      %v2036 = vmax.f32 %v2028, 0.0
      %v2037 = vmax.f32 %v2029, 0.0
      %v2038 = vmax.f32 %v2030, 0.0
      %v2039 = vmax.f32 %v2031, 0.0
      %2040 = vst [vmem:[%s323] sm:$0xff] %v2032
      %2041 = vst [vmem:[%s323 + $0x8] sm:$0xff] %v2033
      %2042 = vst [vmem:[%s323 + $0x10] sm:$0xff] %v2034
      %2043 = vst [vmem:[%s323 + $0x18] sm:$0xff] %v2035
      %2044 = vst [vmem:[%s323 + $0x20] sm:$0xff] %v2036
      %2045 = vst [vmem:[%s323 + $0x28] sm:$0xff] %v2037
      %2046 = vst [vmem:[%s323 + $0x30] sm:$0xff] %v2038
      %2047 = vst [vmem:[%s323 + $0x38] sm:$0xff] %v2039
      %s2048 = sadd.s32 %s21, %s23
      %s2049 = smul.u32 8, %s2048
      %p2050 = scmp.lt.s32.totalorder %s2049, 15
      %s2051 = scalar_select %p2050, %s2049, 15
      %p2052 = scmp.lt.s32.totalorder %s22, 0
      %s2053 = scalar_select %p2052, %s22, 0
      %s2054 = sadd.s32 %s2053, %s2051
      %s2055 = smul.addr %s2054, 8
      %s2056 = scalar_lea.vmem %s5, %s2055
      // Predicated region
      $region41: #{masked_resblock_forward.3} parent=39 // pred_check
        %p2057 = pneg %p187
      $region42: #{masked_resblock_forward.3} parent=39 // pred_check_branch
        %2059 = sbr.rel (%p2057) target = $region44
      $region43: #{masked_resblock_forward.3} parent=39 // pred_region
        %s2060 = sadd.s32 %s21, %s23
        %s2061 = smul.u32 8, %s2060
      $region44: #{masked_resblock_forward.3} parent=39 // pred_fallthru
        _
    $region40: #{masked_resblock_forward.3} parent=5 // pred_fallthru
      _
    %p2062 = scmp.le.s32.totalorder 2, %s11
    // Predicated region
    $region45: #{masked_resblock_forward.3} parent=5 // pred_check
      %p2063 = pneg %p2062
    $region46: #{masked_resblock_forward.3} parent=5 // pred_check_branch
      %2065 = sbr.rel (%p2063) target = $region48
    $region47: #{masked_resblock_forward.3} parent=5 // pred_region
      %s2066 = ssub.s32 %s11, 2
      // Predicated region
      $region49: #{masked_resblock_forward.3} parent=47 // pred_check
        %p2067 = pneg %p193
      $region50: #{masked_resblock_forward.3} parent=47 // pred_check_branch
        %2069 = sbr.rel (%p2067) target = $region52
      $region51: #{masked_resblock_forward.3} parent=47 // pred_region
        %s2070 = sadd.s32 %s24, %s26
        %s2071 = smul.u32 8, %s2070
        %p2072 = scmp.lt.s32.totalorder %s2071, 15
        %s2073 = scalar_select %p2072, %s2071, 15
        %p2074 = scmp.lt.s32.totalorder %s25, 0
        %s2075 = scalar_select %p2074, %s25, 0
        %s2076 = sadd.s32 %s2075, %s2073
        %s2077 = smul.addr %s2076, 8
        %s2078 = scalar_lea.vmem %s5, %s2077
      $region52: #{masked_resblock_forward.3} parent=47 // pred_fallthru
        _
    $region48: #{masked_resblock_forward.3} parent=5 // pred_fallthru
      _
  $region6: #{masked_resblock_forward.3} parent=0 // loop_footer
    %s15 = sadd.s32 1, %s11
  $region7: #{masked_resblock_forward.3} parent=0 // loop_footer_branch
    %10 = sbr.rel target = $region3
  $region8: #{masked_resblock_forward.3} parent=0 // loop_exit
    _

</llo_original>
